<compile_context>
chip_gen: v7x
topology: tpu7x:2x2x1
jax: 0.10.0
libtpu: 0.0.40
codegen_flags: <defaults>
</compile_context>

<pallas_src>
import jax
import jax.numpy as jnp
from jax import lax
from jax.experimental import pallas as pl
from jax.experimental.pallas import tpu as pltpu


# ----------------------------------------------------------------------------
# Helpers: padding to TPU-friendly shapes.
# ----------------------------------------------------------------------------
def _round_up(x, m):
    return ((x + m - 1) // m) * m


def _pad_axis(x, axis, new_size):
    pad = [(0, 0)] * x.ndim
    pad[axis] = (0, new_size - x.shape[axis])
    return jnp.pad(x, pad)


def _pad_gated(w, Hp, axis):
    """Pad a gate-stacked 3H axis to 3*Hp, padding each (r, z, n) block."""
    parts = jnp.split(w, 3, axis=axis)
    return jnp.concatenate([_pad_axis(p, axis, Hp) for p in parts], axis=axis)


def pad_params(params):
    """Zero-pad parameters to lane/sublane-aligned sizes (gate-blocked 3H axis).

    Matmul operands (w_ih, w_hh, w_mlp) are stored in bf16; biases stay f32 so
    they are added into the f32 accumulators at full precision.
    """
    V, E = params["embedding"].shape
    H = params["w_hh"].shape[0]
    Ep, Hp, Vp = _round_up(E, 128), _round_up(H, 128), _round_up(V, 128)
    padded = {
        "embedding": _pad_axis(params["embedding"], 1, Ep),            # [V, Ep] f32
        "w_ih": _pad_gated(_pad_axis(params["w_ih"], 0, Ep), Hp, 1
                           ).astype(jnp.bfloat16),                     # [Ep, 3Hp]
        "w_hh": _pad_gated(_pad_axis(params["w_hh"], 0, Hp), Hp, 1
                           ).astype(jnp.bfloat16),                     # [Hp, 3Hp]
        "b_ih": _pad_gated(params["b_ih"], Hp, 1),                     # [1, 3Hp] f32
        "b_hh": _pad_gated(params["b_hh"], Hp, 1),                     # [1, 3Hp] f32
        "w_mlp": _pad_axis(_pad_axis(params["w_mlp"], 0, Hp), 1, Vp
                           ).astype(jnp.bfloat16),                     # [Hp, Vp]
        "b_mlp": _pad_axis(params["b_mlp"], 1, Vp),                    # [1, Vp] f32
    }
    dims = dict(V=V, E=E, H=H, Ep=Ep, Hp=Hp, Vp=Vp)
    return padded, dims


# ----------------------------------------------------------------------------
# Kernel 1: batched GEMM with bias: out = x @ w + b (bf16 operands, f32 acc).
# 3-D grid (outer, inner, K) with K innermost/"arbitrary" and a f32 VMEM
# accumulator; the (M, N) axis order is chosen per call so the larger operand
# stays resident (loaded once) when K fits in a single tile.
# ----------------------------------------------------------------------------
def matmul_bias_kernel(x_ref, w_ref, b_ref, o_ref, acc_ref):
    @pl.when(pl.program_id(2) == 0)
    def _():
        acc_ref[...] = jnp.zeros_like(acc_ref)

    acc_ref[...] += jnp.dot(x_ref[...], w_ref[...],
                            preferred_element_type=jnp.float32)

    @pl.when(pl.program_id(2) == pl.num_programs(2) - 1)
    def _():
        o_ref[...] = (acc_ref[...] + b_ref[...]).astype(o_ref.dtype)


def matmul_bias(x, w, b, *, tm=256, tn=512, tk_max=1024, out_dtype=jnp.float32):
    """x: [M, K] bf16, w: [K, N] bf16, b: [1, N] f32. Returns [M, N] out_dtype."""
    M, K = x.shape
    Kw, N = w.shape
    assert Kw == K and b.shape == (1, N)
    assert K % 128 == 0 and N % 128 == 0, "weights must be lane-padded"

    tm = min(tm, _round_up(M, 8))
    tn = min(tn, N)
    # K tile must divide K exactly (ragged K would pollute the accumulator).
    if K <= tk_max:
        tk = K
    else:
        tk = max(c for c in range(tk_max, 0, -128) if K % c == 0)

    Mt, Nt, Kt = pl.cdiv(M, tm), pl.cdiv(N, tn), K // tk

    # Keep the LARGER operand resident (loaded once when Kt == 1); re-stream the
    # smaller one. For the vocab head this keeps W (Hp x Vp) resident.
    keep_w_resident = (x.size * x.dtype.itemsize) <= (w.size * w.dtype.itemsize)
    if keep_w_resident:
        grid = (Nt, Mt, Kt)
        x_map = lambda j, i, k: (i, k)
        w_map = lambda j, i, k: (k, j)
        b_map = lambda j, i, k: (0, j)
        o_map = lambda j, i, k: (i, j)
    else:
        grid = (Mt, Nt, Kt)
        x_map = lambda i, j, k: (i, k)
        w_map = lambda i, j, k: (k, j)
        b_map = lambda i, j, k: (0, j)
        o_map = lambda i, j, k: (i, j)

    out_bytes = jnp.dtype(out_dtype).itemsize
    est = (2 * (tm * tk * x.dtype.itemsize + tk * tn * w.dtype.itemsize
                + tn * b.dtype.itemsize)
           + 2 * tm * tn * out_bytes + tm * tn * 4)
    vmem_limit = max(int(est * 1.5) + (2 << 20), 16 << 20)

    return pl.pallas_call(
        matmul_bias_kernel,
        out_shape=jax.ShapeDtypeStruct((M, N), out_dtype),
        grid_spec=pltpu.PrefetchScalarGridSpec(
            num_scalar_prefetch=0,
            grid=grid,
            in_specs=[
                pl.BlockSpec((tm, tk), x_map),
                pl.BlockSpec((tk, tn), w_map),
                pl.BlockSpec((1, tn), b_map),
            ],
            out_specs=pl.BlockSpec((tm, tn), o_map),
            scratch_shapes=[pltpu.VMEM((tm, tn), jnp.float32)],
        ),
        compiler_params=pltpu.CompilerParams(
            dimension_semantics=("parallel", "parallel", "arbitrary"),
            vmem_limit_bytes=vmem_limit),
    )(x, w, b)


# ----------------------------------------------------------------------------
# Kernel 2: GRU recurrence, T-chunked. Grid = (batch_chunks, T // TS); each grid
# step consumes a (TS, Bc, 3Hp) slab of precomputed input gates and emits
# (TS, Bc, Hp) hidden states, carrying h in a VMEM scratch. The batch-chunk axis
# is "parallel" (v7x second TensorCore); the t axis is "arbitrary" (sequential).
# ----------------------------------------------------------------------------
def gru_recurrence_kernel(gi_ref, h0_ref, whh_ref, bhh_ref, h_out_ref, h_carry):
    """gi_ref:   [TS, Bc, 3Hp] bf16  precomputed x_t @ W_ih + b_ih (r, z, n)
       h0_ref:   [Bc, Hp] f32        initial hidden (resident block)
       whh_ref:  [Hp, 3Hp] bf16, bhh_ref: [1, 3Hp] f32
       h_out_ref:[TS, Bc, Hp] f32    h_t streamed back per chunk
       h_carry:  VMEM [Bc, Hp] f32   running hidden state
    """
    Hp = h_carry.shape[1]
    TS = gi_ref.shape[0]

    @pl.when(pl.program_id(1) == 0)
    def _():
        h_carry[...] = h0_ref[...]

    def step(s, h):
        gi = gi_ref[s]                                  # [Bc, 3Hp] bf16
        gh = jnp.dot(h.astype(jnp.bfloat16), whh_ref[...],
                     preferred_element_type=jnp.float32) + bhh_ref[...]
        # Gate slice boundaries are 128-lane aligned (Hp % 128 == 0): free views.
        r = jax.nn.sigmoid(gh[:, 0:Hp] + gi[:, 0:Hp])
        z = jax.nn.sigmoid(gh[:, Hp:2 * Hp] + gi[:, Hp:2 * Hp])
        n = jnp.tanh(gi[:, 2 * Hp:3 * Hp] + r * gh[:, 2 * Hp:3 * Hp])
        h_new = n + z * (h - n)                         # == (1-z)*n + z*h
        h_out_ref[s] = h_new
        return h_new

    h_carry[...] = lax.fori_loop(0, TS, step, h_carry[...], unroll=True)


def gru_recurrence(gi_all, h0, w_hh, b_hh):
    T, Bp, threeHp = gi_all.shape
    Hp = h0.shape[1]

    # Timestep chunk (must divide T so no padded steps corrupt the carry).
    TS = max(c for c in (32, 16, 8, 4, 2, 1) if T % c == 0)
    # Batch chunks: 2 only when each chunk stays sublane-aligned (>= 8 rows).
    n_bc = 2 if (Bp % 16 == 0) else 1
    Bc = Bp // n_bc

    est = (2 * (TS * Bc * threeHp * 2 + Bc * Hp * 4 + Hp * threeHp * 2
                + threeHp * 4)
           + 2 * TS * Bc * Hp * 4 + Bc * Hp * 4)
    vmem_limit = max(int(est * 1.5) + (2 << 20), 16 << 20)

    return pl.pallas_call(
        gru_recurrence_kernel,
        out_shape=jax.ShapeDtypeStruct((T, Bp, Hp), jnp.float32),
        grid_spec=pltpu.PrefetchScalarGridSpec(
            num_scalar_prefetch=0,
            grid=(n_bc, T // TS),
            in_specs=[
                pl.BlockSpec((TS, Bc, threeHp), lambda b, t: (t, b, 0)),
                pl.BlockSpec((Bc, Hp), lambda b, t: (b, 0)),
                pl.BlockSpec((Hp, threeHp), lambda b, t: (0, 0)),
                pl.BlockSpec((1, threeHp), lambda b, t: (0, 0)),
            ],
            out_specs=pl.BlockSpec((TS, Bc, Hp), lambda b, t: (t, b, 0)),
            scratch_shapes=[pltpu.VMEM((Bc, Hp), jnp.float32)],
        ),
        compiler_params=pltpu.CompilerParams(
            dimension_semantics=("parallel", "arbitrary"),
            vmem_limit_bytes=vmem_limit),
    )(gi_all, h0, w_hh, b_hh)


# ----------------------------------------------------------------------------
# Full forward pass matching GRUModel.forward.
# ----------------------------------------------------------------------------
def gru_model_forward(tokens, hidden, padded_params, dims):
    """tokens: [T, B, 1] int32 (seq-major, nn.GRU default), hidden: [1, B, H].
    Returns (logits [T, B, V], h_n [1, B, H])."""
    p = padded_params
    T, B, _ = tokens.shape
    H, V = dims["H"], dims["V"]
    Ep, Hp, Vp = dims["Ep"], dims["Hp"], dims["Vp"]
    Bp = _round_up(B, 8)

    # Glue: embedding gather, zero-pad batch / hidden to aligned sizes.
    x_emb = jnp.take(p["embedding"], tokens[..., 0], axis=0)        # [T, B, Ep]
    x_emb = _pad_axis(x_emb, 1, Bp).astype(jnp.bfloat16)            # [T, Bp, Ep]
    h0 = _pad_axis(_pad_axis(hidden[0], 0, Bp), 1, Hp)              # [Bp, Hp] f32

    # 1) Input projection batched over all time steps (M = T*Bp GEMM), bf16 out.
    gi_all = matmul_bias(x_emb.reshape(T * Bp, Ep), p["w_ih"], p["b_ih"],
                         out_dtype=jnp.bfloat16)
    gi_all = gi_all.reshape(T, Bp, 3 * Hp)

    # 2) Sequential GRU recurrence (T-chunked grid, h carried in VMEM, f32).
    h_all = gru_recurrence(gi_all, h0, p["w_hh"], p["b_hh"])        # [T, Bp, Hp]

    # 3) Dropout (eval identity) + output Linear as one batched GEMM over T*Bp;
    #    W (Hp x Vp) is the resident operand inside matmul_bias.
    logits = matmul_bias(h_all.astype(jnp.bfloat16).reshape(T * Bp, Hp),
                         p["w_mlp"], p["b_mlp"], out_dtype=jnp.float32)
    logits = logits.reshape(T, Bp, Vp)[:, :B, :V]                   # [T, B, V]
    h_n = h_all[T - 1:T, :B, :H]                                    # [1, B, H]
    return logits, h_n


# ----------------------------------------------------------------------------
# Pure-JAX f32 reference (unpadded) for correctness checking.
# ----------------------------------------------------------------------------
def gru_model_reference(tokens, hidden, params):
    emb = params["embedding"]
    x_emb = jnp.take(emb, tokens[..., 0], axis=0).astype(jnp.float32)
    H = hidden.shape[-1]

    def step(h, x_t):
        gi = x_t @ params["w_ih"] + params["b_ih"][0]
        gh = h @ params["w_hh"] + params["b_hh"][0]
        r = jax.nn.sigmoid(gi[:, :H] + gh[:, :H])
        z = jax.nn.sigmoid(gi[:, H:2 * H] + gh[:, H:2 * H])
        n = jnp.tanh(gi[:, 2 * H:] + r * gh[:, 2 * H:])
        h_new = (1.0 - z) * n + z * h
        return h_new, h_new

    h_final, outs = lax.scan(step, hidden[0], x_emb)
    logits = outs @ params["w_mlp"] + params["b_mlp"][0]
    return logits, h_final[None]


def init_params(key, vocab_size, embedding_size, hidden_size):
    ks = jax.random.split(key, 7)
    k_scale = 1.0 / jnp.sqrt(hidden_size)
    return {
        "embedding": jax.random.normal(ks[0], (vocab_size, embedding_size),
                                       jnp.float32) * 0.5,
        "w_ih": jax.random.uniform(ks[1], (embedding_size, 3 * hidden_size),
                                   jnp.float32, -k_scale, k_scale),
        "w_hh": jax.random.uniform(ks[2], (hidden_size, 3 * hidden_size),
                                   jnp.float32, -k_scale, k_scale),
        "b_ih": jax.random.uniform(ks[3], (1, 3 * hidden_size),
                                   jnp.float32, -k_scale, k_scale),
        "b_hh": jax.random.uniform(ks[4], (1, 3 * hidden_size),
                                   jnp.float32, -k_scale, k_scale),
        "w_mlp": jax.random.uniform(ks[5], (hidden_size, vocab_size),
                                    jnp.float32, -k_scale, k_scale),
        "b_mlp": jax.random.uniform(ks[6], (1, vocab_size),
                                    jnp.float32, -k_scale, k_scale),
    }


if __name__ == "__main__":
    # Small shapes consistent with the module.
    VOCAB = 32        # input_size (number of tokens)
    EMB = 16          # embedding_size
    HIDDEN = 32       # hidden_size
    LAYERS = 1        # TODO(synk): only layers=1 supported (module default).
    SEQ = 8           # time steps (dim 0, nn.GRU seq-first convention)
    BATCH = 2

    key = jax.random.PRNGKey(0)
    k_tok, k_param = jax.random.split(key)

    params = init_params(k_param, VOCAB, EMB, HIDDEN)
    padded_params, dims = pad_params(params)
    tokens = jax.random.randint(k_tok, (SEQ, BATCH, 1), 0, VOCAB, jnp.int32)
    hidden = jnp.zeros((LAYERS, BATCH, HIDDEN), jnp.float32)  # init_hidden()

    forward = jax.jit(lambda t, h: gru_model_forward(t, h, padded_params, dims))
    logits, h_n = jax.block_until_ready(forward(tokens, hidden))

    ref_logits, ref_h = gru_model_reference(tokens, hidden, params)
    assert logits.shape == (SEQ, BATCH, VOCAB)
    assert h_n.shape == (LAYERS, BATCH, HIDDEN)
    # bf16 MXU operands (f32 accumulation) => slightly looser tolerance vs the
    # strict f32 reference; error stays ~1e-2 at these sizes.
    assert jnp.allclose(logits, ref_logits, atol=5e-2, rtol=5e-2)
    assert jnp.allclose(h_n, ref_h, atol=5e-2, rtol=5e-2)

    print("KERNEL_OK")
</pallas_src>

<mosaic_0001>
module attributes {stable_mosaic.version = 11 : i64} {
  func.func @matmul_bias_kernel(%arg0: i32, %arg1: i32, %arg2: i32, %arg3: memref<64x128xbf16, #tpu.memory_space<vmem>>, %arg4: memref<128x384xbf16, #tpu.memory_space<vmem>>, %arg5: memref<1x384xf32, #tpu.memory_space<vmem>>, %arg6: memref<64x384xbf16, #tpu.memory_space<vmem>>, %arg7: memref<64x384xf32, #tpu.memory_space<vmem>>) attributes {dimension_semantics = [#tpu.dimension_semantics<parallel>, #tpu.dimension_semantics<parallel>, #tpu.dimension_semantics<arbitrary>], iteration_bounds = array<i64: 1, 1, 1>, scalar_prefetch = 0 : i64, scratch_operands = 1 : i64, tpu.core_type = #tpu.core_type<tc>, window_params = [{transform_indices = @transform_0, window_bounds = array<i64: 64, 128>}, {transform_indices = @transform_1, window_bounds = array<i64: 128, 384>}, {transform_indices = @transform_2, window_bounds = array<i64: 1, 384>}, {transform_indices = @transform_3, window_bounds = array<i64: 64, 384>}]} {
    %c0_i32 = arith.constant 0 : i32
    %0 = arith.cmpi eq, %arg2, %c0_i32 : i32
    %1 = arith.extui %0 : i1 to i32
    %c0_i32_0 = arith.constant 0 : i32
    %2 = arith.cmpi ne, %1, %c0_i32_0 : i32
    scf.if %2 {
      %cst_10 = arith.constant 0.000000e+00 : f32
      %12 = vector.broadcast %cst_10 : f32 to vector<64x384xf32>
      %c0_11 = arith.constant 0 : index
      %c0_12 = arith.constant 0 : index
      %13 = vector.load %arg7[%c0_11, %c0_12] : memref<64x384xf32, #tpu.memory_space<vmem>>, vector<64x384xf32>
      tpu.vector_store %arg7[%c0_11, %c0_12], %12 {strides = array<i32>} : memref<64x384xf32, #tpu.memory_space<vmem>>, vector<64x384xf32>,
    } else {
    }
    %c0 = arith.constant 0 : index
    %c0_1 = arith.constant 0 : index
    %3 = vector.load %arg7[%c0, %c0_1] : memref<64x384xf32, #tpu.memory_space<vmem>>, vector<64x384xf32>
    %c0_2 = arith.constant 0 : index
    %c0_3 = arith.constant 0 : index
    %4 = vector.load %arg3[%c0_2, %c0_3] : memref<64x128xbf16, #tpu.memory_space<vmem>>, vector<64x128xbf16>
    %c0_4 = arith.constant 0 : index
    %c0_5 = arith.constant 0 : index
    %5 = vector.load %arg4[%c0_4, %c0_5] : memref<128x384xbf16, #tpu.memory_space<vmem>>, vector<128x384xbf16>
    %cst = arith.constant dense<0.000000e+00> : vector<64x384xf32>
    %6 = tpu.matmul %4, %5, %cst {dimension_numbers = #tpu.dot_dimension_numbers<[1], [0], [0], [1], [0, 0, 1, 1], [], []>} : vector<64x128xbf16>, vector<128x384xbf16>, vector<64x384xf32> -> vector<64x384xf32>
    %7 = arith.addf %3, %6 : vector<64x384xf32>
    %c0_6 = arith.constant 0 : index
    %c0_7 = arith.constant 0 : index
    %8 = vector.load %arg7[%c0_6, %c0_7] : memref<64x384xf32, #tpu.memory_space<vmem>>, vector<64x384xf32>
    tpu.vector_store %arg7[%c0_6, %c0_7], %7 {strides = array<i32>} : memref<64x384xf32, #tpu.memory_space<vmem>>, vector<64x384xf32>,
    %c0_i32_8 = arith.constant 0 : i32
    %9 = arith.cmpi eq, %arg2, %c0_i32_8 : i32
    %10 = arith.extui %9 : i1 to i32
    %c0_i32_9 = arith.constant 0 : i32
    %11 = arith.cmpi ne, %10, %c0_i32_9 : i32
    scf.if %11 {
      %c0_10 = arith.constant 0 : index
      %c0_11 = arith.constant 0 : index
      %12 = vector.load %arg7[%c0_10, %c0_11] : memref<64x384xf32, #tpu.memory_space<vmem>>, vector<64x384xf32>
      %c0_12 = arith.constant 0 : index
      %c0_13 = arith.constant 0 : index
      %13 = vector.load %arg5[%c0_12, %c0_13] : memref<1x384xf32, #tpu.memory_space<vmem>>, vector<1x384xf32>
      %14 = vector.broadcast %13 : vector<1x384xf32> to vector<64x384xf32>
      %15 = arith.addf %12, %14 : vector<64x384xf32>
      %16 = arith.truncf %15 : vector<64x384xf32> to vector<64x384xbf16>
      %c0_14 = arith.constant 0 : index
      %c0_15 = arith.constant 0 : index
      %17 = vector.load %arg6[%c0_14, %c0_15] : memref<64x384xbf16, #tpu.memory_space<vmem>>, vector<64x384xbf16>
      tpu.vector_store %arg6[%c0_14, %c0_15], %16 {strides = array<i32>} : memref<64x384xbf16, #tpu.memory_space<vmem>>, vector<64x384xbf16>,
    } else {
    }
    return
  }
  func.func @transform_0(%arg0: i32, %arg1: i32, %arg2: i32) -> (i32, i32) {
    %c0_i32 = arith.constant 0 : i32
    return %arg1, %arg2 : i32, i32
  }
  func.func @transform_1(%arg0: i32, %arg1: i32, %arg2: i32) -> (i32, i32) {
    %c0_i32 = arith.constant 0 : i32
    return %arg2, %arg0 : i32, i32
  }
  func.func @transform_2(%arg0: i32, %arg1: i32, %arg2: i32) -> (i32, i32) {
    %c0_i32 = arith.constant 0 : i32
    %c0_i32_0 = arith.constant 0 : i32
    return %c0_i32, %arg0 : i32, i32
  }
  func.func @transform_3(%arg0: i32, %arg1: i32, %arg2: i32) -> (i32, i32) {
    %c0_i32 = arith.constant 0 : i32
    return %arg1, %arg0 : i32, i32
  }
}

module attributes {stable_mosaic.version = 11 : i64} {
  func.func @gru_recurrence_kernel(%arg0: i32, %arg1: i32, %arg2: memref<8x8x384xbf16, #tpu.memory_space<vmem>>, %arg3: memref<8x128xf32, #tpu.memory_space<vmem>>, %arg4: memref<128x384xbf16, #tpu.memory_space<vmem>>, %arg5: memref<1x384xf32, #tpu.memory_space<vmem>>, %arg6: memref<8x8x128xf32, #tpu.memory_space<vmem>>, %arg7: memref<8x128xf32, #tpu.memory_space<vmem>>) attributes {dimension_semantics = [#tpu.dimension_semantics<parallel>, #tpu.dimension_semantics<arbitrary>], iteration_bounds = array<i64: 1, 1>, scalar_prefetch = 0 : i64, scratch_operands = 1 : i64, tpu.core_type = #tpu.core_type<tc>, window_params = [{transform_indices = @transform_0, window_bounds = array<i64: 8, 8, 384>}, {transform_indices = @transform_1, window_bounds = array<i64: 8, 128>}, {pipeline_mode = #tpu.pipeline_mode<synchronous>, transform_indices = @transform_2, window_bounds = array<i64: 128, 384>}, {pipeline_mode = #tpu.pipeline_mode<synchronous>, transform_indices = @transform_3, window_bounds = array<i64: 1, 384>}, {transform_indices = @transform_4, window_bounds = array<i64: 8, 8, 128>}]} {
    %c0_i32 = arith.constant 0 : i32
    %0 = arith.cmpi eq, %arg1, %c0_i32 : i32
    %1 = arith.extui %0 : i1 to i32
    %c0_i32_0 = arith.constant 0 : i32
    %2 = arith.cmpi ne, %1, %c0_i32_0 : i32
    scf.if %2 {
      %c0_92 = arith.constant 0 : index
      %c0_93 = arith.constant 0 : index
      %325 = vector.load %arg3[%c0_92, %c0_93] : memref<8x128xf32, #tpu.memory_space<vmem>>, vector<8x128xf32>
      %c0_94 = arith.constant 0 : index
      %c0_95 = arith.constant 0 : index
      %326 = vector.load %arg7[%c0_94, %c0_95] : memref<8x128xf32, #tpu.memory_space<vmem>>, vector<8x128xf32>
      tpu.vector_store %arg7[%c0_94, %c0_95], %325 {strides = array<i32>} : memref<8x128xf32, #tpu.memory_space<vmem>>, vector<8x128xf32>,
    } else {
    }
    %c0 = arith.constant 0 : index
    %c0_1 = arith.constant 0 : index
    %3 = vector.load %arg7[%c0, %c0_1] : memref<8x128xf32, #tpu.memory_space<vmem>>, vector<8x128xf32>
    %c0_i32_2 = arith.constant 0 : i32
    %4 = arith.index_cast %c0_i32_2 : i32 to index
    %c0_3 = arith.constant 0 : index
    %c0_4 = arith.constant 0 : index
    %5 = vector.load %arg2[%4, %c0_3, %c0_4] : memref<8x8x384xbf16, #tpu.memory_space<vmem>>, vector<1x8x384xbf16>
    %6 = vector.shape_cast %5 : vector<1x8x384xbf16> to vector<8x384xbf16>
    %7 = arith.truncf %3 : vector<8x128xf32> to vector<8x128xbf16>
    %c0_5 = arith.constant 0 : index
    %c0_6 = arith.constant 0 : index
    %8 = vector.load %arg4[%c0_5, %c0_6] : memref<128x384xbf16, #tpu.memory_space<vmem>>, vector<128x384xbf16>
    %cst = arith.constant dense<0.000000e+00> : vector<8x384xf32>
    %9 = tpu.matmul %7, %8, %cst {dimension_numbers = #tpu.dot_dimension_numbers<[1], [0], [0], [1], [0, 0, 1, 1], [], []>} : vector<8x128xbf16>, vector<128x384xbf16>, vector<8x384xf32> -> vector<8x384xf32>
    %c0_7 = arith.constant 0 : index
    %c0_8 = arith.constant 0 : index
    %10 = vector.load %arg5[%c0_7, %c0_8] : memref<1x384xf32, #tpu.memory_space<vmem>>, vector<1x384xf32>
    %11 = vector.broadcast %10 : vector<1x384xf32> to vector<8x384xf32>
    %12 = arith.addf %9, %11 : vector<8x384xf32>
    %13 = vector.extract_strided_slice %12 {offsets = [0, 0], sizes = [8, 128], strides = [1, 1]} : vector<8x384xf32> to vector<8x128xf32>
    %14 = vector.extract_strided_slice %6 {offsets = [0, 0], sizes = [8, 128], strides = [1, 1]} : vector<8x384xbf16> to vector<8x128xbf16>
    %15 = arith.extf %14 : vector<8x128xbf16> to vector<8x128xf32>
    %16 = arith.addf %13, %15 : vector<8x128xf32>
    %17 = arith.negf %16 : vector<8x128xf32>
    %18 = math.exp %17 : vector<8x128xf32>
    %cst_9 = arith.constant 1.000000e+00 : f32
    %19 = vector.broadcast %cst_9 : f32 to vector<8x128xf32>
    %20 = arith.addf %19, %18 : vector<8x128xf32>
    %21 = arith.divf %19, %20 : vector<8x128xf32>
    %22 = vector.extract_strided_slice %12 {offsets = [0, 128], sizes = [8, 128], strides = [1, 1]} : vector<8x384xf32> to vector<8x128xf32>
    %23 = vector.extract_strided_slice %6 {offsets = [0, 128], sizes = [8, 128], strides = [1, 1]} : vector<8x384xbf16> to vector<8x128xbf16>
    %24 = arith.extf %23 : vector<8x128xbf16> to vector<8x128xf32>
    %25 = arith.addf %22, %24 : vector<8x128xf32>
    %26 = arith.negf %25 : vector<8x128xf32>
    %27 = math.exp %26 : vector<8x128xf32>
    %cst_10 = arith.constant 1.000000e+00 : f32
    %28 = vector.broadcast %cst_10 : f32 to vector<8x128xf32>
    %29 = arith.addf %28, %27 : vector<8x128xf32>
    %30 = arith.divf %28, %29 : vector<8x128xf32>
    %31 = vector.extract_strided_slice %6 {offsets = [0, 256], sizes = [8, 128], strides = [1, 1]} : vector<8x384xbf16> to vector<8x128xbf16>
    %32 = vector.extract_strided_slice %12 {offsets = [0, 256], sizes = [8, 128], strides = [1, 1]} : vector<8x384xf32> to vector<8x128xf32>
    %33 = arith.mulf %21, %32 : vector<8x128xf32>
    %34 = arith.extf %31 : vector<8x128xbf16> to vector<8x128xf32>
    %35 = arith.addf %34, %33 : vector<8x128xf32>
    %36 = math.tanh %35 : vector<8x128xf32>
    %37 = arith.subf %3, %36 : vector<8x128xf32>
    %38 = arith.mulf %30, %37 : vector<8x128xf32>
    %39 = arith.addf %36, %38 : vector<8x128xf32>
    %40 = arith.index_cast %c0_i32_2 : i32 to index
    %c0_11 = arith.constant 0 : index
    %c0_12 = arith.constant 0 : index
    %41 = vector.load %arg6[%40, %c0_11, %c0_12] : memref<8x8x128xf32, #tpu.memory_space<vmem>>, vector<1x8x128xf32>
    %42 = vector.shape_cast %41 : vector<1x8x128xf32> to vector<8x128xf32>
    %43 = vector.shape_cast %39 : vector<8x128xf32> to vector<1x8x128xf32>
    tpu.vector_store %arg6[%40, %c0_11, %c0_12], %43 {strides = array<i32>} : memref<8x8x128xf32, #tpu.memory_space<vmem>>, vector<1x8x128xf32>,
    %c1_i32 = arith.constant 1 : i32
    %44 = arith.index_cast %c1_i32 : i32 to index
    %c0_13 = arith.constant 0 : index
    %c0_14 = arith.constant 0 : index
    %45 = vector.load %arg2[%44, %c0_13, %c0_14] : memref<8x8x384xbf16, #tpu.memory_space<vmem>>, vector<1x8x384xbf16>
    %46 = vector.shape_cast %45 : vector<1x8x384xbf16> to vector<8x384xbf16>
    %47 = arith.truncf %39 : vector<8x128xf32> to vector<8x128xbf16>
    %c0_15 = arith.constant 0 : index
    %c0_16 = arith.constant 0 : index
    %48 = vector.load %arg4[%c0_15, %c0_16] : memref<128x384xbf16, #tpu.memory_space<vmem>>, vector<128x384xbf16>
    %cst_17 = arith.constant dense<0.000000e+00> : vector<8x384xf32>
    %49 = tpu.matmul %47, %48, %cst_17 {dimension_numbers = #tpu.dot_dimension_numbers<[1], [0], [0], [1], [0, 0, 1, 1], [], []>} : vector<8x128xbf16>, vector<128x384xbf16>, vector<8x384xf32> -> vector<8x384xf32>
    %c0_18 = arith.constant 0 : index
    %c0_19 = arith.constant 0 : index
    %50 = vector.load %arg5[%c0_18, %c0_19] : memref<1x384xf32, #tpu.memory_space<vmem>>, vector<1x384xf32>
    %51 = vector.broadcast %50 : vector<1x384xf32> to vector<8x384xf32>
    %52 = arith.addf %49, %51 : vector<8x384xf32>
    %53 = vector.extract_strided_slice %52 {offsets = [0, 0], sizes = [8, 128], strides = [1, 1]} : vector<8x384xf32> to vector<8x128xf32>
    %54 = vector.extract_strided_slice %46 {offsets = [0, 0], sizes = [8, 128], strides = [1, 1]} : vector<8x384xbf16> to vector<8x128xbf16>
    %55 = arith.extf %54 : vector<8x128xbf16> to vector<8x128xf32>
    %56 = arith.addf %53, %55 : vector<8x128xf32>
    %57 = arith.negf %56 : vector<8x128xf32>
    %58 = math.exp %57 : vector<8x128xf32>
    %cst_20 = arith.constant 1.000000e+00 : f32
    %59 = vector.broadcast %cst_20 : f32 to vector<8x128xf32>
    %60 = arith.addf %59, %58 : vector<8x128xf32>
    %61 = arith.divf %59, %60 : vector<8x128xf32>
    %62 = vector.extract_strided_slice %52 {offsets = [0, 128], sizes = [8, 128], strides = [1, 1]} : vector<8x384xf32> to vector<8x128xf32>
    %63 = vector.extract_strided_slice %46 {offsets = [0, 128], sizes = [8, 128], strides = [1, 1]} : vector<8x384xbf16> to vector<8x128xbf16>
    %64 = arith.extf %63 : vector<8x128xbf16> to vector<8x128xf32>
    %65 = arith.addf %62, %64 : vector<8x128xf32>
    %66 = arith.negf %65 : vector<8x128xf32>
    %67 = math.exp %66 : vector<8x128xf32>
    %cst_21 = arith.constant 1.000000e+00 : f32
    %68 = vector.broadcast %cst_21 : f32 to vector<8x128xf32>
    %69 = arith.addf %68, %67 : vector<8x128xf32>
    %70 = arith.divf %68, %69 : vector<8x128xf32>
    %71 = vector.extract_strided_slice %46 {offsets = [0, 256], sizes = [8, 128], strides = [1, 1]} : vector<8x384xbf16> to vector<8x128xbf16>
    %72 = vector.extract_strided_slice %52 {offsets = [0, 256], sizes = [8, 128], strides = [1, 1]} : vector<8x384xf32> to vector<8x128xf32>
    %73 = arith.mulf %61, %72 : vector<8x128xf32>
    %74 = arith.extf %71 : vector<8x128xbf16> to vector<8x128xf32>
    %75 = arith.addf %74, %73 : vector<8x128xf32>
    %76 = math.tanh %75 : vector<8x128xf32>
    %77 = arith.subf %39, %76 : vector<8x128xf32>
    %78 = arith.mulf %70, %77 : vector<8x128xf32>
    %79 = arith.addf %76, %78 : vector<8x128xf32>
    %80 = arith.index_cast %c1_i32 : i32 to index
    %c0_22 = arith.constant 0 : index
    %c0_23 = arith.constant 0 : index
    %81 = vector.load %arg6[%80, %c0_22, %c0_23] : memref<8x8x128xf32, #tpu.memory_space<vmem>>, vector<1x8x128xf32>
    %82 = vector.shape_cast %81 : vector<1x8x128xf32> to vector<8x128xf32>
    %83 = vector.shape_cast %79 : vector<8x128xf32> to vector<1x8x128xf32>
    tpu.vector_store %arg6[%80, %c0_22, %c0_23], %83 {strides = array<i32>} : memref<8x8x128xf32, #tpu.memory_space<vmem>>, vector<1x8x128xf32>,
    %c2_i32 = arith.constant 2 : i32
    %84 = arith.index_cast %c2_i32 : i32 to index
    %c0_24 = arith.constant 0 : index
    %c0_25 = arith.constant 0 : index
    %85 = vector.load %arg2[%84, %c0_24, %c0_25] : memref<8x8x384xbf16, #tpu.memory_space<vmem>>, vector<1x8x384xbf16>
    %86 = vector.shape_cast %85 : vector<1x8x384xbf16> to vector<8x384xbf16>
    %87 = arith.truncf %79 : vector<8x128xf32> to vector<8x128xbf16>
    %c0_26 = arith.constant 0 : index
    %c0_27 = arith.constant 0 : index
    %88 = vector.load %arg4[%c0_26, %c0_27] : memref<128x384xbf16, #tpu.memory_space<vmem>>, vector<128x384xbf16>
    %cst_28 = arith.constant dense<0.000000e+00> : vector<8x384xf32>
    %89 = tpu.matmul %87, %88, %cst_28 {dimension_numbers = #tpu.dot_dimension_numbers<[1], [0], [0], [1], [0, 0, 1, 1], [], []>} : vector<8x128xbf16>, vector<128x384xbf16>, vector<8x384xf32> -> vector<8x384xf32>
    %c0_29 = arith.constant 0 : index
    %c0_30 = arith.constant 0 : index
    %90 = vector.load %arg5[%c0_29, %c0_30] : memref<1x384xf32, #tpu.memory_space<vmem>>, vector<1x384xf32>
    %91 = vector.broadcast %90 : vector<1x384xf32> to vector<8x384xf32>
    %92 = arith.addf %89, %91 : vector<8x384xf32>
    %93 = vector.extract_strided_slice %92 {offsets = [0, 0], sizes = [8, 128], strides = [1, 1]} : vector<8x384xf32> to vector<8x128xf32>
    %94 = vector.extract_strided_slice %86 {offsets = [0, 0], sizes = [8, 128], strides = [1, 1]} : vector<8x384xbf16> to vector<8x128xbf16>
    %95 = arith.extf %94 : vector<8x128xbf16> to vector<8x128xf32>
    %96 = arith.addf %93, %95 : vector<8x128xf32>
    %97 = arith.negf %96 : vector<8x128xf32>
    %98 = math.exp %97 : vector<8x128xf32>
    %cst_31 = arith.constant 1.000000e+00 : f32
    %99 = vector.broadcast %cst_31 : f32 to vector<8x128xf32>
    %100 = arith.addf %99, %98 : vector<8x128xf32>
    %101 = arith.divf %99, %100 : vector<8x128xf32>
    %102 = vector.extract_strided_slice %92 {offsets = [0, 128], sizes = [8, 128], strides = [1, 1]} : vector<8x384xf32> to vector<8x128xf32>
    %103 = vector.extract_strided_slice %86 {offsets = [0, 128], sizes = [8, 128], strides = [1, 1]} : vector<8x384xbf16> to vector<8x128xbf16>
    %104 = arith.extf %103 : vector<8x128xbf16> to vector<8x128xf32>
    %105 = arith.addf %102, %104 : vector<8x128xf32>
    %106 = arith.negf %105 : vector<8x128xf32>
    %107 = math.exp %106 : vector<8x128xf32>
    %cst_32 = arith.constant 1.000000e+00 : f32
    %108 = vector.broadcast %cst_32 : f32 to vector<8x128xf32>
    %109 = arith.addf %108, %107 : vector<8x128xf32>
    %110 = arith.divf %108, %109 : vector<8x128xf32>
    %111 = vector.extract_strided_slice %86 {offsets = [0, 256], sizes = [8, 128], strides = [1, 1]} : vector<8x384xbf16> to vector<8x128xbf16>
    %112 = vector.extract_strided_slice %92 {offsets = [0, 256], sizes = [8, 128], strides = [1, 1]} : vector<8x384xf32> to vector<8x128xf32>
    %113 = arith.mulf %101, %112 : vector<8x128xf32>
    %114 = arith.extf %111 : vector<8x128xbf16> to vector<8x128xf32>
    %115 = arith.addf %114, %113 : vector<8x128xf32>
    %116 = math.tanh %115 : vector<8x128xf32>
    %117 = arith.subf %79, %116 : vector<8x128xf32>
    %118 = arith.mulf %110, %117 : vector<8x128xf32>
    %119 = arith.addf %116, %118 : vector<8x128xf32>
    %120 = arith.index_cast %c2_i32 : i32 to index
    %c0_33 = arith.constant 0 : index
    %c0_34 = arith.constant 0 : index
    %121 = vector.load %arg6[%120, %c0_33, %c0_34] : memref<8x8x128xf32, #tpu.memory_space<vmem>>, vector<1x8x128xf32>
    %122 = vector.shape_cast %121 : vector<1x8x128xf32> to vector<8x128xf32>
    %123 = vector.shape_cast %119 : vector<8x128xf32> to vector<1x8x128xf32>
    tpu.vector_store %arg6[%120, %c0_33, %c0_34], %123 {strides = array<i32>} : memref<8x8x128xf32, #tpu.memory_space<vmem>>, vector<1x8x128xf32>,
    %c3_i32 = arith.constant 3 : i32
    %124 = arith.index_cast %c3_i32 : i32 to index
    %c0_35 = arith.constant 0 : index
    %c0_36 = arith.constant 0 : index
    %125 = vector.load %arg2[%124, %c0_35, %c0_36] : memref<8x8x384xbf16, #tpu.memory_space<vmem>>, vector<1x8x384xbf16>
    %126 = vector.shape_cast %125 : vector<1x8x384xbf16> to vector<8x384xbf16>
    %127 = arith.truncf %119 : vector<8x128xf32> to vector<8x128xbf16>
    %c0_37 = arith.constant 0 : index
    %c0_38 = arith.constant 0 : index
    %128 = vector.load %arg4[%c0_37, %c0_38] : memref<128x384xbf16, #tpu.memory_space<vmem>>, vector<128x384xbf16>
    %cst_39 = arith.constant dense<0.000000e+00> : vector<8x384xf32>
    %129 = tpu.matmul %127, %128, %cst_39 {dimension_numbers = #tpu.dot_dimension_numbers<[1], [0], [0], [1], [0, 0, 1, 1], [], []>} : vector<8x128xbf16>, vector<128x384xbf16>, vector<8x384xf32> -> vector<8x384xf32>
    %c0_40 = arith.constant 0 : index
    %c0_41 = arith.constant 0 : index
    %130 = vector.load %arg5[%c0_40, %c0_41] : memref<1x384xf32, #tpu.memory_space<vmem>>, vector<1x384xf32>
    %131 = vector.broadcast %130 : vector<1x384xf32> to vector<8x384xf32>
    %132 = arith.addf %129, %131 : vector<8x384xf32>
    %133 = vector.extract_strided_slice %132 {offsets = [0, 0], sizes = [8, 128], strides = [1, 1]} : vector<8x384xf32> to vector<8x128xf32>
    %134 = vector.extract_strided_slice %126 {offsets = [0, 0], sizes = [8, 128], strides = [1, 1]} : vector<8x384xbf16> to vector<8x128xbf16>
    %135 = arith.extf %134 : vector<8x128xbf16> to vector<8x128xf32>
    %136 = arith.addf %133, %135 : vector<8x128xf32>
    %137 = arith.negf %136 : vector<8x128xf32>
    %138 = math.exp %137 : vector<8x128xf32>
    %cst_42 = arith.constant 1.000000e+00 : f32
    %139 = vector.broadcast %cst_42 : f32 to vector<8x128xf32>
    %140 = arith.addf %139, %138 : vector<8x128xf32>
    %141 = arith.divf %139, %140 : vector<8x128xf32>
    %142 = vector.extract_strided_slice %132 {offsets = [0, 128], sizes = [8, 128], strides = [1, 1]} : vector<8x384xf32> to vector<8x128xf32>
    %143 = vector.extract_strided_slice %126 {offsets = [0, 128], sizes = [8, 128], strides = [1, 1]} : vector<8x384xbf16> to vector<8x128xbf16>
    %144 = arith.extf %143 : vector<8x128xbf16> to vector<8x128xf32>
    %145 = arith.addf %142, %144 : vector<8x128xf32>
    %146 = arith.negf %145 : vector<8x128xf32>
    %147 = math.exp %146 : vector<8x128xf32>
    %cst_43 = arith.constant 1.000000e+00 : f32
    %148 = vector.broadcast %cst_43 : f32 to vector<8x128xf32>
    %149 = arith.addf %148, %147 : vector<8x128xf32>
    %150 = arith.divf %148, %149 : vector<8x128xf32>
    %151 = vector.extract_strided_slice %126 {offsets = [0, 256], sizes = [8, 128], strides = [1, 1]} : vector<8x384xbf16> to vector<8x128xbf16>
    %152 = vector.extract_strided_slice %132 {offsets = [0, 256], sizes = [8, 128], strides = [1, 1]} : vector<8x384xf32> to vector<8x128xf32>
    %153 = arith.mulf %141, %152 : vector<8x128xf32>
    %154 = arith.extf %151 : vector<8x128xbf16> to vector<8x128xf32>
    %155 = arith.addf %154, %153 : vector<8x128xf32>
    %156 = math.tanh %155 : vector<8x128xf32>
    %157 = arith.subf %119, %156 : vector<8x128xf32>
    %158 = arith.mulf %150, %157 : vector<8x128xf32>
    %159 = arith.addf %156, %158 : vector<8x128xf32>
    %160 = arith.index_cast %c3_i32 : i32 to index
    %c0_44 = arith.constant 0 : index
    %c0_45 = arith.constant 0 : index
    %161 = vector.load %arg6[%160, %c0_44, %c0_45] : memref<8x8x128xf32, #tpu.memory_space<vmem>>, vector<1x8x128xf32>
    %162 = vector.shape_cast %161 : vector<1x8x128xf32> to vector<8x128xf32>
    %163 = vector.shape_cast %159 : vector<8x128xf32> to vector<1x8x128xf32>
    tpu.vector_store %arg6[%160, %c0_44, %c0_45], %163 {strides = array<i32>} : memref<8x8x128xf32, #tpu.memory_space<vmem>>, vector<1x8x128xf32>,
    %c4_i32 = arith.constant 4 : i32
    %164 = arith.index_cast %c4_i32 : i32 to index
    %c0_46 = arith.constant 0 : index
    %c0_47 = arith.constant 0 : index
    %165 = vector.load %arg2[%164, %c0_46, %c0_47] : memref<8x8x384xbf16, #tpu.memory_space<vmem>>, vector<1x8x384xbf16>
    %166 = vector.shape_cast %165 : vector<1x8x384xbf16> to vector<8x384xbf16>
    %167 = arith.truncf %159 : vector<8x128xf32> to vector<8x128xbf16>
    %c0_48 = arith.constant 0 : index
    %c0_49 = arith.constant 0 : index
    %168 = vector.load %arg4[%c0_48, %c0_49] : memref<128x384xbf16, #tpu.memory_space<vmem>>, vector<128x384xbf16>
    %cst_50 = arith.constant dense<0.000000e+00> : vector<8x384xf32>
    %169 = tpu.matmul %167, %168, %cst_50 {dimension_numbers = #tpu.dot_dimension_numbers<[1], [0], [0], [1], [0, 0, 1, 1], [], []>} : vector<8x128xbf16>, vector<128x384xbf16>, vector<8x384xf32> -> vector<8x384xf32>
    %c0_51 = arith.constant 0 : index
    %c0_52 = arith.constant 0 : index
    %170 = vector.load %arg5[%c0_51, %c0_52] : memref<1x384xf32, #tpu.memory_space<vmem>>, vector<1x384xf32>
    %171 = vector.broadcast %170 : vector<1x384xf32> to vector<8x384xf32>
    %172 = arith.addf %169, %171 : vector<8x384xf32>
    %173 = vector.extract_strided_slice %172 {offsets = [0, 0], sizes = [8, 128], strides = [1, 1]} : vector<8x384xf32> to vector<8x128xf32>
    %174 = vector.extract_strided_slice %166 {offsets = [0, 0], sizes = [8, 128], strides = [1, 1]} : vector<8x384xbf16> to vector<8x128xbf16>
    %175 = arith.extf %174 : vector<8x128xbf16> to vector<8x128xf32>
    %176 = arith.addf %173, %175 : vector<8x128xf32>
    %177 = arith.negf %176 : vector<8x128xf32>
    %178 = math.exp %177 : vector<8x128xf32>
    %cst_53 = arith.constant 1.000000e+00 : f32
    %179 = vector.broadcast %cst_53 : f32 to vector<8x128xf32>
    %180 = arith.addf %179, %178 : vector<8x128xf32>
    %181 = arith.divf %179, %180 : vector<8x128xf32>
    %182 = vector.extract_strided_slice %172 {offsets = [0, 128], sizes = [8, 128], strides = [1, 1]} : vector<8x384xf32> to vector<8x128xf32>
    %183 = vector.extract_strided_slice %166 {offsets = [0, 128], sizes = [8, 128], strides = [1, 1]} : vector<8x384xbf16> to vector<8x128xbf16>
    %184 = arith.extf %183 : vector<8x128xbf16> to vector<8x128xf32>
    %185 = arith.addf %182, %184 : vector<8x128xf32>
    %186 = arith.negf %185 : vector<8x128xf32>
    %187 = math.exp %186 : vector<8x128xf32>
    %cst_54 = arith.constant 1.000000e+00 : f32
    %188 = vector.broadcast %cst_54 : f32 to vector<8x128xf32>
    %189 = arith.addf %188, %187 : vector<8x128xf32>
    %190 = arith.divf %188, %189 : vector<8x128xf32>
    %191 = vector.extract_strided_slice %166 {offsets = [0, 256], sizes = [8, 128], strides = [1, 1]} : vector<8x384xbf16> to vector<8x128xbf16>
    %192 = vector.extract_strided_slice %172 {offsets = [0, 256], sizes = [8, 128], strides = [1, 1]} : vector<8x384xf32> to vector<8x128xf32>
    %193 = arith.mulf %181, %192 : vector<8x128xf32>
    %194 = arith.extf %191 : vector<8x128xbf16> to vector<8x128xf32>
    %195 = arith.addf %194, %193 : vector<8x128xf32>
    %196 = math.tanh %195 : vector<8x128xf32>
    %197 = arith.subf %159, %196 : vector<8x128xf32>
    %198 = arith.mulf %190, %197 : vector<8x128xf32>
    %199 = arith.addf %196, %198 : vector<8x128xf32>
    %200 = arith.index_cast %c4_i32 : i32 to index
    %c0_55 = arith.constant 0 : index
    %c0_56 = arith.constant 0 : index
    %201 = vector.load %arg6[%200, %c0_55, %c0_56] : memref<8x8x128xf32, #tpu.memory_space<vmem>>, vector<1x8x128xf32>
    %202 = vector.shape_cast %201 : vector<1x8x128xf32> to vector<8x128xf32>
    %203 = vector.shape_cast %199 : vector<8x128xf32> to vector<1x8x128xf32>
    tpu.vector_store %arg6[%200, %c0_55, %c0_56], %203 {strides = array<i32>} : memref<8x8x128xf32, #tpu.memory_space<vmem>>, vector<1x8x128xf32>,
    %c5_i32 = arith.constant 5 : i32
    %204 = arith.index_cast %c5_i32 : i32 to index
    %c0_57 = arith.constant 0 : index
    %c0_58 = arith.constant 0 : index
    %205 = vector.load %arg2[%204, %c0_57, %c0_58] : memref<8x8x384xbf16, #tpu.memory_space<vmem>>, vector<1x8x384xbf16>
    %206 = vector.shape_cast %205 : vector<1x8x384xbf16> to vector<8x384xbf16>
    %207 = arith.truncf %199 : vector<8x128xf32> to vector<8x128xbf16>
    %c0_59 = arith.constant 0 : index
    %c0_60 = arith.constant 0 : index
    %208 = vector.load %arg4[%c0_59, %c0_60] : memref<128x384xbf16, #tpu.memory_space<vmem>>, vector<128x384xbf16>
    %cst_61 = arith.constant dense<0.000000e+00> : vector<8x384xf32>
    %209 = tpu.matmul %207, %208, %cst_61 {dimension_numbers = #tpu.dot_dimension_numbers<[1], [0], [0], [1], [0, 0, 1, 1], [], []>} : vector<8x128xbf16>, vector<128x384xbf16>, vector<8x384xf32> -> vector<8x384xf32>
    %c0_62 = arith.constant 0 : index
    %c0_63 = arith.constant 0 : index
    %210 = vector.load %arg5[%c0_62, %c0_63] : memref<1x384xf32, #tpu.memory_space<vmem>>, vector<1x384xf32>
    %211 = vector.broadcast %210 : vector<1x384xf32> to vector<8x384xf32>
    %212 = arith.addf %209, %211 : vector<8x384xf32>
    %213 = vector.extract_strided_slice %212 {offsets = [0, 0], sizes = [8, 128], strides = [1, 1]} : vector<8x384xf32> to vector<8x128xf32>
    %214 = vector.extract_strided_slice %206 {offsets = [0, 0], sizes = [8, 128], strides = [1, 1]} : vector<8x384xbf16> to vector<8x128xbf16>
    %215 = arith.extf %214 : vector<8x128xbf16> to vector<8x128xf32>
    %216 = arith.addf %213, %215 : vector<8x128xf32>
    %217 = arith.negf %216 : vector<8x128xf32>
    %218 = math.exp %217 : vector<8x128xf32>
    %cst_64 = arith.constant 1.000000e+00 : f32
    %219 = vector.broadcast %cst_64 : f32 to vector<8x128xf32>
    %220 = arith.addf %219, %218 : vector<8x128xf32>
    %221 = arith.divf %219, %220 : vector<8x128xf32>
    %222 = vector.extract_strided_slice %212 {offsets = [0, 128], sizes = [8, 128], strides = [1, 1]} : vector<8x384xf32> to vector<8x128xf32>
    %223 = vector.extract_strided_slice %206 {offsets = [0, 128], sizes = [8, 128], strides = [1, 1]} : vector<8x384xbf16> to vector<8x128xbf16>
    %224 = arith.extf %223 : vector<8x128xbf16> to vector<8x128xf32>
    %225 = arith.addf %222, %224 : vector<8x128xf32>
    %226 = arith.negf %225 : vector<8x128xf32>
    %227 = math.exp %226 : vector<8x128xf32>
    %cst_65 = arith.constant 1.000000e+00 : f32
    %228 = vector.broadcast %cst_65 : f32 to vector<8x128xf32>
    %229 = arith.addf %228, %227 : vector<8x128xf32>
    %230 = arith.divf %228, %229 : vector<8x128xf32>
    %231 = vector.extract_strided_slice %206 {offsets = [0, 256], sizes = [8, 128], strides = [1, 1]} : vector<8x384xbf16> to vector<8x128xbf16>
    %232 = vector.extract_strided_slice %212 {offsets = [0, 256], sizes = [8, 128], strides = [1, 1]} : vector<8x384xf32> to vector<8x128xf32>
    %233 = arith.mulf %221, %232 : vector<8x128xf32>
    %234 = arith.extf %231 : vector<8x128xbf16> to vector<8x128xf32>
    %235 = arith.addf %234, %233 : vector<8x128xf32>
    %236 = math.tanh %235 : vector<8x128xf32>
    %237 = arith.subf %199, %236 : vector<8x128xf32>
    %238 = arith.mulf %230, %237 : vector<8x128xf32>
    %239 = arith.addf %236, %238 : vector<8x128xf32>
    %240 = arith.index_cast %c5_i32 : i32 to index
    %c0_66 = arith.constant 0 : index
    %c0_67 = arith.constant 0 : index
    %241 = vector.load %arg6[%240, %c0_66, %c0_67] : memref<8x8x128xf32, #tpu.memory_space<vmem>>, vector<1x8x128xf32>
    %242 = vector.shape_cast %241 : vector<1x8x128xf32> to vector<8x128xf32>
    %243 = vector.shape_cast %239 : vector<8x128xf32> to vector<1x8x128xf32>
    tpu.vector_store %arg6[%240, %c0_66, %c0_67], %243 {strides = array<i32>} : memref<8x8x128xf32, #tpu.memory_space<vmem>>, vector<1x8x128xf32>,
    %c6_i32 = arith.constant 6 : i32
    %244 = arith.index_cast %c6_i32 : i32 to index
    %c0_68 = arith.constant 0 : index
    %c0_69 = arith.constant 0 : index
    %245 = vector.load %arg2[%244, %c0_68, %c0_69] : memref<8x8x384xbf16, #tpu.memory_space<vmem>>, vector<1x8x384xbf16>
    %246 = vector.shape_cast %245 : vector<1x8x384xbf16> to vector<8x384xbf16>
    %247 = arith.truncf %239 : vector<8x128xf32> to vector<8x128xbf16>
    %c0_70 = arith.constant 0 : index
    %c0_71 = arith.constant 0 : index
    %248 = vector.load %arg4[%c0_70, %c0_71] : memref<128x384xbf16, #tpu.memory_space<vmem>>, vector<128x384xbf16>
    %cst_72 = arith.constant dense<0.000000e+00> : vector<8x384xf32>
    %249 = tpu.matmul %247, %248, %cst_72 {dimension_numbers = #tpu.dot_dimension_numbers<[1], [0], [0], [1], [0, 0, 1, 1], [], []>} : vector<8x128xbf16>, vector<128x384xbf16>, vector<8x384xf32> -> vector<8x384xf32>
    %c0_73 = arith.constant 0 : index
    %c0_74 = arith.constant 0 : index
    %250 = vector.load %arg5[%c0_73, %c0_74] : memref<1x384xf32, #tpu.memory_space<vmem>>, vector<1x384xf32>
    %251 = vector.broadcast %250 : vector<1x384xf32> to vector<8x384xf32>
    %252 = arith.addf %249, %251 : vector<8x384xf32>
    %253 = vector.extract_strided_slice %252 {offsets = [0, 0], sizes = [8, 128], strides = [1, 1]} : vector<8x384xf32> to vector<8x128xf32>
    %254 = vector.extract_strided_slice %246 {offsets = [0, 0], sizes = [8, 128], strides = [1, 1]} : vector<8x384xbf16> to vector<8x128xbf16>
    %255 = arith.extf %254 : vector<8x128xbf16> to vector<8x128xf32>
    %256 = arith.addf %253, %255 : vector<8x128xf32>
    %257 = arith.negf %256 : vector<8x128xf32>
    %258 = math.exp %257 : vector<8x128xf32>
    %cst_75 = arith.constant 1.000000e+00 : f32
    %259 = vector.broadcast %cst_75 : f32 to vector<8x128xf32>
    %260 = arith.addf %259, %258 : vector<8x128xf32>
    %261 = arith.divf %259, %260 : vector<8x128xf32>
    %262 = vector.extract_strided_slice %252 {offsets = [0, 128], sizes = [8, 128], strides = [1, 1]} : vector<8x384xf32> to vector<8x128xf32>
    %263 = vector.extract_strided_slice %246 {offsets = [0, 128], sizes = [8, 128], strides = [1, 1]} : vector<8x384xbf16> to vector<8x128xbf16>
    %264 = arith.extf %263 : vector<8x128xbf16> to vector<8x128xf32>
    %265 = arith.addf %262, %264 : vector<8x128xf32>
    %266 = arith.negf %265 : vector<8x128xf32>
    %267 = math.exp %266 : vector<8x128xf32>
    %cst_76 = arith.constant 1.000000e+00 : f32
    %268 = vector.broadcast %cst_76 : f32 to vector<8x128xf32>
    %269 = arith.addf %268, %267 : vector<8x128xf32>
    %270 = arith.divf %268, %269 : vector<8x128xf32>
    %271 = vector.extract_strided_slice %246 {offsets = [0, 256], sizes = [8, 128], strides = [1, 1]} : vector<8x384xbf16> to vector<8x128xbf16>
    %272 = vector.extract_strided_slice %252 {offsets = [0, 256], sizes = [8, 128], strides = [1, 1]} : vector<8x384xf32> to vector<8x128xf32>
    %273 = arith.mulf %261, %272 : vector<8x128xf32>
    %274 = arith.extf %271 : vector<8x128xbf16> to vector<8x128xf32>
    %275 = arith.addf %274, %273 : vector<8x128xf32>
    %276 = math.tanh %275 : vector<8x128xf32>
    %277 = arith.subf %239, %276 : vector<8x128xf32>
    %278 = arith.mulf %270, %277 : vector<8x128xf32>
    %279 = arith.addf %276, %278 : vector<8x128xf32>
    %280 = arith.index_cast %c6_i32 : i32 to index
    %c0_77 = arith.constant 0 : index
    %c0_78 = arith.constant 0 : index
    %281 = vector.load %arg6[%280, %c0_77, %c0_78] : memref<8x8x128xf32, #tpu.memory_space<vmem>>, vector<1x8x128xf32>
    %282 = vector.shape_cast %281 : vector<1x8x128xf32> to vector<8x128xf32>
    %283 = vector.shape_cast %279 : vector<8x128xf32> to vector<1x8x128xf32>
    tpu.vector_store %arg6[%280, %c0_77, %c0_78], %283 {strides = array<i32>} : memref<8x8x128xf32, #tpu.memory_space<vmem>>, vector<1x8x128xf32>,
    %c7_i32 = arith.constant 7 : i32
    %284 = arith.index_cast %c7_i32 : i32 to index
    %c0_79 = arith.constant 0 : index
    %c0_80 = arith.constant 0 : index
    %285 = vector.load %arg2[%284, %c0_79, %c0_80] : memref<8x8x384xbf16, #tpu.memory_space<vmem>>, vector<1x8x384xbf16>
    %286 = vector.shape_cast %285 : vector<1x8x384xbf16> to vector<8x384xbf16>
    %287 = arith.truncf %279 : vector<8x128xf32> to vector<8x128xbf16>
    %c0_81 = arith.constant 0 : index
    %c0_82 = arith.constant 0 : index
    %288 = vector.load %arg4[%c0_81, %c0_82] : memref<128x384xbf16, #tpu.memory_space<vmem>>, vector<128x384xbf16>
    %cst_83 = arith.constant dense<0.000000e+00> : vector<8x384xf32>
    %289 = tpu.matmul %287, %288, %cst_83 {dimension_numbers = #tpu.dot_dimension_numbers<[1], [0], [0], [1], [0, 0, 1, 1], [], []>} : vector<8x128xbf16>, vector<128x384xbf16>, vector<8x384xf32> -> vector<8x384xf32>
    %c0_84 = arith.constant 0 : index
    %c0_85 = arith.constant 0 : index
    %290 = vector.load %arg5[%c0_84, %c0_85] : memref<1x384xf32, #tpu.memory_space<vmem>>, vector<1x384xf32>
    %291 = vector.broadcast %290 : vector<1x384xf32> to vector<8x384xf32>
    %292 = arith.addf %289, %291 : vector<8x384xf32>
    %293 = vector.extract_strided_slice %292 {offsets = [0, 0], sizes = [8, 128], strides = [1, 1]} : vector<8x384xf32> to vector<8x128xf32>
    %294 = vector.extract_strided_slice %286 {offsets = [0, 0], sizes = [8, 128], strides = [1, 1]} : vector<8x384xbf16> to vector<8x128xbf16>
    %295 = arith.extf %294 : vector<8x128xbf16> to vector<8x128xf32>
    %296 = arith.addf %293, %295 : vector<8x128xf32>
    %297 = arith.negf %296 : vector<8x128xf32>
    %298 = math.exp %297 : vector<8x128xf32>
    %cst_86 = arith.constant 1.000000e+00 : f32
    %299 = vector.broadcast %cst_86 : f32 to vector<8x128xf32>
    %300 = arith.addf %299, %298 : vector<8x128xf32>
    %301 = arith.divf %299, %300 : vector<8x128xf32>
    %302 = vector.extract_strided_slice %292 {offsets = [0, 128], sizes = [8, 128], strides = [1, 1]} : vector<8x384xf32> to vector<8x128xf32>
    %303 = vector.extract_strided_slice %286 {offsets = [0, 128], sizes = [8, 128], strides = [1, 1]} : vector<8x384xbf16> to vector<8x128xbf16>
    %304 = arith.extf %303 : vector<8x128xbf16> to vector<8x128xf32>
    %305 = arith.addf %302, %304 : vector<8x128xf32>
    %306 = arith.negf %305 : vector<8x128xf32>
    %307 = math.exp %306 : vector<8x128xf32>
    %cst_87 = arith.constant 1.000000e+00 : f32
    %308 = vector.broadcast %cst_87 : f32 to vector<8x128xf32>
    %309 = arith.addf %308, %307 : vector<8x128xf32>
    %310 = arith.divf %308, %309 : vector<8x128xf32>
    %311 = vector.extract_strided_slice %286 {offsets = [0, 256], sizes = [8, 128], strides = [1, 1]} : vector<8x384xbf16> to vector<8x128xbf16>
    %312 = vector.extract_strided_slice %292 {offsets = [0, 256], sizes = [8, 128], strides = [1, 1]} : vector<8x384xf32> to vector<8x128xf32>
    %313 = arith.mulf %301, %312 : vector<8x128xf32>
    %314 = arith.extf %311 : vector<8x128xbf16> to vector<8x128xf32>
    %315 = arith.addf %314, %313 : vector<8x128xf32>
    %316 = math.tanh %315 : vector<8x128xf32>
    %317 = arith.subf %279, %316 : vector<8x128xf32>
    %318 = arith.mulf %310, %317 : vector<8x128xf32>
    %319 = arith.addf %316, %318 : vector<8x128xf32>
    %320 = arith.index_cast %c7_i32 : i32 to index
    %c0_88 = arith.constant 0 : index
    %c0_89 = arith.constant 0 : index
    %321 = vector.load %arg6[%320, %c0_88, %c0_89] : memref<8x8x128xf32, #tpu.memory_space<vmem>>, vector<1x8x128xf32>
    %322 = vector.shape_cast %321 : vector<1x8x128xf32> to vector<8x128xf32>
    %323 = vector.shape_cast %319 : vector<8x128xf32> to vector<1x8x128xf32>
    tpu.vector_store %arg6[%320, %c0_88, %c0_89], %323 {strides = array<i32>} : memref<8x8x128xf32, #tpu.memory_space<vmem>>, vector<1x8x128xf32>,
    %c8_i32 = arith.constant 8 : i32
    %c0_90 = arith.constant 0 : index
    %c0_91 = arith.constant 0 : index
    %324 = vector.load %arg7[%c0_90, %c0_91] : memref<8x128xf32, #tpu.memory_space<vmem>>, vector<8x128xf32>
    tpu.vector_store %arg7[%c0_90, %c0_91], %319 {strides = array<i32>} : memref<8x128xf32, #tpu.memory_space<vmem>>, vector<8x128xf32>,
    return
  }
  func.func @transform_0(%arg0: i32, %arg1: i32) -> (i32, i32, i32) {
    %c0_i32 = arith.constant 0 : i32
    %c0_i32_0 = arith.constant 0 : i32
    return %arg1, %arg0, %c0_i32 : i32, i32, i32
  }
  func.func @transform_1(%arg0: i32, %arg1: i32) -> (i32, i32) {
    %c0_i32 = arith.constant 0 : i32
    %c0_i32_0 = arith.constant 0 : i32
    return %arg0, %c0_i32 : i32, i32
  }
  func.func @transform_2(%arg0: i32, %arg1: i32) -> (i32, i32) {
    %c0_i32 = arith.constant 0 : i32
    %c0_i32_0 = arith.constant 0 : i32
    %c0_i32_1 = arith.constant 0 : i32
    return %c0_i32, %c0_i32_0 : i32, i32
  }
  func.func @transform_3(%arg0: i32, %arg1: i32) -> (i32, i32) {
    %c0_i32 = arith.constant 0 : i32
    %c0_i32_0 = arith.constant 0 : i32
    %c0_i32_1 = arith.constant 0 : i32
    return %c0_i32, %c0_i32_0 : i32, i32
  }
  func.func @transform_4(%arg0: i32, %arg1: i32) -> (i32, i32, i32) {
    %c0_i32 = arith.constant 0 : i32
    %c0_i32_0 = arith.constant 0 : i32
    return %arg1, %arg0, %c0_i32 : i32, i32, i32
  }
}

module attributes {stable_mosaic.version = 11 : i64} {
  func.func @matmul_bias_kernel(%arg0: i32, %arg1: i32, %arg2: i32, %arg3: memref<64x128xbf16, #tpu.memory_space<vmem>>, %arg4: memref<128x128xbf16, #tpu.memory_space<vmem>>, %arg5: memref<1x128xf32, #tpu.memory_space<vmem>>, %arg6: memref<64x128xf32, #tpu.memory_space<vmem>>, %arg7: memref<64x128xf32, #tpu.memory_space<vmem>>) attributes {dimension_semantics = [#tpu.dimension_semantics<parallel>, #tpu.dimension_semantics<parallel>, #tpu.dimension_semantics<arbitrary>], iteration_bounds = array<i64: 1, 1, 1>, scalar_prefetch = 0 : i64, scratch_operands = 1 : i64, tpu.core_type = #tpu.core_type<tc>, window_params = [{transform_indices = @transform_0, window_bounds = array<i64: 64, 128>}, {transform_indices = @transform_1, window_bounds = array<i64: 128, 128>}, {transform_indices = @transform_2, window_bounds = array<i64: 1, 128>}, {transform_indices = @transform_3, window_bounds = array<i64: 64, 128>}]} {
    %c0_i32 = arith.constant 0 : i32
    %0 = arith.cmpi eq, %arg2, %c0_i32 : i32
    %1 = arith.extui %0 : i1 to i32
    %c0_i32_0 = arith.constant 0 : i32
    %2 = arith.cmpi ne, %1, %c0_i32_0 : i32
    scf.if %2 {
      %cst_10 = arith.constant 0.000000e+00 : f32
      %12 = vector.broadcast %cst_10 : f32 to vector<64x128xf32>
      %c0_11 = arith.constant 0 : index
      %c0_12 = arith.constant 0 : index
      %13 = vector.load %arg7[%c0_11, %c0_12] : memref<64x128xf32, #tpu.memory_space<vmem>>, vector<64x128xf32>
      tpu.vector_store %arg7[%c0_11, %c0_12], %12 {strides = array<i32>} : memref<64x128xf32, #tpu.memory_space<vmem>>, vector<64x128xf32>,
    } else {
    }
    %c0 = arith.constant 0 : index
    %c0_1 = arith.constant 0 : index
    %3 = vector.load %arg7[%c0, %c0_1] : memref<64x128xf32, #tpu.memory_space<vmem>>, vector<64x128xf32>
    %c0_2 = arith.constant 0 : index
    %c0_3 = arith.constant 0 : index
    %4 = vector.load %arg3[%c0_2, %c0_3] : memref<64x128xbf16, #tpu.memory_space<vmem>>, vector<64x128xbf16>
    %c0_4 = arith.constant 0 : index
    %c0_5 = arith.constant 0 : index
    %5 = vector.load %arg4[%c0_4, %c0_5] : memref<128x128xbf16, #tpu.memory_space<vmem>>, vector<128x128xbf16>
    %cst = arith.constant dense<0.000000e+00> : vector<64x128xf32>
    %6 = tpu.matmul %4, %5, %cst {dimension_numbers = #tpu.dot_dimension_numbers<[1], [0], [0], [1], [0, 0, 1, 1], [], []>} : vector<64x128xbf16>, vector<128x128xbf16>, vector<64x128xf32> -> vector<64x128xf32>
    %7 = arith.addf %3, %6 : vector<64x128xf32>
    %c0_6 = arith.constant 0 : index
    %c0_7 = arith.constant 0 : index
    %8 = vector.load %arg7[%c0_6, %c0_7] : memref<64x128xf32, #tpu.memory_space<vmem>>, vector<64x128xf32>
    tpu.vector_store %arg7[%c0_6, %c0_7], %7 {strides = array<i32>} : memref<64x128xf32, #tpu.memory_space<vmem>>, vector<64x128xf32>,
    %c0_i32_8 = arith.constant 0 : i32
    %9 = arith.cmpi eq, %arg2, %c0_i32_8 : i32
    %10 = arith.extui %9 : i1 to i32
    %c0_i32_9 = arith.constant 0 : i32
    %11 = arith.cmpi ne, %10, %c0_i32_9 : i32
    scf.if %11 {
      %c0_10 = arith.constant 0 : index
      %c0_11 = arith.constant 0 : index
      %12 = vector.load %arg7[%c0_10, %c0_11] : memref<64x128xf32, #tpu.memory_space<vmem>>, vector<64x128xf32>
      %c0_12 = arith.constant 0 : index
      %c0_13 = arith.constant 0 : index
      %13 = vector.load %arg5[%c0_12, %c0_13] : memref<1x128xf32, #tpu.memory_space<vmem>>, vector<1x128xf32>
      %14 = vector.broadcast %13 : vector<1x128xf32> to vector<64x128xf32>
      %15 = arith.addf %12, %14 : vector<64x128xf32>
      %c0_14 = arith.constant 0 : index
      %c0_15 = arith.constant 0 : index
      %16 = vector.load %arg6[%c0_14, %c0_15] : memref<64x128xf32, #tpu.memory_space<vmem>>, vector<64x128xf32>
      tpu.vector_store %arg6[%c0_14, %c0_15], %15 {strides = array<i32>} : memref<64x128xf32, #tpu.memory_space<vmem>>, vector<64x128xf32>,
    } else {
    }
    return
  }
  func.func @transform_0(%arg0: i32, %arg1: i32, %arg2: i32) -> (i32, i32) {
    %c0_i32 = arith.constant 0 : i32
    return %arg1, %arg2 : i32, i32
  }
  func.func @transform_1(%arg0: i32, %arg1: i32, %arg2: i32) -> (i32, i32) {
    %c0_i32 = arith.constant 0 : i32
    return %arg2, %arg0 : i32, i32
  }
  func.func @transform_2(%arg0: i32, %arg1: i32, %arg2: i32) -> (i32, i32) {
    %c0_i32 = arith.constant 0 : i32
    %c0_i32_0 = arith.constant 0 : i32
    return %c0_i32, %arg0 : i32, i32
  }
  func.func @transform_3(%arg0: i32, %arg1: i32, %arg2: i32) -> (i32, i32) {
    %c0_i32 = arith.constant 0 : i32
    return %arg1, %arg0 : i32, i32
  }
}

</mosaic_0001>

<llo_original>
// kernel: _lambda_.5
$region0: #{_lambda_.5}
  #allocation0 [shape = 'u32[]', space=smem, size = 0x4, offset = 0x4, fixed_abs, tag = 'smem constant byte address 0x4 - core index']
  #allocation1 [shape = 'u32[144,128]{1,0:T(1,128)}', space=vmem, size = 0x12000, scoped, tag = 'internal scratch']
  #allocation2 [shape = 'f32[64,128]{1,0:T(8,128)}', space=vmem, size = 0x8000, scoped, tag = 'scratch operand']
  %s0 = inlined_call_operand.vmem [shape: bf16[64,128], index: 0, kind: input, shape index: {}]
  %s1 = inlined_call_operand.vmem [shape: bf16[128,128], index: 1, kind: input, shape index: {}]
  %s2 = inlined_call_operand.vmem [shape: f32[1,128], index: 2, kind: input, shape index: {}]
  %s3 = inlined_call_operand.vmem [shape: f32[64,128], index: 3, kind: output, shape index: {}]
  %s4 = sld [smem:[#allocation0]]
  $region30: #{_lambda_.5} parent=0
    _
  %s6 = ssub.s32 1, %s4
  %s7 = scalar_select 0, %s6, %s4
  // Predicated region
  $region2: #{_lambda_.5} parent=0 // pred_check
    _
  $region3: #{_lambda_.5} parent=0 // pred_check_branch
    %9 = sbr.rel (0) target = $region5
  $region4: #{_lambda_.5} parent=0 // pred_region
    _
  $region5: #{_lambda_.5} parent=0 // pred_fallthru
    _
  // Predicated region
  $region6: #{_lambda_.5} parent=0 // pred_check
    _
  $region7: #{_lambda_.5} parent=0 // pred_check_branch
    %11 = sbr.rel (0) target = $region9
  $region8: #{_lambda_.5} parent=0 // pred_region
    _
  $region9: #{_lambda_.5} parent=0 // pred_fallthru
    _
  // Predicated region
  $region10: #{_lambda_.5} parent=0 // pred_check
    _
  $region11: #{_lambda_.5} parent=0 // pred_check_branch
    %13 = sbr.rel (0) target = $region13
  $region12: #{_lambda_.5} parent=0 // pred_region
    _
  $region13: #{_lambda_.5} parent=0 // pred_fallthru
    _
  %p15 = scmp.eq.s32.totalorder 0, 0
  // Predicated region
  $region14: #{_lambda_.5} parent=0 // pred_check
    %p16 = pneg %p15
  $region15: #{_lambda_.5} parent=0 // pred_check_branch
    %18 = sbr.rel (%p16) target = $region17
  $region16: #{_lambda_.5} parent=0 // pred_region
    %19 = vst [vmem:[#allocation2] sm:$0xff] 0.0
    %20 = vst [vmem:[#allocation2 + $0x8] sm:$0xff] 0.0
    %21 = vst [vmem:[#allocation2 + $0x10] sm:$0xff] 0.0
    %22 = vst [vmem:[#allocation2 + $0x18] sm:$0xff] 0.0
    %23 = vst [vmem:[#allocation2 + $0x20] sm:$0xff] 0.0
    %24 = vst [vmem:[#allocation2 + $0x28] sm:$0xff] 0.0
    %25 = vst [vmem:[#allocation2 + $0x30] sm:$0xff] 0.0
    %26 = vst [vmem:[#allocation2 + $0x38] sm:$0xff] 0.0
  $region17: #{_lambda_.5} parent=0 // pred_fallthru
    _
  %v27 = vld [vmem:[#allocation2] sm:$0xff]
  %v28 = vld [vmem:[#allocation2 + $0x8] sm:$0xff]
  %v29 = vld [vmem:[#allocation2 + $0x10] sm:$0xff]
  %v30 = vld [vmem:[#allocation2 + $0x18] sm:$0xff]
  %v31 = vld [vmem:[#allocation2 + $0x20] sm:$0xff]
  %v32 = vld [vmem:[#allocation2 + $0x28] sm:$0xff]
  %v33 = vld [vmem:[#allocation2 + $0x30] sm:$0xff]
  %v34 = vld [vmem:[#allocation2 + $0x38] sm:$0xff]
  %v35 = vld [vmem:[%s0] sm:$0xf]
  %v36 = vld [vmem:[%s0 + $0x4] sm:$0xf]
  %v37 = vld [vmem:[%s0 + $0x8] sm:$0xf]
  %v38 = vld [vmem:[%s0 + $0xc] sm:$0xf]
  %v39 = vld [vmem:[%s0 + $0x10] sm:$0xf]
  %v40 = vld [vmem:[%s0 + $0x14] sm:$0xf]
  %v41 = vld [vmem:[%s0 + $0x18] sm:$0xf]
  %v42 = vld [vmem:[%s0 + $0x1c] sm:$0xf]
  %v43 = vld [vmem:[%s1] sm:$0xf]
  %v44 = vld [vmem:[%s1 + $0x4] sm:$0xf]
  %v45 = vld [vmem:[%s1 + $0x8] sm:$0xf]
  %v46 = vld [vmem:[%s1 + $0xc] sm:$0xf]
  %v47 = vld [vmem:[%s1 + $0x10] sm:$0xf]
  %v48 = vld [vmem:[%s1 + $0x14] sm:$0xf]
  %v49 = vld [vmem:[%s1 + $0x18] sm:$0xf]
  %v50 = vld [vmem:[%s1 + $0x1c] sm:$0xf]
  %v51 = vld [vmem:[%s1 + $0x20] sm:$0xf]
  %v52 = vld [vmem:[%s1 + $0x24] sm:$0xf]
  %v53 = vld [vmem:[%s1 + $0x28] sm:$0xf]
  %v54 = vld [vmem:[%s1 + $0x2c] sm:$0xf]
  %v55 = vld [vmem:[%s1 + $0x30] sm:$0xf]
  %v56 = vld [vmem:[%s1 + $0x34] sm:$0xf]
  %v57 = vld [vmem:[%s1 + $0x38] sm:$0xf]
  %v58 = vld [vmem:[%s1 + $0x3c] sm:$0xf]
  %v67 = vunpack.c.l.b16 %v35
  %v68 = vunpack.c.l.b16 %v36
  %v69 = vunpack.c.l.b16 %v37
  %v70 = vunpack.c.l.b16 %v38
  %v71 = vunpack.c.l.b16 %v39
  %v72 = vunpack.c.l.b16 %v40
  %v73 = vunpack.c.l.b16 %v41
  %v74 = vunpack.c.l.b16 %v42
  %v75 = vpack.c.b16 %v68, %v67
  %v76 = vpack.c.b16 %v70, %v69
  %v77 = vpack.c.b16 %v72, %v71
  %v78 = vpack.c.b16 %v74, %v73
  %v99 = vunpack.c.l.b16 %v43
  %v100 = vunpack.c.l.b16 %v44
  %v101 = vunpack.c.l.b16 %v45
  %v102 = vunpack.c.l.b16 %v46
  %v103 = vunpack.c.l.b16 %v47
  %v104 = vunpack.c.l.b16 %v48
  %v105 = vunpack.c.l.b16 %v49
  %v106 = vunpack.c.l.b16 %v50
  %v107 = vunpack.c.l.b16 %v51
  %v108 = vunpack.c.l.b16 %v52
  %v109 = vunpack.c.l.b16 %v53
  %v110 = vunpack.c.l.b16 %v54
  %v111 = vunpack.c.l.b16 %v55
  %v112 = vunpack.c.l.b16 %v56
  %v113 = vunpack.c.l.b16 %v57
  %v114 = vunpack.c.l.b16 %v58
  %v115 = vpack.c.b16 %v100, %v99
  %v116 = vpack.c.b16 %v102, %v101
  %v117 = vpack.c.b16 %v104, %v103
  %v118 = vpack.c.b16 %v106, %v105
  %v119 = vpack.c.b16 %v108, %v107
  %v120 = vpack.c.b16 %v110, %v109
  %v121 = vpack.c.b16 %v112, %v111
  %v122 = vpack.c.b16 %v114, %v113
  %131 = vmatprep.subr.bf16.mxu0 0
  %132 = vmatpush1.bf16.msra.mxu0 %v115
  %133 = vmatprep.subr.bf16.mxu0 0
  %134 = vmatpush1.bf16.msra.mxu0 %v116
  %135 = vmatprep.subr.bf16.mxu0 0
  %136 = vmatpush1.bf16.msra.mxu0 %v117
  %137 = vmatprep.subr.bf16.mxu0 0
  %138 = vmatpush1.bf16.msra.mxu0 %v118
  %139 = vmatprep.subr.bf16.mxu0 0
  %140 = vmatpush1.bf16.msra.mxu0 %v119
  %141 = vmatprep.subr.bf16.mxu0 0
  %142 = vmatpush1.bf16.msra.mxu0 %v120
  %143 = vmatprep.subr.bf16.mxu0 0
  %144 = vmatpush1.bf16.msra.mxu0 %v121
  %145 = vmatprep.subr.bf16.mxu0 0
  %146 = vmatpush1.bf16.msra.mxu0 %v122
  %147 = vmatprep.subr.bf16.mxu0 0
  %148 = vmatpush1.bf16.msra.mxu0 0
  %149 = vmatprep.subr.bf16.mxu0 0
  %150 = vmatpush1.bf16.msra.mxu0 0
  %151 = vmatprep.subr.bf16.mxu0 0
  %152 = vmatpush1.bf16.msra.mxu0 0
  %153 = vmatprep.subr.bf16.mxu0 0
  %154 = vmatpush1.bf16.msra.mxu0 0
  %155 = vmatprep.subr.bf16.mxu0 0
  %156 = vmatpush1.bf16.msra.mxu0 0
  %157 = vmatprep.subr.bf16.mxu0 0
  %158 = vmatpush1.bf16.msra.mxu0 0
  %159 = vmatprep.subr.bf16.mxu0 0
  %160 = vmatpush1.bf16.msra.mxu0 0
  %161 = vmatprep.subr.bf16.mxu0 0
  %162 = vmatpush1.bf16.msra.mxu0 0
  %163 = vmatprep.mubr.bf16.mxu0 0
  %164 = vmatmul.mubr.bf16.gmra.mrb[0].mxu0 %v75
  %v165 = vpop.f32.mrb[0].mxu0
  %v166 = vadd.f32 0.0, %v165
  %v167 = vpop.f32.mrb[0].mxu0
  %v168 = vpop.f32.mrb[0].mxu0
  %v169 = vadd.f32 0.0, %v168
  %v170 = vpop.f32.mrb[0].mxu0
  %171 = vmatprep.mubr.bf16.mxu0 0
  %172 = vmatmul.mubr.bf16.gmra.mrb[0].mxu0 %v76
  %v173 = vpop.f32.mrb[0].mxu0
  %v174 = vadd.f32 0.0, %v173
  %v175 = vpop.f32.mrb[0].mxu0
  %v176 = vpop.f32.mrb[0].mxu0
  %v177 = vadd.f32 0.0, %v176
  %v178 = vpop.f32.mrb[0].mxu0
  %179 = vmatprep.mubr.bf16.mxu0 0
  %180 = vmatmul.mubr.bf16.gmra.mrb[0].mxu0 %v77
  %v181 = vpop.f32.mrb[0].mxu0
  %v182 = vadd.f32 0.0, %v181
  %v183 = vpop.f32.mrb[0].mxu0
  %v184 = vpop.f32.mrb[0].mxu0
  %v185 = vadd.f32 0.0, %v184
  %v186 = vpop.f32.mrb[0].mxu0
  %187 = vmatprep.mubr.bf16.mxu0 0
  %188 = vmatmul.mubr.bf16.gmra.mrb[0].mxu0 %v78
  %v189 = vpop.f32.mrb[0].mxu0
  %v190 = vadd.f32 0.0, %v189
  %v191 = vpop.f32.mrb[0].mxu0
  %v192 = vpop.f32.mrb[0].mxu0
  %v193 = vadd.f32 0.0, %v192
  %v194 = vpop.f32.mrb[0].mxu0
  %195 = vdwg.mxu0
  %v196 = vadd.f32 %v27, %v166
  %v197 = vadd.f32 %v28, %v169
  %v198 = vadd.f32 %v29, %v174
  %v199 = vadd.f32 %v30, %v177
  %v200 = vadd.f32 %v31, %v182
  %v201 = vadd.f32 %v32, %v185
  %v202 = vadd.f32 %v33, %v190
  %v203 = vadd.f32 %v34, %v193
  %204 = vst [vmem:[#allocation2] sm:$0xff] %v196
  %205 = vst [vmem:[#allocation2 + $0x8] sm:$0xff] %v197
  %206 = vst [vmem:[#allocation2 + $0x10] sm:$0xff] %v198
  %207 = vst [vmem:[#allocation2 + $0x18] sm:$0xff] %v199
  %208 = vst [vmem:[#allocation2 + $0x20] sm:$0xff] %v200
  %209 = vst [vmem:[#allocation2 + $0x28] sm:$0xff] %v201
  %210 = vst [vmem:[#allocation2 + $0x30] sm:$0xff] %v202
  %211 = vst [vmem:[#allocation2 + $0x38] sm:$0xff] %v203
  // Predicated region
  $region18: #{_lambda_.5} parent=0 // pred_check
    %p212 = pneg %p15
  $region19: #{_lambda_.5} parent=0 // pred_check_branch
    %214 = sbr.rel (%p212) target = $region21
  $region20: #{_lambda_.5} parent=0 // pred_region
    %v215 = vld [vmem:[#allocation2] sm:$0xff]
    %v216 = vld [vmem:[#allocation2 + $0x8] sm:$0xff]
    %v217 = vld [vmem:[#allocation2 + $0x10] sm:$0xff]
    %v218 = vld [vmem:[#allocation2 + $0x18] sm:$0xff]
    %v219 = vld [vmem:[#allocation2 + $0x20] sm:$0xff]
    %v220 = vld [vmem:[#allocation2 + $0x28] sm:$0xff]
    %v221 = vld [vmem:[#allocation2 + $0x30] sm:$0xff]
    %v222 = vld [vmem:[#allocation2 + $0x38] sm:$0xff]
    %v223 = vld [vmem:[%s2] sm:$0x1]
    %v225 = vlaneseq
    %v226 = vshrl.u32 %v225, 7
    %v227 = vsub.s32 0, %v226
    %v228 = vrot.slane %v223, %v227
    %v230 = vadd.f32 %v215, %v228
    %v231 = vadd.f32 %v216, %v228
    %v232 = vadd.f32 %v217, %v228
    %v233 = vadd.f32 %v218, %v228
    %v234 = vadd.f32 %v219, %v228
    %v235 = vadd.f32 %v220, %v228
    %v236 = vadd.f32 %v221, %v228
    %v237 = vadd.f32 %v222, %v228
    %238 = vst [vmem:[%s3] sm:$0xff] %v230
    %239 = vst [vmem:[%s3 + $0x8] sm:$0xff] %v231
    %240 = vst [vmem:[%s3 + $0x10] sm:$0xff] %v232
    %241 = vst [vmem:[%s3 + $0x18] sm:$0xff] %v233
    %242 = vst [vmem:[%s3 + $0x20] sm:$0xff] %v234
    %243 = vst [vmem:[%s3 + $0x28] sm:$0xff] %v235
    %244 = vst [vmem:[%s3 + $0x30] sm:$0xff] %v236
    %245 = vst [vmem:[%s3 + $0x38] sm:$0xff] %v237
  $region21: #{_lambda_.5} parent=0 // pred_fallthru
    _
  // Predicated region
  $region22: #{_lambda_.5} parent=0 // pred_check
    _
  $region23: #{_lambda_.5} parent=0 // pred_check_branch
    %247 = sbr.rel (0) target = $region25
  $region24: #{_lambda_.5} parent=0 // pred_region
    _
  $region25: #{_lambda_.5} parent=0 // pred_fallthru
    _
  // Predicated region
  $region26: #{_lambda_.5} parent=0 // pred_check
    _
  $region27: #{_lambda_.5} parent=0 // pred_check_branch
    %249 = sbr.rel (0) target = $region29
  $region28: #{_lambda_.5} parent=0 // pred_region
    _
  $region29: #{_lambda_.5} parent=0 // pred_fallthru
    _

// kernel: _lambda_.3
$region0: #{_lambda_.3}
  #allocation0 [shape = 'u32[]', space=smem, size = 0x4, offset = 0x4, fixed_abs, tag = 'smem constant byte address 0x4 - core index']
  #allocation1 [shape = 'u32[144,128]{1,0:T(1,128)}', space=vmem, size = 0x12000, scoped, tag = 'internal scratch']
  #allocation2 [shape = 'f32[64,384]{1,0:T(8,128)}', space=vmem, size = 0x18000, scoped, tag = 'scratch operand']
  %s0 = inlined_call_operand.vmem [shape: bf16[64,128], index: 0, kind: input, shape index: {}]
  %s1 = inlined_call_operand.vmem [shape: bf16[128,384], index: 1, kind: input, shape index: {}]
  %s2 = inlined_call_operand.vmem [shape: f32[1,384], index: 2, kind: input, shape index: {}]
  %s3 = inlined_call_operand.vmem [shape: bf16[64,384], index: 3, kind: output, shape index: {}]
  %s4 = sld [smem:[#allocation0]]
  $region30: #{_lambda_.3} parent=0
    _
  %s6 = ssub.s32 1, %s4
  %s7 = scalar_select 0, %s6, %s4
  // Predicated region
  $region2: #{_lambda_.3} parent=0 // pred_check
    _
  $region3: #{_lambda_.3} parent=0 // pred_check_branch
    %9 = sbr.rel (0) target = $region5
  $region4: #{_lambda_.3} parent=0 // pred_region
    _
  $region5: #{_lambda_.3} parent=0 // pred_fallthru
    _
  // Predicated region
  $region6: #{_lambda_.3} parent=0 // pred_check
    _
  $region7: #{_lambda_.3} parent=0 // pred_check_branch
    %11 = sbr.rel (0) target = $region9
  $region8: #{_lambda_.3} parent=0 // pred_region
    _
  $region9: #{_lambda_.3} parent=0 // pred_fallthru
    _
  // Predicated region
  $region10: #{_lambda_.3} parent=0 // pred_check
    _
  $region11: #{_lambda_.3} parent=0 // pred_check_branch
    %13 = sbr.rel (0) target = $region13
  $region12: #{_lambda_.3} parent=0 // pred_region
    _
  $region13: #{_lambda_.3} parent=0 // pred_fallthru
    _
  %p15 = scmp.eq.s32.totalorder 0, 0
  // Predicated region
  $region14: #{_lambda_.3} parent=0 // pred_check
    %p16 = pneg %p15
  $region15: #{_lambda_.3} parent=0 // pred_check_branch
    %18 = sbr.rel (%p16) target = $region17
  $region16: #{_lambda_.3} parent=0 // pred_region
    %19 = vst [vmem:[#allocation2] sm:$0xff] 0.0
    %20 = vst [vmem:[#allocation2 + $0x8] sm:$0xff] 0.0
    %21 = vst [vmem:[#allocation2 + $0x10] sm:$0xff] 0.0
    %22 = vst [vmem:[#allocation2 + $0x18] sm:$0xff] 0.0
    %23 = vst [vmem:[#allocation2 + $0x20] sm:$0xff] 0.0
    %24 = vst [vmem:[#allocation2 + $0x28] sm:$0xff] 0.0
    %25 = vst [vmem:[#allocation2 + $0x30] sm:$0xff] 0.0
    %26 = vst [vmem:[#allocation2 + $0x38] sm:$0xff] 0.0
    %27 = vst [vmem:[#allocation2 + $0x40] sm:$0xff] 0.0
    %28 = vst [vmem:[#allocation2 + $0x48] sm:$0xff] 0.0
    %29 = vst [vmem:[#allocation2 + $0x50] sm:$0xff] 0.0
    %30 = vst [vmem:[#allocation2 + $0x58] sm:$0xff] 0.0
    %31 = vst [vmem:[#allocation2 + $0x60] sm:$0xff] 0.0
    %32 = vst [vmem:[#allocation2 + $0x68] sm:$0xff] 0.0
    %33 = vst [vmem:[#allocation2 + $0x70] sm:$0xff] 0.0
    %34 = vst [vmem:[#allocation2 + $0x78] sm:$0xff] 0.0
    %35 = vst [vmem:[#allocation2 + $0x80] sm:$0xff] 0.0
    %36 = vst [vmem:[#allocation2 + $0x88] sm:$0xff] 0.0
    %37 = vst [vmem:[#allocation2 + $0x90] sm:$0xff] 0.0
    %38 = vst [vmem:[#allocation2 + $0x98] sm:$0xff] 0.0
    %39 = vst [vmem:[#allocation2 + $0xa0] sm:$0xff] 0.0
    %40 = vst [vmem:[#allocation2 + $0xa8] sm:$0xff] 0.0
    %41 = vst [vmem:[#allocation2 + $0xb0] sm:$0xff] 0.0
    %42 = vst [vmem:[#allocation2 + $0xb8] sm:$0xff] 0.0
  $region17: #{_lambda_.3} parent=0 // pred_fallthru
    _
  %v43 = vld [vmem:[#allocation2] sm:$0xff]
  %v44 = vld [vmem:[#allocation2 + $0x8] sm:$0xff]
  %v45 = vld [vmem:[#allocation2 + $0x10] sm:$0xff]
  %v46 = vld [vmem:[#allocation2 + $0x18] sm:$0xff]
  %v47 = vld [vmem:[#allocation2 + $0x20] sm:$0xff]
  %v48 = vld [vmem:[#allocation2 + $0x28] sm:$0xff]
  %v49 = vld [vmem:[#allocation2 + $0x30] sm:$0xff]
  %v50 = vld [vmem:[#allocation2 + $0x38] sm:$0xff]
  %v51 = vld [vmem:[#allocation2 + $0x40] sm:$0xff]
  %v52 = vld [vmem:[#allocation2 + $0x48] sm:$0xff]
  %v53 = vld [vmem:[#allocation2 + $0x50] sm:$0xff]
  %v54 = vld [vmem:[#allocation2 + $0x58] sm:$0xff]
  %v55 = vld [vmem:[#allocation2 + $0x60] sm:$0xff]
  %v56 = vld [vmem:[#allocation2 + $0x68] sm:$0xff]
  %v57 = vld [vmem:[#allocation2 + $0x70] sm:$0xff]
  %v58 = vld [vmem:[#allocation2 + $0x78] sm:$0xff]
  %v59 = vld [vmem:[#allocation2 + $0x80] sm:$0xff]
  %v60 = vld [vmem:[#allocation2 + $0x88] sm:$0xff]
  %v61 = vld [vmem:[#allocation2 + $0x90] sm:$0xff]
  %v62 = vld [vmem:[#allocation2 + $0x98] sm:$0xff]
  %v63 = vld [vmem:[#allocation2 + $0xa0] sm:$0xff]
  %v64 = vld [vmem:[#allocation2 + $0xa8] sm:$0xff]
  %v65 = vld [vmem:[#allocation2 + $0xb0] sm:$0xff]
  %v66 = vld [vmem:[#allocation2 + $0xb8] sm:$0xff]
  %v67 = vld [vmem:[%s0] sm:$0xf]
  %v68 = vld [vmem:[%s0 + $0x4] sm:$0xf]
  %v69 = vld [vmem:[%s0 + $0x8] sm:$0xf]
  %v70 = vld [vmem:[%s0 + $0xc] sm:$0xf]
  %v71 = vld [vmem:[%s0 + $0x10] sm:$0xf]
  %v72 = vld [vmem:[%s0 + $0x14] sm:$0xf]
  %v73 = vld [vmem:[%s0 + $0x18] sm:$0xf]
  %v74 = vld [vmem:[%s0 + $0x1c] sm:$0xf]
  %v75 = vld [vmem:[%s1] sm:$0xff]
  %v76 = vld [vmem:[%s1 + $0x8] sm:$0xf]
  %v77 = vld [vmem:[%s1 + $0xc] sm:$0xff]
  %v78 = vld [vmem:[%s1 + $0x14] sm:$0xf]
  %v79 = vld [vmem:[%s1 + $0x18] sm:$0xff]
  %v80 = vld [vmem:[%s1 + $0x20] sm:$0xf]
  %v81 = vld [vmem:[%s1 + $0x24] sm:$0xff]
  %v82 = vld [vmem:[%s1 + $0x2c] sm:$0xf]
  %v83 = vld [vmem:[%s1 + $0x30] sm:$0xff]
  %v84 = vld [vmem:[%s1 + $0x38] sm:$0xf]
  %v85 = vld [vmem:[%s1 + $0x3c] sm:$0xff]
  %v86 = vld [vmem:[%s1 + $0x44] sm:$0xf]
  %v87 = vld [vmem:[%s1 + $0x48] sm:$0xff]
  %v88 = vld [vmem:[%s1 + $0x50] sm:$0xf]
  %v89 = vld [vmem:[%s1 + $0x54] sm:$0xff]
  %v90 = vld [vmem:[%s1 + $0x5c] sm:$0xf]
  %v91 = vld [vmem:[%s1 + $0x60] sm:$0xff]
  %v92 = vld [vmem:[%s1 + $0x68] sm:$0xf]
  %v93 = vld [vmem:[%s1 + $0x6c] sm:$0xff]
  %v94 = vld [vmem:[%s1 + $0x74] sm:$0xf]
  %v95 = vld [vmem:[%s1 + $0x78] sm:$0xff]
  %v96 = vld [vmem:[%s1 + $0x80] sm:$0xf]
  %v97 = vld [vmem:[%s1 + $0x84] sm:$0xff]
  %v98 = vld [vmem:[%s1 + $0x8c] sm:$0xf]
  %v99 = vld [vmem:[%s1 + $0x90] sm:$0xff]
  %v100 = vld [vmem:[%s1 + $0x98] sm:$0xf]
  %v101 = vld [vmem:[%s1 + $0x9c] sm:$0xff]
  %v102 = vld [vmem:[%s1 + $0xa4] sm:$0xf]
  %v103 = vld [vmem:[%s1 + $0xa8] sm:$0xff]
  %v104 = vld [vmem:[%s1 + $0xb0] sm:$0xf]
  %v105 = vld [vmem:[%s1 + $0xb4] sm:$0xff]
  %v106 = vld [vmem:[%s1 + $0xbc] sm:$0xf]
  %v115 = vunpack.c.l.b16 %v67
  %v116 = vunpack.c.l.b16 %v68
  %v117 = vunpack.c.l.b16 %v69
  %v118 = vunpack.c.l.b16 %v70
  %v119 = vunpack.c.l.b16 %v71
  %v120 = vunpack.c.l.b16 %v72
  %v121 = vunpack.c.l.b16 %v73
  %v122 = vunpack.c.l.b16 %v74
  %v123 = vpack.c.b16 %v116, %v115
  %v124 = vpack.c.b16 %v118, %v117
  %v125 = vpack.c.b16 %v120, %v119
  %v126 = vpack.c.b16 %v122, %v121
  %v163 = vunpack.c.l.b16 %v75
  %v164 = vunpack.c.h.b16 %v75
  %v165 = vunpack.c.l.b16 %v76
  %v166 = vunpack.c.l.b16 %v77
  %v167 = vunpack.c.h.b16 %v77
  %v168 = vunpack.c.l.b16 %v78
  %v169 = vunpack.c.l.b16 %v79
  %v170 = vunpack.c.h.b16 %v79
  %v171 = vunpack.c.l.b16 %v80
  %v172 = vunpack.c.l.b16 %v81
  %v173 = vunpack.c.h.b16 %v81
  %v174 = vunpack.c.l.b16 %v82
  %v175 = vunpack.c.l.b16 %v83
  %v176 = vunpack.c.h.b16 %v83
  %v177 = vunpack.c.l.b16 %v84
  %v178 = vunpack.c.l.b16 %v85
  %v179 = vunpack.c.h.b16 %v85
  %v180 = vunpack.c.l.b16 %v86
  %v181 = vunpack.c.l.b16 %v87
  %v182 = vunpack.c.h.b16 %v87
  %v183 = vunpack.c.l.b16 %v88
  %v184 = vunpack.c.l.b16 %v89
  %v185 = vunpack.c.h.b16 %v89
  %v186 = vunpack.c.l.b16 %v90
  %v187 = vunpack.c.l.b16 %v91
  %v188 = vunpack.c.h.b16 %v91
  %v189 = vunpack.c.l.b16 %v92
  %v190 = vunpack.c.l.b16 %v93
  %v191 = vunpack.c.h.b16 %v93
  %v192 = vunpack.c.l.b16 %v94
  %v193 = vunpack.c.l.b16 %v95
  %v194 = vunpack.c.h.b16 %v95
  %v195 = vunpack.c.l.b16 %v96
  %v196 = vunpack.c.l.b16 %v97
  %v197 = vunpack.c.h.b16 %v97
  %v198 = vunpack.c.l.b16 %v98
  %v199 = vunpack.c.l.b16 %v99
  %v200 = vunpack.c.h.b16 %v99
  %v201 = vunpack.c.l.b16 %v100
  %v202 = vunpack.c.l.b16 %v101
  %v203 = vunpack.c.h.b16 %v101
  %v204 = vunpack.c.l.b16 %v102
  %v205 = vunpack.c.l.b16 %v103
  %v206 = vunpack.c.h.b16 %v103
  %v207 = vunpack.c.l.b16 %v104
  %v208 = vunpack.c.l.b16 %v105
  %v209 = vunpack.c.h.b16 %v105
  %v210 = vunpack.c.l.b16 %v106
  %v211 = vpack.c.b16 %v166, %v163
  %v212 = vpack.c.b16 %v167, %v164
  %v213 = vpack.c.b16 %v168, %v165
  %v214 = vpack.c.b16 %v172, %v169
  %v215 = vpack.c.b16 %v173, %v170
  %v216 = vpack.c.b16 %v174, %v171
  %v217 = vpack.c.b16 %v178, %v175
  %v218 = vpack.c.b16 %v179, %v176
  %v219 = vpack.c.b16 %v180, %v177
  %v220 = vpack.c.b16 %v184, %v181
  %v221 = vpack.c.b16 %v185, %v182
  %v222 = vpack.c.b16 %v186, %v183
  %v223 = vpack.c.b16 %v190, %v187
  %v224 = vpack.c.b16 %v191, %v188
  %v225 = vpack.c.b16 %v192, %v189
  %v226 = vpack.c.b16 %v196, %v193
  %v227 = vpack.c.b16 %v197, %v194
  %v228 = vpack.c.b16 %v198, %v195
  %v229 = vpack.c.b16 %v202, %v199
  %v230 = vpack.c.b16 %v203, %v200
  %v231 = vpack.c.b16 %v204, %v201
  %v232 = vpack.c.b16 %v208, %v205
  %v233 = vpack.c.b16 %v209, %v206
  %v234 = vpack.c.b16 %v210, %v207
  %259 = vmatprep.subr.bf16.mxu0 %v212
  %260 = vmatpush1.bf16.msra.mxu0 %v211
  %261 = vmatprep.subr.bf16.mxu0 %v215
  %262 = vmatpush1.bf16.msra.mxu0 %v214
  %263 = vmatprep.subr.bf16.mxu0 %v218
  %264 = vmatpush1.bf16.msra.mxu0 %v217
  %265 = vmatprep.subr.bf16.mxu0 %v221
  %266 = vmatpush1.bf16.msra.mxu0 %v220
  %267 = vmatprep.subr.bf16.mxu0 %v224
  %268 = vmatpush1.bf16.msra.mxu0 %v223
  %269 = vmatprep.subr.bf16.mxu0 %v227
  %270 = vmatpush1.bf16.msra.mxu0 %v226
  %271 = vmatprep.subr.bf16.mxu0 %v230
  %272 = vmatpush1.bf16.msra.mxu0 %v229
  %273 = vmatprep.subr.bf16.mxu0 %v233
  %274 = vmatpush1.bf16.msra.mxu0 %v232
  %275 = vmatprep.subr.bf16.mxu0 0
  %276 = vmatpush1.bf16.msra.mxu0 0
  %277 = vmatprep.subr.bf16.mxu0 0
  %278 = vmatpush1.bf16.msra.mxu0 0
  %279 = vmatprep.subr.bf16.mxu0 0
  %280 = vmatpush1.bf16.msra.mxu0 0
  %281 = vmatprep.subr.bf16.mxu0 0
  %282 = vmatpush1.bf16.msra.mxu0 0
  %283 = vmatprep.subr.bf16.mxu0 0
  %284 = vmatpush1.bf16.msra.mxu0 0
  %285 = vmatprep.subr.bf16.mxu0 0
  %286 = vmatpush1.bf16.msra.mxu0 0
  %287 = vmatprep.subr.bf16.mxu0 0
  %288 = vmatpush1.bf16.msra.mxu0 0
  %289 = vmatprep.subr.bf16.mxu0 0
  %290 = vmatpush1.bf16.msra.mxu0 0
  %291 = vmatprep.mubr.bf16.mxu0 0
  %292 = vmatmul.mubr.bf16.gmra.mrb[0].mxu0 %v123
  %v293 = vpop.f32.mrb[0].mxu0
  %v294 = vadd.f32 0.0, %v293
  %v295 = vpop.f32.mrb[0].mxu0
  %v296 = vadd.f32 0.0, %v295
  %v297 = vpop.f32.mrb[0].mxu0
  %v298 = vadd.f32 0.0, %v297
  %v299 = vpop.f32.mrb[0].mxu0
  %v300 = vadd.f32 0.0, %v299
  %301 = vmatprep.mubr.bf16.mxu0 0
  %302 = vmatmul.mubr.bf16.gmra.mrb[0].mxu0 %v124
  %v303 = vpop.f32.mrb[0].mxu0
  %v304 = vadd.f32 0.0, %v303
  %v305 = vpop.f32.mrb[0].mxu0
  %v306 = vadd.f32 0.0, %v305
  %v307 = vpop.f32.mrb[0].mxu0
  %v308 = vadd.f32 0.0, %v307
  %v309 = vpop.f32.mrb[0].mxu0
  %v310 = vadd.f32 0.0, %v309
  %311 = vmatprep.mubr.bf16.mxu0 0
  %312 = vmatmul.mubr.bf16.gmra.mrb[0].mxu0 %v125
  %v313 = vpop.f32.mrb[0].mxu0
  %v314 = vadd.f32 0.0, %v313
  %v315 = vpop.f32.mrb[0].mxu0
  %v316 = vadd.f32 0.0, %v315
  %v317 = vpop.f32.mrb[0].mxu0
  %v318 = vadd.f32 0.0, %v317
  %v319 = vpop.f32.mrb[0].mxu0
  %v320 = vadd.f32 0.0, %v319
  %321 = vmatprep.mubr.bf16.mxu0 0
  %322 = vmatmul.mubr.bf16.gmra.mrb[0].mxu0 %v126
  %v323 = vpop.f32.mrb[0].mxu0
  %v324 = vadd.f32 0.0, %v323
  %v325 = vpop.f32.mrb[0].mxu0
  %v326 = vadd.f32 0.0, %v325
  %v327 = vpop.f32.mrb[0].mxu0
  %v328 = vadd.f32 0.0, %v327
  %v329 = vpop.f32.mrb[0].mxu0
  %v330 = vadd.f32 0.0, %v329
  %331 = vdwg.mxu0
  %332 = vmatprep.subr.bf16.mxu0 0
  %333 = vmatpush1.bf16.msra.mxu0 %v213
  %334 = vmatprep.subr.bf16.mxu0 0
  %335 = vmatpush1.bf16.msra.mxu0 %v216
  %336 = vmatprep.subr.bf16.mxu0 0
  %337 = vmatpush1.bf16.msra.mxu0 %v219
  %338 = vmatprep.subr.bf16.mxu0 0
  %339 = vmatpush1.bf16.msra.mxu0 %v222
  %340 = vmatprep.subr.bf16.mxu0 0
  %341 = vmatpush1.bf16.msra.mxu0 %v225
  %342 = vmatprep.subr.bf16.mxu0 0
  %343 = vmatpush1.bf16.msra.mxu0 %v228
  %344 = vmatprep.subr.bf16.mxu0 0
  %345 = vmatpush1.bf16.msra.mxu0 %v231
  %346 = vmatprep.subr.bf16.mxu0 0
  %347 = vmatpush1.bf16.msra.mxu0 %v234
  %348 = vmatprep.subr.bf16.mxu0 0
  %349 = vmatpush1.bf16.msra.mxu0 0
  %350 = vmatprep.subr.bf16.mxu0 0
  %351 = vmatpush1.bf16.msra.mxu0 0
  %352 = vmatprep.subr.bf16.mxu0 0
  %353 = vmatpush1.bf16.msra.mxu0 0
  %354 = vmatprep.subr.bf16.mxu0 0
  %355 = vmatpush1.bf16.msra.mxu0 0
  %356 = vmatprep.subr.bf16.mxu0 0
  %357 = vmatpush1.bf16.msra.mxu0 0
  %358 = vmatprep.subr.bf16.mxu0 0
  %359 = vmatpush1.bf16.msra.mxu0 0
  %360 = vmatprep.subr.bf16.mxu0 0
  %361 = vmatpush1.bf16.msra.mxu0 0
  %362 = vmatprep.subr.bf16.mxu0 0
  %363 = vmatpush1.bf16.msra.mxu0 0
  %364 = vmatprep.mubr.bf16.mxu0 0
  %365 = vmatmul.mubr.bf16.gmra.mrb[0].mxu0 %v123
  %v366 = vpop.f32.mrb[0].mxu0
  %v367 = vadd.f32 0.0, %v366
  %v368 = vpop.f32.mrb[0].mxu0
  %v369 = vpop.f32.mrb[0].mxu0
  %v370 = vadd.f32 0.0, %v369
  %v371 = vpop.f32.mrb[0].mxu0
  %372 = vmatprep.mubr.bf16.mxu0 0
  %373 = vmatmul.mubr.bf16.gmra.mrb[0].mxu0 %v124
  %v374 = vpop.f32.mrb[0].mxu0
  %v375 = vadd.f32 0.0, %v374
  %v376 = vpop.f32.mrb[0].mxu0
  %v377 = vpop.f32.mrb[0].mxu0
  %v378 = vadd.f32 0.0, %v377
  %v379 = vpop.f32.mrb[0].mxu0
  %380 = vmatprep.mubr.bf16.mxu0 0
  %381 = vmatmul.mubr.bf16.gmra.mrb[0].mxu0 %v125
  %v382 = vpop.f32.mrb[0].mxu0
  %v383 = vadd.f32 0.0, %v382
  %v384 = vpop.f32.mrb[0].mxu0
  %v385 = vpop.f32.mrb[0].mxu0
  %v386 = vadd.f32 0.0, %v385
  %v387 = vpop.f32.mrb[0].mxu0
  %388 = vmatprep.mubr.bf16.mxu0 0
  %389 = vmatmul.mubr.bf16.gmra.mrb[0].mxu0 %v126
  %v390 = vpop.f32.mrb[0].mxu0
  %v391 = vadd.f32 0.0, %v390
  %v392 = vpop.f32.mrb[0].mxu0
  %v393 = vpop.f32.mrb[0].mxu0
  %v394 = vadd.f32 0.0, %v393
  %v395 = vpop.f32.mrb[0].mxu0
  %396 = vdwg.mxu0
  %v397 = vadd.f32 %v43, %v294
  %v398 = vadd.f32 %v44, %v296
  %v399 = vadd.f32 %v45, %v367
  %v400 = vadd.f32 %v46, %v298
  %v401 = vadd.f32 %v47, %v300
  %v402 = vadd.f32 %v48, %v370
  %v403 = vadd.f32 %v49, %v304
  %v404 = vadd.f32 %v50, %v306
  %v405 = vadd.f32 %v51, %v375
  %v406 = vadd.f32 %v52, %v308
  %v407 = vadd.f32 %v53, %v310
  %v408 = vadd.f32 %v54, %v378
  %v409 = vadd.f32 %v55, %v314
  %v410 = vadd.f32 %v56, %v316
  %v411 = vadd.f32 %v57, %v383
  %v412 = vadd.f32 %v58, %v318
  %v413 = vadd.f32 %v59, %v320
  %v414 = vadd.f32 %v60, %v386
  %v415 = vadd.f32 %v61, %v324
  %v416 = vadd.f32 %v62, %v326
  %v417 = vadd.f32 %v63, %v391
  %v418 = vadd.f32 %v64, %v328
  %v419 = vadd.f32 %v65, %v330
  %v420 = vadd.f32 %v66, %v394
  %421 = vst [vmem:[#allocation2] sm:$0xff] %v397
  %422 = vst [vmem:[#allocation2 + $0x8] sm:$0xff] %v398
  %423 = vst [vmem:[#allocation2 + $0x10] sm:$0xff] %v399
  %424 = vst [vmem:[#allocation2 + $0x18] sm:$0xff] %v400
  %425 = vst [vmem:[#allocation2 + $0x20] sm:$0xff] %v401
  %426 = vst [vmem:[#allocation2 + $0x28] sm:$0xff] %v402
  %427 = vst [vmem:[#allocation2 + $0x30] sm:$0xff] %v403
  %428 = vst [vmem:[#allocation2 + $0x38] sm:$0xff] %v404
  %429 = vst [vmem:[#allocation2 + $0x40] sm:$0xff] %v405
  %430 = vst [vmem:[#allocation2 + $0x48] sm:$0xff] %v406
  %431 = vst [vmem:[#allocation2 + $0x50] sm:$0xff] %v407
  %432 = vst [vmem:[#allocation2 + $0x58] sm:$0xff] %v408
  %433 = vst [vmem:[#allocation2 + $0x60] sm:$0xff] %v409
  %434 = vst [vmem:[#allocation2 + $0x68] sm:$0xff] %v410
  %435 = vst [vmem:[#allocation2 + $0x70] sm:$0xff] %v411
  %436 = vst [vmem:[#allocation2 + $0x78] sm:$0xff] %v412
  %437 = vst [vmem:[#allocation2 + $0x80] sm:$0xff] %v413
  %438 = vst [vmem:[#allocation2 + $0x88] sm:$0xff] %v414
  %439 = vst [vmem:[#allocation2 + $0x90] sm:$0xff] %v415
  %440 = vst [vmem:[#allocation2 + $0x98] sm:$0xff] %v416
  %441 = vst [vmem:[#allocation2 + $0xa0] sm:$0xff] %v417
  %442 = vst [vmem:[#allocation2 + $0xa8] sm:$0xff] %v418
  %443 = vst [vmem:[#allocation2 + $0xb0] sm:$0xff] %v419
  %444 = vst [vmem:[#allocation2 + $0xb8] sm:$0xff] %v420
  // Predicated region
  $region18: #{_lambda_.3} parent=0 // pred_check
    %p445 = pneg %p15
  $region19: #{_lambda_.3} parent=0 // pred_check_branch
    %447 = sbr.rel (%p445) target = $region21
  $region20: #{_lambda_.3} parent=0 // pred_region
    %v448 = vld [vmem:[#allocation2] sm:$0xff]
    %v449 = vld [vmem:[#allocation2 + $0x8] sm:$0xff]
    %v450 = vld [vmem:[#allocation2 + $0x10] sm:$0xff]
    %v451 = vld [vmem:[#allocation2 + $0x18] sm:$0xff]
    %v452 = vld [vmem:[#allocation2 + $0x20] sm:$0xff]
    %v453 = vld [vmem:[#allocation2 + $0x28] sm:$0xff]
    %v454 = vld [vmem:[#allocation2 + $0x30] sm:$0xff]
    %v455 = vld [vmem:[#allocation2 + $0x38] sm:$0xff]
    %v456 = vld [vmem:[#allocation2 + $0x40] sm:$0xff]
    %v457 = vld [vmem:[#allocation2 + $0x48] sm:$0xff]
    %v458 = vld [vmem:[#allocation2 + $0x50] sm:$0xff]
    %v459 = vld [vmem:[#allocation2 + $0x58] sm:$0xff]
    %v460 = vld [vmem:[#allocation2 + $0x60] sm:$0xff]
    %v461 = vld [vmem:[#allocation2 + $0x68] sm:$0xff]
    %v462 = vld [vmem:[#allocation2 + $0x70] sm:$0xff]
    %v463 = vld [vmem:[#allocation2 + $0x78] sm:$0xff]
    %v464 = vld [vmem:[#allocation2 + $0x80] sm:$0xff]
    %v465 = vld [vmem:[#allocation2 + $0x88] sm:$0xff]
    %v466 = vld [vmem:[#allocation2 + $0x90] sm:$0xff]
    %v467 = vld [vmem:[#allocation2 + $0x98] sm:$0xff]
    %v468 = vld [vmem:[#allocation2 + $0xa0] sm:$0xff]
    %v469 = vld [vmem:[#allocation2 + $0xa8] sm:$0xff]
    %v470 = vld [vmem:[#allocation2 + $0xb0] sm:$0xff]
    %v471 = vld [vmem:[#allocation2 + $0xb8] sm:$0xff]
    %v472 = vld [vmem:[%s2] sm:$0x7]
    %v474 = vlaneseq
    %v475 = vshrl.u32 %v474, 7
    %v476 = vsub.s32 0, %v475
    %v477 = vrot.slane %v472, %v476
    %v478 = vlaneseq
    %v479 = vshrl.u32 %v478, 7
    %v480 = vsub.s32 1, %v479
    %v481 = vrot.slane %v472, %v480
    %v482 = vlaneseq
    %v483 = vshrl.u32 %v482, 7
    %v484 = vsub.s32 2, %v483
    %v485 = vrot.slane %v472, %v484
    %v489 = vadd.f32 %v448, %v477
    %v490 = vadd.f32 %v449, %v481
    %v491 = vadd.f32 %v450, %v485
    %v492 = vadd.f32 %v451, %v477
    %v493 = vadd.f32 %v452, %v481
    %v494 = vadd.f32 %v453, %v485
    %v495 = vadd.f32 %v454, %v477
    %v496 = vadd.f32 %v455, %v481
    %v497 = vadd.f32 %v456, %v485
    %v498 = vadd.f32 %v457, %v477
    %v499 = vadd.f32 %v458, %v481
    %v500 = vadd.f32 %v459, %v485
    %v501 = vadd.f32 %v460, %v477
    %v502 = vadd.f32 %v461, %v481
    %v503 = vadd.f32 %v462, %v485
    %v504 = vadd.f32 %v463, %v477
    %v505 = vadd.f32 %v464, %v481
    %v506 = vadd.f32 %v465, %v485
    %v507 = vadd.f32 %v466, %v477
    %v508 = vadd.f32 %v467, %v481
    %v509 = vadd.f32 %v468, %v485
    %v510 = vadd.f32 %v469, %v477
    %v511 = vadd.f32 %v470, %v481
    %v512 = vadd.f32 %v471, %v485
    %v513 = vpack.c.bf16 %v492, %v489
    %v514 = vpack.c.bf16 %v493, %v490
    %v515 = vpack.c.bf16 %v494, %v491
    %v516 = vpack.c.bf16 %v498, %v495
    %v517 = vpack.c.bf16 %v499, %v496
    %v518 = vpack.c.bf16 %v500, %v497
    %v519 = vpack.c.bf16 %v504, %v501
    %v520 = vpack.c.bf16 %v505, %v502
    %v521 = vpack.c.bf16 %v506, %v503
    %v522 = vpack.c.bf16 %v510, %v507
    %v523 = vpack.c.bf16 %v511, %v508
    %v524 = vpack.c.bf16 %v512, %v509
    %v537 = vunpack.c.l.b16 %v513
    %v538 = vunpack.c.l.b16 %v514
    %v539 = vunpack.c.l.b16 %v515
    %v540 = vunpack.c.h.b16 %v513
    %v541 = vunpack.c.h.b16 %v514
    %v542 = vunpack.c.h.b16 %v515
    %v543 = vunpack.c.l.b16 %v516
    %v544 = vunpack.c.l.b16 %v517
    %v545 = vunpack.c.l.b16 %v518
    %v546 = vunpack.c.h.b16 %v516
    %v547 = vunpack.c.h.b16 %v517
    %v548 = vunpack.c.h.b16 %v518
    %v549 = vunpack.c.l.b16 %v519
    %v550 = vunpack.c.l.b16 %v520
    %v551 = vunpack.c.l.b16 %v521
    %v552 = vunpack.c.h.b16 %v519
    %v553 = vunpack.c.h.b16 %v520
    %v554 = vunpack.c.h.b16 %v521
    %v555 = vunpack.c.l.b16 %v522
    %v556 = vunpack.c.l.b16 %v523
    %v557 = vunpack.c.l.b16 %v524
    %v558 = vunpack.c.h.b16 %v522
    %v559 = vunpack.c.h.b16 %v523
    %v560 = vunpack.c.h.b16 %v524
    %v561 = vpack.c.b16 %v538, %v537
    %v562 = vpack.c.b16 %v539, %v539
    %v563 = vpack.c.b16 %v541, %v540
    %v564 = vpack.c.b16 %v542, %v542
    %v565 = vpack.c.b16 %v544, %v543
    %v566 = vpack.c.b16 %v545, %v545
    %v567 = vpack.c.b16 %v547, %v546
    %v568 = vpack.c.b16 %v548, %v548
    %v569 = vpack.c.b16 %v550, %v549
    %v570 = vpack.c.b16 %v551, %v551
    %v571 = vpack.c.b16 %v553, %v552
    %v572 = vpack.c.b16 %v554, %v554
    %v573 = vpack.c.b16 %v556, %v555
    %v574 = vpack.c.b16 %v557, %v557
    %v575 = vpack.c.b16 %v559, %v558
    %v576 = vpack.c.b16 %v560, %v560
    %593 = vst [vmem:[%s3] sm:$0xff] %v561
    %594 = vst [vmem:[%s3 + $0x8] sm:$0xf] %v562
    %595 = vst [vmem:[%s3 + $0xc] sm:$0xff] %v563
    %596 = vst [vmem:[%s3 + $0x14] sm:$0xf] %v564
    %597 = vst [vmem:[%s3 + $0x18] sm:$0xff] %v565
    %598 = vst [vmem:[%s3 + $0x20] sm:$0xf] %v566
    %599 = vst [vmem:[%s3 + $0x24] sm:$0xff] %v567
    %600 = vst [vmem:[%s3 + $0x2c] sm:$0xf] %v568
    %601 = vst [vmem:[%s3 + $0x30] sm:$0xff] %v569
    %602 = vst [vmem:[%s3 + $0x38] sm:$0xf] %v570
    %603 = vst [vmem:[%s3 + $0x3c] sm:$0xff] %v571
    %604 = vst [vmem:[%s3 + $0x44] sm:$0xf] %v572
    %605 = vst [vmem:[%s3 + $0x48] sm:$0xff] %v573
    %606 = vst [vmem:[%s3 + $0x50] sm:$0xf] %v574
    %607 = vst [vmem:[%s3 + $0x54] sm:$0xff] %v575
    %608 = vst [vmem:[%s3 + $0x5c] sm:$0xf] %v576
  $region21: #{_lambda_.3} parent=0 // pred_fallthru
    _
  // Predicated region
  $region22: #{_lambda_.3} parent=0 // pred_check
    _
  $region23: #{_lambda_.3} parent=0 // pred_check_branch
    %610 = sbr.rel (0) target = $region25
  $region24: #{_lambda_.3} parent=0 // pred_region
    _
  $region25: #{_lambda_.3} parent=0 // pred_fallthru
    _
  // Predicated region
  $region26: #{_lambda_.3} parent=0 // pred_check
    _
  $region27: #{_lambda_.3} parent=0 // pred_check_branch
    %612 = sbr.rel (0) target = $region29
  $region28: #{_lambda_.3} parent=0 // pred_region
    _
  $region29: #{_lambda_.3} parent=0 // pred_fallthru
    _

// kernel: _lambda_.4
$region0: #{_lambda_.4}
  #allocation0 [shape = 'u32[]', space=smem, size = 0x4, offset = 0x4, fixed_abs, tag = 'smem constant byte address 0x4 - core index']
  #allocation1 [shape = 'u32[144,128]{1,0:T(1,128)}', space=vmem, size = 0x12000, scoped, tag = 'internal scratch']
  #allocation2 [shape = 'f32[8,128]{1,0:T(8,128)}', space=vmem, size = 0x1000, scoped, tag = 'scratch operand']
  %s0 = inlined_call_operand.vmem [shape: bf16[8,8,384], index: 0, kind: input, shape index: {}]
  %s1 = inlined_call_operand.vmem [shape: f32[8,128], index: 1, kind: input, shape index: {}]
  %s2 = inlined_call_operand.vmem [shape: bf16[128,384], index: 2, kind: input, shape index: {}]
  %s3 = inlined_call_operand.vmem [shape: f32[1,384], index: 3, kind: input, shape index: {}]
  %s4 = inlined_call_operand.vmem [shape: f32[8,8,128], index: 4, kind: output, shape index: {}]
  %s5 = sld [smem:[#allocation0]]
  $region30: #{_lambda_.4} parent=0
    _
  %s7 = ssub.s32 1, %s5
  %s8 = scalar_select 0, %s7, %s5
  // Predicated region
  $region2: #{_lambda_.4} parent=0 // pred_check
    _
  $region3: #{_lambda_.4} parent=0 // pred_check_branch
    %10 = sbr.rel (0) target = $region5
  $region4: #{_lambda_.4} parent=0 // pred_region
    _
  $region5: #{_lambda_.4} parent=0 // pred_fallthru
    _
  // Predicated region
  $region6: #{_lambda_.4} parent=0 // pred_check
    _
  $region7: #{_lambda_.4} parent=0 // pred_check_branch
    %12 = sbr.rel (0) target = $region9
  $region8: #{_lambda_.4} parent=0 // pred_region
    _
  $region9: #{_lambda_.4} parent=0 // pred_fallthru
    _
  // Predicated region
  $region10: #{_lambda_.4} parent=0 // pred_check
    _
  $region11: #{_lambda_.4} parent=0 // pred_check_branch
    %14 = sbr.rel (0) target = $region13
  $region12: #{_lambda_.4} parent=0 // pred_region
    _
  $region13: #{_lambda_.4} parent=0 // pred_fallthru
    _
  // Predicated region
  $region14: #{_lambda_.4} parent=0 // pred_check
    _
  $region15: #{_lambda_.4} parent=0 // pred_check_branch
    %16 = sbr.rel (0) target = $region17
  $region16: #{_lambda_.4} parent=0 // pred_region
    _
  $region17: #{_lambda_.4} parent=0 // pred_fallthru
    _
  %p18 = scmp.eq.s32.totalorder 0, 0
  // Predicated region
  $region18: #{_lambda_.4} parent=0 // pred_check
    %p19 = pneg %p18
  $region19: #{_lambda_.4} parent=0 // pred_check_branch
    %21 = sbr.rel (%p19) target = $region21
  $region20: #{_lambda_.4} parent=0 // pred_region
    %v22 = vld [vmem:[%s1] sm:$0xff]
    %23 = vst [vmem:[#allocation2] sm:$0xff] %v22
  $region21: #{_lambda_.4} parent=0 // pred_fallthru
    _
  %v24 = vld [vmem:[#allocation2] sm:$0xff]
  %v25 = vld [vmem:[%s0] sm:$0xff]
  %v26 = vld [vmem:[%s0 + $0x8] sm:$0xf]
  %v27 = vpack.c.bf16 %v24, %v24
  %v28 = vld [vmem:[%s2] sm:$0xff]
  %v29 = vld [vmem:[%s2 + $0x8] sm:$0xf]
  %v30 = vld [vmem:[%s2 + $0xc] sm:$0xff]
  %v31 = vld [vmem:[%s2 + $0x14] sm:$0xf]
  %v32 = vld [vmem:[%s2 + $0x18] sm:$0xff]
  %v33 = vld [vmem:[%s2 + $0x20] sm:$0xf]
  %v34 = vld [vmem:[%s2 + $0x24] sm:$0xff]
  %v35 = vld [vmem:[%s2 + $0x2c] sm:$0xf]
  %v36 = vld [vmem:[%s2 + $0x30] sm:$0xff]
  %v37 = vld [vmem:[%s2 + $0x38] sm:$0xf]
  %v38 = vld [vmem:[%s2 + $0x3c] sm:$0xff]
  %v39 = vld [vmem:[%s2 + $0x44] sm:$0xf]
  %v40 = vld [vmem:[%s2 + $0x48] sm:$0xff]
  %v41 = vld [vmem:[%s2 + $0x50] sm:$0xf]
  %v42 = vld [vmem:[%s2 + $0x54] sm:$0xff]
  %v43 = vld [vmem:[%s2 + $0x5c] sm:$0xf]
  %v44 = vld [vmem:[%s2 + $0x60] sm:$0xff]
  %v45 = vld [vmem:[%s2 + $0x68] sm:$0xf]
  %v46 = vld [vmem:[%s2 + $0x6c] sm:$0xff]
  %v47 = vld [vmem:[%s2 + $0x74] sm:$0xf]
  %v48 = vld [vmem:[%s2 + $0x78] sm:$0xff]
  %v49 = vld [vmem:[%s2 + $0x80] sm:$0xf]
  %v50 = vld [vmem:[%s2 + $0x84] sm:$0xff]
  %v51 = vld [vmem:[%s2 + $0x8c] sm:$0xf]
  %v52 = vld [vmem:[%s2 + $0x90] sm:$0xff]
  %v53 = vld [vmem:[%s2 + $0x98] sm:$0xf]
  %v54 = vld [vmem:[%s2 + $0x9c] sm:$0xff]
  %v55 = vld [vmem:[%s2 + $0xa4] sm:$0xf]
  %v56 = vld [vmem:[%s2 + $0xa8] sm:$0xff]
  %v57 = vld [vmem:[%s2 + $0xb0] sm:$0xf]
  %v58 = vld [vmem:[%s2 + $0xb4] sm:$0xff]
  %v59 = vld [vmem:[%s2 + $0xbc] sm:$0xf]
  %v60 = vld [vmem:[%s3] sm:$0x7]
  %v62 = vlaneseq
  %v63 = vshrl.u32 %v62, 7
  %v64 = vsub.s32 0, %v63
  %v65 = vrot.slane %v60, %v64
  %v66 = vlaneseq
  %v67 = vshrl.u32 %v66, 7
  %v68 = vsub.s32 1, %v67
  %v69 = vrot.slane %v60, %v68
  %v70 = vlaneseq
  %v71 = vshrl.u32 %v70, 7
  %v72 = vsub.s32 2, %v71
  %v73 = vrot.slane %v60, %v72
  %v109 = vunpack.c.l.b16 %v28
  %v110 = vunpack.c.h.b16 %v28
  %v111 = vunpack.c.l.b16 %v29
  %v112 = vunpack.c.l.b16 %v30
  %v113 = vunpack.c.h.b16 %v30
  %v114 = vunpack.c.l.b16 %v31
  %v115 = vunpack.c.l.b16 %v32
  %v116 = vunpack.c.h.b16 %v32
  %v117 = vunpack.c.l.b16 %v33
  %v118 = vunpack.c.l.b16 %v34
  %v119 = vunpack.c.h.b16 %v34
  %v120 = vunpack.c.l.b16 %v35
  %v121 = vunpack.c.l.b16 %v36
  %v122 = vunpack.c.h.b16 %v36
  %v123 = vunpack.c.l.b16 %v37
  %v124 = vunpack.c.l.b16 %v38
  %v125 = vunpack.c.h.b16 %v38
  %v126 = vunpack.c.l.b16 %v39
  %v127 = vunpack.c.l.b16 %v40
  %v128 = vunpack.c.h.b16 %v40
  %v129 = vunpack.c.l.b16 %v41
  %v130 = vunpack.c.l.b16 %v42
  %v131 = vunpack.c.h.b16 %v42
  %v132 = vunpack.c.l.b16 %v43
  %v133 = vunpack.c.l.b16 %v44
  %v134 = vunpack.c.h.b16 %v44
  %v135 = vunpack.c.l.b16 %v45
  %v136 = vunpack.c.l.b16 %v46
  %v137 = vunpack.c.h.b16 %v46
  %v138 = vunpack.c.l.b16 %v47
  %v139 = vunpack.c.l.b16 %v48
  %v140 = vunpack.c.h.b16 %v48
  %v141 = vunpack.c.l.b16 %v49
  %v142 = vunpack.c.l.b16 %v50
  %v143 = vunpack.c.h.b16 %v50
  %v144 = vunpack.c.l.b16 %v51
  %v145 = vunpack.c.l.b16 %v52
  %v146 = vunpack.c.h.b16 %v52
  %v147 = vunpack.c.l.b16 %v53
  %v148 = vunpack.c.l.b16 %v54
  %v149 = vunpack.c.h.b16 %v54
  %v150 = vunpack.c.l.b16 %v55
  %v151 = vunpack.c.l.b16 %v56
  %v152 = vunpack.c.h.b16 %v56
  %v153 = vunpack.c.l.b16 %v57
  %v154 = vunpack.c.l.b16 %v58
  %v155 = vunpack.c.h.b16 %v58
  %v156 = vunpack.c.l.b16 %v59
  %v157 = vpack.c.b16 %v112, %v109
  %v158 = vpack.c.b16 %v113, %v110
  %v159 = vpack.c.b16 %v114, %v111
  %v160 = vpack.c.b16 %v118, %v115
  %v161 = vpack.c.b16 %v119, %v116
  %v162 = vpack.c.b16 %v120, %v117
  %v163 = vpack.c.b16 %v124, %v121
  %v164 = vpack.c.b16 %v125, %v122
  %v165 = vpack.c.b16 %v126, %v123
  %v166 = vpack.c.b16 %v130, %v127
  %v167 = vpack.c.b16 %v131, %v128
  %v168 = vpack.c.b16 %v132, %v129
  %v169 = vpack.c.b16 %v136, %v133
  %v170 = vpack.c.b16 %v137, %v134
  %v171 = vpack.c.b16 %v138, %v135
  %v172 = vpack.c.b16 %v142, %v139
  %v173 = vpack.c.b16 %v143, %v140
  %v174 = vpack.c.b16 %v144, %v141
  %v175 = vpack.c.b16 %v148, %v145
  %v176 = vpack.c.b16 %v149, %v146
  %v177 = vpack.c.b16 %v150, %v147
  %v178 = vpack.c.b16 %v154, %v151
  %v179 = vpack.c.b16 %v155, %v152
  %v180 = vpack.c.b16 %v156, %v153
  %205 = vmatprep.subr.bf16.mxu0 %v158
  %206 = vmatpush1.bf16.msra.mxu0 %v157
  %207 = vmatprep.subr.bf16.mxu0 %v161
  %208 = vmatpush1.bf16.msra.mxu0 %v160
  %209 = vmatprep.subr.bf16.mxu0 %v164
  %210 = vmatpush1.bf16.msra.mxu0 %v163
  %211 = vmatprep.subr.bf16.mxu0 %v167
  %212 = vmatpush1.bf16.msra.mxu0 %v166
  %213 = vmatprep.subr.bf16.mxu0 %v170
  %214 = vmatpush1.bf16.msra.mxu0 %v169
  %215 = vmatprep.subr.bf16.mxu0 %v173
  %216 = vmatpush1.bf16.msra.mxu0 %v172
  %217 = vmatprep.subr.bf16.mxu0 %v176
  %218 = vmatpush1.bf16.msra.mxu0 %v175
  %219 = vmatprep.subr.bf16.mxu0 %v179
  %220 = vmatpush1.bf16.msra.mxu0 %v178
  %221 = vmatprep.subr.bf16.mxu0 0
  %222 = vmatpush1.bf16.msra.mxu0 0
  %223 = vmatprep.subr.bf16.mxu0 0
  %224 = vmatpush1.bf16.msra.mxu0 0
  %225 = vmatprep.subr.bf16.mxu0 0
  %226 = vmatpush1.bf16.msra.mxu0 0
  %227 = vmatprep.subr.bf16.mxu0 0
  %228 = vmatpush1.bf16.msra.mxu0 0
  %229 = vmatprep.subr.bf16.mxu0 0
  %230 = vmatpush1.bf16.msra.mxu0 0
  %231 = vmatprep.subr.bf16.mxu0 0
  %232 = vmatpush1.bf16.msra.mxu0 0
  %233 = vmatprep.subr.bf16.mxu0 0
  %234 = vmatpush1.bf16.msra.mxu0 0
  %235 = vmatprep.subr.bf16.mxu0 0
  %236 = vmatpush1.bf16.msra.mxu0 0
  %237 = vmatprep.mubr.bf16.mxu0 0
  %238 = vmatmul.mubr.bf16.gmra.mrb[0].mxu0 %v27
  %v239 = vpop.f32.mrb[0].mxu0
  %v240 = vadd.f32 %v65, %v239
  %v241 = vpop.f32.mrb[0].mxu0
  %v242 = vadd.f32 %v69, %v241
  %v243 = vpop.f32.mrb[0].mxu0
  %v244 = vpop.f32.mrb[0].mxu0
  %245 = vdwg.mxu0
  %246 = vmatprep.subr.bf16.mxu0 0
  %247 = vmatpush1.bf16.msra.mxu0 %v159
  %248 = vmatprep.subr.bf16.mxu0 0
  %249 = vmatpush1.bf16.msra.mxu0 %v162
  %250 = vmatprep.subr.bf16.mxu0 0
  %251 = vmatpush1.bf16.msra.mxu0 %v165
  %252 = vmatprep.subr.bf16.mxu0 0
  %253 = vmatpush1.bf16.msra.mxu0 %v168
  %254 = vmatprep.subr.bf16.mxu0 0
  %255 = vmatpush1.bf16.msra.mxu0 %v171
  %256 = vmatprep.subr.bf16.mxu0 0
  %257 = vmatpush1.bf16.msra.mxu0 %v174
  %258 = vmatprep.subr.bf16.mxu0 0
  %259 = vmatpush1.bf16.msra.mxu0 %v177
  %260 = vmatprep.subr.bf16.mxu0 0
  %261 = vmatpush1.bf16.msra.mxu0 %v180
  %262 = vmatprep.subr.bf16.mxu0 0
  %263 = vmatpush1.bf16.msra.mxu0 0
  %264 = vmatprep.subr.bf16.mxu0 0
  %265 = vmatpush1.bf16.msra.mxu0 0
  %266 = vmatprep.subr.bf16.mxu0 0
  %267 = vmatpush1.bf16.msra.mxu0 0
  %268 = vmatprep.subr.bf16.mxu0 0
  %269 = vmatpush1.bf16.msra.mxu0 0
  %270 = vmatprep.subr.bf16.mxu0 0
  %271 = vmatpush1.bf16.msra.mxu0 0
  %272 = vmatprep.subr.bf16.mxu0 0
  %273 = vmatpush1.bf16.msra.mxu0 0
  %274 = vmatprep.subr.bf16.mxu0 0
  %275 = vmatpush1.bf16.msra.mxu0 0
  %276 = vmatprep.subr.bf16.mxu0 0
  %277 = vmatpush1.bf16.msra.mxu0 0
  %278 = vmatprep.mubr.bf16.mxu0 0
  %279 = vmatmul.mubr.bf16.gmra.mrb[0].mxu0 %v27
  %v280 = vpop.f32.mrb[0].mxu0
  %v281 = vadd.f32 %v73, %v280
  %v282 = vpop.f32.mrb[0].mxu0
  %v283 = vpop.f32.mrb[0].mxu0
  %v284 = vpop.f32.mrb[0].mxu0
  %285 = vdwg.mxu0
  %v286 = vunpack.c.l.bf16 %v25
  %v287 = vadd.f32 %v240, %v286
  %v288 = vxor.u32 %v287, 2147483648
  %v289 = vmul.f32 %v288, 1.442695
  %v290 = vpow.pop %v289
  %v291 = vadd.f32 %v290, 1.0
  %v292 = vrcp.pop %v291
  %v293 = vmul.f32 1.0, %v292
  %v295 = vrot.slane %v25, 4
  %v297 = vunpack.c.l.bf16 %v295
  %v298 = vadd.f32 %v242, %v297
  %v299 = vxor.u32 %v298, 2147483648
  %v300 = vmul.f32 %v299, 1.442695
  %v301 = vpow.pop %v300
  %v302 = vadd.f32 %v301, 1.0
  %v303 = vrcp.pop %v302
  %v304 = vmul.f32 1.0, %v303
  %v305 = vmul.f32 %v293, %v281
  %v306 = vunpack.c.l.bf16 %v26
  %v307 = vadd.f32 %v306, %v305
  %v308 = vtanh.pop %v307
  %v309 = vsub.f32 %v24, %v308
  %v310 = vmul.f32 %v304, %v309
  %v311 = vadd.f32 %v308, %v310
  %312 = vst [vmem:[%s4] sm:$0xff] %v311
  %s313 = scalar_lea.vmem %s0, 12
  %v314 = vld [vmem:[%s313] sm:$0xff]
  %v315 = vld [vmem:[%s313 + $0x8] sm:$0xf]
  %v316 = vpack.c.bf16 %v311, %v311
  %v317 = vld [vmem:[%s2] sm:$0xff]
  %v318 = vld [vmem:[%s2 + $0x8] sm:$0xf]
  %v319 = vld [vmem:[%s2 + $0xc] sm:$0xff]
  %v320 = vld [vmem:[%s2 + $0x14] sm:$0xf]
  %v321 = vld [vmem:[%s2 + $0x18] sm:$0xff]
  %v322 = vld [vmem:[%s2 + $0x20] sm:$0xf]
  %v323 = vld [vmem:[%s2 + $0x24] sm:$0xff]
  %v324 = vld [vmem:[%s2 + $0x2c] sm:$0xf]
  %v325 = vld [vmem:[%s2 + $0x30] sm:$0xff]
  %v326 = vld [vmem:[%s2 + $0x38] sm:$0xf]
  %v327 = vld [vmem:[%s2 + $0x3c] sm:$0xff]
  %v328 = vld [vmem:[%s2 + $0x44] sm:$0xf]
  %v329 = vld [vmem:[%s2 + $0x48] sm:$0xff]
  %v330 = vld [vmem:[%s2 + $0x50] sm:$0xf]
  %v331 = vld [vmem:[%s2 + $0x54] sm:$0xff]
  %v332 = vld [vmem:[%s2 + $0x5c] sm:$0xf]
  %v333 = vld [vmem:[%s2 + $0x60] sm:$0xff]
  %v334 = vld [vmem:[%s2 + $0x68] sm:$0xf]
  %v335 = vld [vmem:[%s2 + $0x6c] sm:$0xff]
  %v336 = vld [vmem:[%s2 + $0x74] sm:$0xf]
  %v337 = vld [vmem:[%s2 + $0x78] sm:$0xff]
  %v338 = vld [vmem:[%s2 + $0x80] sm:$0xf]
  %v339 = vld [vmem:[%s2 + $0x84] sm:$0xff]
  %v340 = vld [vmem:[%s2 + $0x8c] sm:$0xf]
  %v341 = vld [vmem:[%s2 + $0x90] sm:$0xff]
  %v342 = vld [vmem:[%s2 + $0x98] sm:$0xf]
  %v343 = vld [vmem:[%s2 + $0x9c] sm:$0xff]
  %v344 = vld [vmem:[%s2 + $0xa4] sm:$0xf]
  %v345 = vld [vmem:[%s2 + $0xa8] sm:$0xff]
  %v346 = vld [vmem:[%s2 + $0xb0] sm:$0xf]
  %v347 = vld [vmem:[%s2 + $0xb4] sm:$0xff]
  %v348 = vld [vmem:[%s2 + $0xbc] sm:$0xf]
  %v349 = vld [vmem:[%s3] sm:$0x7]
  %v351 = vlaneseq
  %v352 = vshrl.u32 %v351, 7
  %v353 = vsub.s32 0, %v352
  %v354 = vrot.slane %v349, %v353
  %v355 = vlaneseq
  %v356 = vshrl.u32 %v355, 7
  %v357 = vsub.s32 1, %v356
  %v358 = vrot.slane %v349, %v357
  %v359 = vlaneseq
  %v360 = vshrl.u32 %v359, 7
  %v361 = vsub.s32 2, %v360
  %v362 = vrot.slane %v349, %v361
  %v398 = vunpack.c.l.b16 %v317
  %v399 = vunpack.c.h.b16 %v317
  %v400 = vunpack.c.l.b16 %v318
  %v401 = vunpack.c.l.b16 %v319
  %v402 = vunpack.c.h.b16 %v319
  %v403 = vunpack.c.l.b16 %v320
  %v404 = vunpack.c.l.b16 %v321
  %v405 = vunpack.c.h.b16 %v321
  %v406 = vunpack.c.l.b16 %v322
  %v407 = vunpack.c.l.b16 %v323
  %v408 = vunpack.c.h.b16 %v323
  %v409 = vunpack.c.l.b16 %v324
  %v410 = vunpack.c.l.b16 %v325
  %v411 = vunpack.c.h.b16 %v325
  %v412 = vunpack.c.l.b16 %v326
  %v413 = vunpack.c.l.b16 %v327
  %v414 = vunpack.c.h.b16 %v327
  %v415 = vunpack.c.l.b16 %v328
  %v416 = vunpack.c.l.b16 %v329
  %v417 = vunpack.c.h.b16 %v329
  %v418 = vunpack.c.l.b16 %v330
  %v419 = vunpack.c.l.b16 %v331
  %v420 = vunpack.c.h.b16 %v331
  %v421 = vunpack.c.l.b16 %v332
  %v422 = vunpack.c.l.b16 %v333
  %v423 = vunpack.c.h.b16 %v333
  %v424 = vunpack.c.l.b16 %v334
  %v425 = vunpack.c.l.b16 %v335
  %v426 = vunpack.c.h.b16 %v335
  %v427 = vunpack.c.l.b16 %v336
  %v428 = vunpack.c.l.b16 %v337
  %v429 = vunpack.c.h.b16 %v337
  %v430 = vunpack.c.l.b16 %v338
  %v431 = vunpack.c.l.b16 %v339
  %v432 = vunpack.c.h.b16 %v339
  %v433 = vunpack.c.l.b16 %v340
  %v434 = vunpack.c.l.b16 %v341
  %v435 = vunpack.c.h.b16 %v341
  %v436 = vunpack.c.l.b16 %v342
  %v437 = vunpack.c.l.b16 %v343
  %v438 = vunpack.c.h.b16 %v343
  %v439 = vunpack.c.l.b16 %v344
  %v440 = vunpack.c.l.b16 %v345
  %v441 = vunpack.c.h.b16 %v345
  %v442 = vunpack.c.l.b16 %v346
  %v443 = vunpack.c.l.b16 %v347
  %v444 = vunpack.c.h.b16 %v347
  %v445 = vunpack.c.l.b16 %v348
  %v446 = vpack.c.b16 %v401, %v398
  %v447 = vpack.c.b16 %v402, %v399
  %v448 = vpack.c.b16 %v403, %v400
  %v449 = vpack.c.b16 %v407, %v404
  %v450 = vpack.c.b16 %v408, %v405
  %v451 = vpack.c.b16 %v409, %v406
  %v452 = vpack.c.b16 %v413, %v410
  %v453 = vpack.c.b16 %v414, %v411
  %v454 = vpack.c.b16 %v415, %v412
  %v455 = vpack.c.b16 %v419, %v416
  %v456 = vpack.c.b16 %v420, %v417
  %v457 = vpack.c.b16 %v421, %v418
  %v458 = vpack.c.b16 %v425, %v422
  %v459 = vpack.c.b16 %v426, %v423
  %v460 = vpack.c.b16 %v427, %v424
  %v461 = vpack.c.b16 %v431, %v428
  %v462 = vpack.c.b16 %v432, %v429
  %v463 = vpack.c.b16 %v433, %v430
  %v464 = vpack.c.b16 %v437, %v434
  %v465 = vpack.c.b16 %v438, %v435
  %v466 = vpack.c.b16 %v439, %v436
  %v467 = vpack.c.b16 %v443, %v440
  %v468 = vpack.c.b16 %v444, %v441
  %v469 = vpack.c.b16 %v445, %v442
  %494 = vmatprep.subr.bf16.mxu0 %v447
  %495 = vmatpush1.bf16.msra.mxu0 %v446
  %496 = vmatprep.subr.bf16.mxu0 %v450
  %497 = vmatpush1.bf16.msra.mxu0 %v449
  %498 = vmatprep.subr.bf16.mxu0 %v453
  %499 = vmatpush1.bf16.msra.mxu0 %v452
  %500 = vmatprep.subr.bf16.mxu0 %v456
  %501 = vmatpush1.bf16.msra.mxu0 %v455
  %502 = vmatprep.subr.bf16.mxu0 %v459
  %503 = vmatpush1.bf16.msra.mxu0 %v458
  %504 = vmatprep.subr.bf16.mxu0 %v462
  %505 = vmatpush1.bf16.msra.mxu0 %v461
  %506 = vmatprep.subr.bf16.mxu0 %v465
  %507 = vmatpush1.bf16.msra.mxu0 %v464
  %508 = vmatprep.subr.bf16.mxu0 %v468
  %509 = vmatpush1.bf16.msra.mxu0 %v467
  %510 = vmatprep.subr.bf16.mxu0 0
  %511 = vmatpush1.bf16.msra.mxu0 0
  %512 = vmatprep.subr.bf16.mxu0 0
  %513 = vmatpush1.bf16.msra.mxu0 0
  %514 = vmatprep.subr.bf16.mxu0 0
  %515 = vmatpush1.bf16.msra.mxu0 0
  %516 = vmatprep.subr.bf16.mxu0 0
  %517 = vmatpush1.bf16.msra.mxu0 0
  %518 = vmatprep.subr.bf16.mxu0 0
  %519 = vmatpush1.bf16.msra.mxu0 0
  %520 = vmatprep.subr.bf16.mxu0 0
  %521 = vmatpush1.bf16.msra.mxu0 0
  %522 = vmatprep.subr.bf16.mxu0 0
  %523 = vmatpush1.bf16.msra.mxu0 0
  %524 = vmatprep.subr.bf16.mxu0 0
  %525 = vmatpush1.bf16.msra.mxu0 0
  %526 = vmatprep.mubr.bf16.mxu0 0
  %527 = vmatmul.mubr.bf16.gmra.mrb[0].mxu0 %v316
  %v528 = vpop.f32.mrb[0].mxu0
  %v529 = vadd.f32 %v354, %v528
  %v530 = vpop.f32.mrb[0].mxu0
  %v531 = vadd.f32 %v358, %v530
  %v532 = vpop.f32.mrb[0].mxu0
  %v533 = vpop.f32.mrb[0].mxu0
  %534 = vdwg.mxu0
  %535 = vmatprep.subr.bf16.mxu0 0
  %536 = vmatpush1.bf16.msra.mxu0 %v448
  %537 = vmatprep.subr.bf16.mxu0 0
  %538 = vmatpush1.bf16.msra.mxu0 %v451
  %539 = vmatprep.subr.bf16.mxu0 0
  %540 = vmatpush1.bf16.msra.mxu0 %v454
  %541 = vmatprep.subr.bf16.mxu0 0
  %542 = vmatpush1.bf16.msra.mxu0 %v457
  %543 = vmatprep.subr.bf16.mxu0 0
  %544 = vmatpush1.bf16.msra.mxu0 %v460
  %545 = vmatprep.subr.bf16.mxu0 0
  %546 = vmatpush1.bf16.msra.mxu0 %v463
  %547 = vmatprep.subr.bf16.mxu0 0
  %548 = vmatpush1.bf16.msra.mxu0 %v466
  %549 = vmatprep.subr.bf16.mxu0 0
  %550 = vmatpush1.bf16.msra.mxu0 %v469
  %551 = vmatprep.subr.bf16.mxu0 0
  %552 = vmatpush1.bf16.msra.mxu0 0
  %553 = vmatprep.subr.bf16.mxu0 0
  %554 = vmatpush1.bf16.msra.mxu0 0
  %555 = vmatprep.subr.bf16.mxu0 0
  %556 = vmatpush1.bf16.msra.mxu0 0
  %557 = vmatprep.subr.bf16.mxu0 0
  %558 = vmatpush1.bf16.msra.mxu0 0
  %559 = vmatprep.subr.bf16.mxu0 0
  %560 = vmatpush1.bf16.msra.mxu0 0
  %561 = vmatprep.subr.bf16.mxu0 0
  %562 = vmatpush1.bf16.msra.mxu0 0
  %563 = vmatprep.subr.bf16.mxu0 0
  %564 = vmatpush1.bf16.msra.mxu0 0
  %565 = vmatprep.subr.bf16.mxu0 0
  %566 = vmatpush1.bf16.msra.mxu0 0
  %567 = vmatprep.mubr.bf16.mxu0 0
  %568 = vmatmul.mubr.bf16.gmra.mrb[0].mxu0 %v316
  %v569 = vpop.f32.mrb[0].mxu0
  %v570 = vadd.f32 %v362, %v569
  %v571 = vpop.f32.mrb[0].mxu0
  %v572 = vpop.f32.mrb[0].mxu0
  %v573 = vpop.f32.mrb[0].mxu0
  %574 = vdwg.mxu0
  %v575 = vunpack.c.l.bf16 %v314
  %v576 = vadd.f32 %v529, %v575
  %v577 = vxor.u32 %v576, 2147483648
  %v578 = vmul.f32 %v577, 1.442695
  %v579 = vpow.pop %v578
  %v580 = vadd.f32 %v579, 1.0
  %v581 = vrcp.pop %v580
  %v582 = vmul.f32 1.0, %v581
  %v584 = vrot.slane %v314, 4
  %v586 = vunpack.c.l.bf16 %v584
  %v587 = vadd.f32 %v531, %v586
  %v588 = vxor.u32 %v587, 2147483648
  %v589 = vmul.f32 %v588, 1.442695
  %v590 = vpow.pop %v589
  %v591 = vadd.f32 %v590, 1.0
  %v592 = vrcp.pop %v591
  %v593 = vmul.f32 1.0, %v592
  %v594 = vmul.f32 %v582, %v570
  %v595 = vunpack.c.l.bf16 %v315
  %v596 = vadd.f32 %v595, %v594
  %v597 = vtanh.pop %v596
  %v598 = vsub.f32 %v311, %v597
  %v599 = vmul.f32 %v593, %v598
  %v600 = vadd.f32 %v597, %v599
  %s601 = scalar_lea.vmem %s4, 8
  %602 = vst [vmem:[%s601] sm:$0xff] %v600
  %s603 = scalar_lea.vmem %s0, 24
  %v604 = vld [vmem:[%s603] sm:$0xff]
  %v605 = vld [vmem:[%s603 + $0x8] sm:$0xf]
  %v606 = vpack.c.bf16 %v600, %v600
  %v607 = vld [vmem:[%s2] sm:$0xff]
  %v608 = vld [vmem:[%s2 + $0x8] sm:$0xf]
  %v609 = vld [vmem:[%s2 + $0xc] sm:$0xff]
  %v610 = vld [vmem:[%s2 + $0x14] sm:$0xf]
  %v611 = vld [vmem:[%s2 + $0x18] sm:$0xff]
  %v612 = vld [vmem:[%s2 + $0x20] sm:$0xf]
  %v613 = vld [vmem:[%s2 + $0x24] sm:$0xff]
  %v614 = vld [vmem:[%s2 + $0x2c] sm:$0xf]
  %v615 = vld [vmem:[%s2 + $0x30] sm:$0xff]
  %v616 = vld [vmem:[%s2 + $0x38] sm:$0xf]
  %v617 = vld [vmem:[%s2 + $0x3c] sm:$0xff]
  %v618 = vld [vmem:[%s2 + $0x44] sm:$0xf]
  %v619 = vld [vmem:[%s2 + $0x48] sm:$0xff]
  %v620 = vld [vmem:[%s2 + $0x50] sm:$0xf]
  %v621 = vld [vmem:[%s2 + $0x54] sm:$0xff]
  %v622 = vld [vmem:[%s2 + $0x5c] sm:$0xf]
  %v623 = vld [vmem:[%s2 + $0x60] sm:$0xff]
  %v624 = vld [vmem:[%s2 + $0x68] sm:$0xf]
  %v625 = vld [vmem:[%s2 + $0x6c] sm:$0xff]
  %v626 = vld [vmem:[%s2 + $0x74] sm:$0xf]
  %v627 = vld [vmem:[%s2 + $0x78] sm:$0xff]
  %v628 = vld [vmem:[%s2 + $0x80] sm:$0xf]
  %v629 = vld [vmem:[%s2 + $0x84] sm:$0xff]
  %v630 = vld [vmem:[%s2 + $0x8c] sm:$0xf]
  %v631 = vld [vmem:[%s2 + $0x90] sm:$0xff]
  %v632 = vld [vmem:[%s2 + $0x98] sm:$0xf]
  %v633 = vld [vmem:[%s2 + $0x9c] sm:$0xff]
  %v634 = vld [vmem:[%s2 + $0xa4] sm:$0xf]
  %v635 = vld [vmem:[%s2 + $0xa8] sm:$0xff]
  %v636 = vld [vmem:[%s2 + $0xb0] sm:$0xf]
  %v637 = vld [vmem:[%s2 + $0xb4] sm:$0xff]
  %v638 = vld [vmem:[%s2 + $0xbc] sm:$0xf]
  %v639 = vld [vmem:[%s3] sm:$0x7]
  %v641 = vlaneseq
  %v642 = vshrl.u32 %v641, 7
  %v643 = vsub.s32 0, %v642
  %v644 = vrot.slane %v639, %v643
  %v645 = vlaneseq
  %v646 = vshrl.u32 %v645, 7
  %v647 = vsub.s32 1, %v646
  %v648 = vrot.slane %v639, %v647
  %v649 = vlaneseq
  %v650 = vshrl.u32 %v649, 7
  %v651 = vsub.s32 2, %v650
  %v652 = vrot.slane %v639, %v651
  %v688 = vunpack.c.l.b16 %v607
  %v689 = vunpack.c.h.b16 %v607
  %v690 = vunpack.c.l.b16 %v608
  %v691 = vunpack.c.l.b16 %v609
  %v692 = vunpack.c.h.b16 %v609
  %v693 = vunpack.c.l.b16 %v610
  %v694 = vunpack.c.l.b16 %v611
  %v695 = vunpack.c.h.b16 %v611
  %v696 = vunpack.c.l.b16 %v612
  %v697 = vunpack.c.l.b16 %v613
  %v698 = vunpack.c.h.b16 %v613
  %v699 = vunpack.c.l.b16 %v614
  %v700 = vunpack.c.l.b16 %v615
  %v701 = vunpack.c.h.b16 %v615
  %v702 = vunpack.c.l.b16 %v616
  %v703 = vunpack.c.l.b16 %v617
  %v704 = vunpack.c.h.b16 %v617
  %v705 = vunpack.c.l.b16 %v618
  %v706 = vunpack.c.l.b16 %v619
  %v707 = vunpack.c.h.b16 %v619
  %v708 = vunpack.c.l.b16 %v620
  %v709 = vunpack.c.l.b16 %v621
  %v710 = vunpack.c.h.b16 %v621
  %v711 = vunpack.c.l.b16 %v622
  %v712 = vunpack.c.l.b16 %v623
  %v713 = vunpack.c.h.b16 %v623
  %v714 = vunpack.c.l.b16 %v624
  %v715 = vunpack.c.l.b16 %v625
  %v716 = vunpack.c.h.b16 %v625
  %v717 = vunpack.c.l.b16 %v626
  %v718 = vunpack.c.l.b16 %v627
  %v719 = vunpack.c.h.b16 %v627
  %v720 = vunpack.c.l.b16 %v628
  %v721 = vunpack.c.l.b16 %v629
  %v722 = vunpack.c.h.b16 %v629
  %v723 = vunpack.c.l.b16 %v630
  %v724 = vunpack.c.l.b16 %v631
  %v725 = vunpack.c.h.b16 %v631
  %v726 = vunpack.c.l.b16 %v632
  %v727 = vunpack.c.l.b16 %v633
  %v728 = vunpack.c.h.b16 %v633
  %v729 = vunpack.c.l.b16 %v634
  %v730 = vunpack.c.l.b16 %v635
  %v731 = vunpack.c.h.b16 %v635
  %v732 = vunpack.c.l.b16 %v636
  %v733 = vunpack.c.l.b16 %v637
  %v734 = vunpack.c.h.b16 %v637
  %v735 = vunpack.c.l.b16 %v638
  %v736 = vpack.c.b16 %v691, %v688
  %v737 = vpack.c.b16 %v692, %v689
  %v738 = vpack.c.b16 %v693, %v690
  %v739 = vpack.c.b16 %v697, %v694
  %v740 = vpack.c.b16 %v698, %v695
  %v741 = vpack.c.b16 %v699, %v696
  %v742 = vpack.c.b16 %v703, %v700
  %v743 = vpack.c.b16 %v704, %v701
  %v744 = vpack.c.b16 %v705, %v702
  %v745 = vpack.c.b16 %v709, %v706
  %v746 = vpack.c.b16 %v710, %v707
  %v747 = vpack.c.b16 %v711, %v708
  %v748 = vpack.c.b16 %v715, %v712
  %v749 = vpack.c.b16 %v716, %v713
  %v750 = vpack.c.b16 %v717, %v714
  %v751 = vpack.c.b16 %v721, %v718
  %v752 = vpack.c.b16 %v722, %v719
  %v753 = vpack.c.b16 %v723, %v720
  %v754 = vpack.c.b16 %v727, %v724
  %v755 = vpack.c.b16 %v728, %v725
  %v756 = vpack.c.b16 %v729, %v726
  %v757 = vpack.c.b16 %v733, %v730
  %v758 = vpack.c.b16 %v734, %v731
  %v759 = vpack.c.b16 %v735, %v732
  %784 = vmatprep.subr.bf16.mxu0 %v737
  %785 = vmatpush1.bf16.msra.mxu0 %v736
  %786 = vmatprep.subr.bf16.mxu0 %v740
  %787 = vmatpush1.bf16.msra.mxu0 %v739
  %788 = vmatprep.subr.bf16.mxu0 %v743
  %789 = vmatpush1.bf16.msra.mxu0 %v742
  %790 = vmatprep.subr.bf16.mxu0 %v746
  %791 = vmatpush1.bf16.msra.mxu0 %v745
  %792 = vmatprep.subr.bf16.mxu0 %v749
  %793 = vmatpush1.bf16.msra.mxu0 %v748
  %794 = vmatprep.subr.bf16.mxu0 %v752
  %795 = vmatpush1.bf16.msra.mxu0 %v751
  %796 = vmatprep.subr.bf16.mxu0 %v755
  %797 = vmatpush1.bf16.msra.mxu0 %v754
  %798 = vmatprep.subr.bf16.mxu0 %v758
  %799 = vmatpush1.bf16.msra.mxu0 %v757
  %800 = vmatprep.subr.bf16.mxu0 0
  %801 = vmatpush1.bf16.msra.mxu0 0
  %802 = vmatprep.subr.bf16.mxu0 0
  %803 = vmatpush1.bf16.msra.mxu0 0
  %804 = vmatprep.subr.bf16.mxu0 0
  %805 = vmatpush1.bf16.msra.mxu0 0
  %806 = vmatprep.subr.bf16.mxu0 0
  %807 = vmatpush1.bf16.msra.mxu0 0
  %808 = vmatprep.subr.bf16.mxu0 0
  %809 = vmatpush1.bf16.msra.mxu0 0
  %810 = vmatprep.subr.bf16.mxu0 0
  %811 = vmatpush1.bf16.msra.mxu0 0
  %812 = vmatprep.subr.bf16.mxu0 0
  %813 = vmatpush1.bf16.msra.mxu0 0
  %814 = vmatprep.subr.bf16.mxu0 0
  %815 = vmatpush1.bf16.msra.mxu0 0
  %816 = vmatprep.mubr.bf16.mxu0 0
  %817 = vmatmul.mubr.bf16.gmra.mrb[0].mxu0 %v606
  %v818 = vpop.f32.mrb[0].mxu0
  %v819 = vadd.f32 %v644, %v818
  %v820 = vpop.f32.mrb[0].mxu0
  %v821 = vadd.f32 %v648, %v820
  %v822 = vpop.f32.mrb[0].mxu0
  %v823 = vpop.f32.mrb[0].mxu0
  %824 = vdwg.mxu0
  %825 = vmatprep.subr.bf16.mxu0 0
  %826 = vmatpush1.bf16.msra.mxu0 %v738
  %827 = vmatprep.subr.bf16.mxu0 0
  %828 = vmatpush1.bf16.msra.mxu0 %v741
  %829 = vmatprep.subr.bf16.mxu0 0
  %830 = vmatpush1.bf16.msra.mxu0 %v744
  %831 = vmatprep.subr.bf16.mxu0 0
  %832 = vmatpush1.bf16.msra.mxu0 %v747
  %833 = vmatprep.subr.bf16.mxu0 0
  %834 = vmatpush1.bf16.msra.mxu0 %v750
  %835 = vmatprep.subr.bf16.mxu0 0
  %836 = vmatpush1.bf16.msra.mxu0 %v753
  %837 = vmatprep.subr.bf16.mxu0 0
  %838 = vmatpush1.bf16.msra.mxu0 %v756
  %839 = vmatprep.subr.bf16.mxu0 0
  %840 = vmatpush1.bf16.msra.mxu0 %v759
  %841 = vmatprep.subr.bf16.mxu0 0
  %842 = vmatpush1.bf16.msra.mxu0 0
  %843 = vmatprep.subr.bf16.mxu0 0
  %844 = vmatpush1.bf16.msra.mxu0 0
  %845 = vmatprep.subr.bf16.mxu0 0
  %846 = vmatpush1.bf16.msra.mxu0 0
  %847 = vmatprep.subr.bf16.mxu0 0
  %848 = vmatpush1.bf16.msra.mxu0 0
  %849 = vmatprep.subr.bf16.mxu0 0
  %850 = vmatpush1.bf16.msra.mxu0 0
  %851 = vmatprep.subr.bf16.mxu0 0
  %852 = vmatpush1.bf16.msra.mxu0 0
  %853 = vmatprep.subr.bf16.mxu0 0
  %854 = vmatpush1.bf16.msra.mxu0 0
  %855 = vmatprep.subr.bf16.mxu0 0
  %856 = vmatpush1.bf16.msra.mxu0 0
  %857 = vmatprep.mubr.bf16.mxu0 0
  %858 = vmatmul.mubr.bf16.gmra.mrb[0].mxu0 %v606
  %v859 = vpop.f32.mrb[0].mxu0
  %v860 = vadd.f32 %v652, %v859
  %v861 = vpop.f32.mrb[0].mxu0
  %v862 = vpop.f32.mrb[0].mxu0
  %v863 = vpop.f32.mrb[0].mxu0
  %864 = vdwg.mxu0
  %v865 = vunpack.c.l.bf16 %v604
  %v866 = vadd.f32 %v819, %v865
  %v867 = vxor.u32 %v866, 2147483648
  %v868 = vmul.f32 %v867, 1.442695
  %v869 = vpow.pop %v868
  %v870 = vadd.f32 %v869, 1.0
  %v871 = vrcp.pop %v870
  %v872 = vmul.f32 1.0, %v871
  %v874 = vrot.slane %v604, 4
  %v876 = vunpack.c.l.bf16 %v874
  %v877 = vadd.f32 %v821, %v876
  %v878 = vxor.u32 %v877, 2147483648
  %v879 = vmul.f32 %v878, 1.442695
  %v880 = vpow.pop %v879
  %v881 = vadd.f32 %v880, 1.0
  %v882 = vrcp.pop %v881
  %v883 = vmul.f32 1.0, %v882
  %v884 = vmul.f32 %v872, %v860
  %v885 = vunpack.c.l.bf16 %v605
  %v886 = vadd.f32 %v885, %v884
  %v887 = vtanh.pop %v886
  %v888 = vsub.f32 %v600, %v887
  %v889 = vmul.f32 %v883, %v888
  %v890 = vadd.f32 %v887, %v889
  %s891 = scalar_lea.vmem %s4, 16
  %892 = vst [vmem:[%s891] sm:$0xff] %v890
  %s893 = scalar_lea.vmem %s0, 36
  %v894 = vld [vmem:[%s893] sm:$0xff]
  %v895 = vld [vmem:[%s893 + $0x8] sm:$0xf]
  %v896 = vpack.c.bf16 %v890, %v890
  %v897 = vld [vmem:[%s2] sm:$0xff]
  %v898 = vld [vmem:[%s2 + $0x8] sm:$0xf]
  %v899 = vld [vmem:[%s2 + $0xc] sm:$0xff]
  %v900 = vld [vmem:[%s2 + $0x14] sm:$0xf]
  %v901 = vld [vmem:[%s2 + $0x18] sm:$0xff]
  %v902 = vld [vmem:[%s2 + $0x20] sm:$0xf]
  %v903 = vld [vmem:[%s2 + $0x24] sm:$0xff]
  %v904 = vld [vmem:[%s2 + $0x2c] sm:$0xf]
  %v905 = vld [vmem:[%s2 + $0x30] sm:$0xff]
  %v906 = vld [vmem:[%s2 + $0x38] sm:$0xf]
  %v907 = vld [vmem:[%s2 + $0x3c] sm:$0xff]
  %v908 = vld [vmem:[%s2 + $0x44] sm:$0xf]
  %v909 = vld [vmem:[%s2 + $0x48] sm:$0xff]
  %v910 = vld [vmem:[%s2 + $0x50] sm:$0xf]
  %v911 = vld [vmem:[%s2 + $0x54] sm:$0xff]
  %v912 = vld [vmem:[%s2 + $0x5c] sm:$0xf]
  %v913 = vld [vmem:[%s2 + $0x60] sm:$0xff]
  %v914 = vld [vmem:[%s2 + $0x68] sm:$0xf]
  %v915 = vld [vmem:[%s2 + $0x6c] sm:$0xff]
  %v916 = vld [vmem:[%s2 + $0x74] sm:$0xf]
  %v917 = vld [vmem:[%s2 + $0x78] sm:$0xff]
  %v918 = vld [vmem:[%s2 + $0x80] sm:$0xf]
  %v919 = vld [vmem:[%s2 + $0x84] sm:$0xff]
  %v920 = vld [vmem:[%s2 + $0x8c] sm:$0xf]
  %v921 = vld [vmem:[%s2 + $0x90] sm:$0xff]
  %v922 = vld [vmem:[%s2 + $0x98] sm:$0xf]
  %v923 = vld [vmem:[%s2 + $0x9c] sm:$0xff]
  %v924 = vld [vmem:[%s2 + $0xa4] sm:$0xf]
  %v925 = vld [vmem:[%s2 + $0xa8] sm:$0xff]
  %v926 = vld [vmem:[%s2 + $0xb0] sm:$0xf]
  %v927 = vld [vmem:[%s2 + $0xb4] sm:$0xff]
  %v928 = vld [vmem:[%s2 + $0xbc] sm:$0xf]
  %v929 = vld [vmem:[%s3] sm:$0x7]
  %v931 = vlaneseq
  %v932 = vshrl.u32 %v931, 7
  %v933 = vsub.s32 0, %v932
  %v934 = vrot.slane %v929, %v933
  %v935 = vlaneseq
  %v936 = vshrl.u32 %v935, 7
  %v937 = vsub.s32 1, %v936
  %v938 = vrot.slane %v929, %v937
  %v939 = vlaneseq
  %v940 = vshrl.u32 %v939, 7
  %v941 = vsub.s32 2, %v940
  %v942 = vrot.slane %v929, %v941
  %v978 = vunpack.c.l.b16 %v897
  %v979 = vunpack.c.h.b16 %v897
  %v980 = vunpack.c.l.b16 %v898
  %v981 = vunpack.c.l.b16 %v899
  %v982 = vunpack.c.h.b16 %v899
  %v983 = vunpack.c.l.b16 %v900
  %v984 = vunpack.c.l.b16 %v901
  %v985 = vunpack.c.h.b16 %v901
  %v986 = vunpack.c.l.b16 %v902
  %v987 = vunpack.c.l.b16 %v903
  %v988 = vunpack.c.h.b16 %v903
  %v989 = vunpack.c.l.b16 %v904
  %v990 = vunpack.c.l.b16 %v905
  %v991 = vunpack.c.h.b16 %v905
  %v992 = vunpack.c.l.b16 %v906
  %v993 = vunpack.c.l.b16 %v907
  %v994 = vunpack.c.h.b16 %v907
  %v995 = vunpack.c.l.b16 %v908
  %v996 = vunpack.c.l.b16 %v909
  %v997 = vunpack.c.h.b16 %v909
  %v998 = vunpack.c.l.b16 %v910
  %v999 = vunpack.c.l.b16 %v911
  %v1000 = vunpack.c.h.b16 %v911
  %v1001 = vunpack.c.l.b16 %v912
  %v1002 = vunpack.c.l.b16 %v913
  %v1003 = vunpack.c.h.b16 %v913
  %v1004 = vunpack.c.l.b16 %v914
  %v1005 = vunpack.c.l.b16 %v915
  %v1006 = vunpack.c.h.b16 %v915
  %v1007 = vunpack.c.l.b16 %v916
  %v1008 = vunpack.c.l.b16 %v917
  %v1009 = vunpack.c.h.b16 %v917
  %v1010 = vunpack.c.l.b16 %v918
  %v1011 = vunpack.c.l.b16 %v919
  %v1012 = vunpack.c.h.b16 %v919
  %v1013 = vunpack.c.l.b16 %v920
  %v1014 = vunpack.c.l.b16 %v921
  %v1015 = vunpack.c.h.b16 %v921
  %v1016 = vunpack.c.l.b16 %v922
  %v1017 = vunpack.c.l.b16 %v923
  %v1018 = vunpack.c.h.b16 %v923
  %v1019 = vunpack.c.l.b16 %v924
  %v1020 = vunpack.c.l.b16 %v925
  %v1021 = vunpack.c.h.b16 %v925
  %v1022 = vunpack.c.l.b16 %v926
  %v1023 = vunpack.c.l.b16 %v927
  %v1024 = vunpack.c.h.b16 %v927
  %v1025 = vunpack.c.l.b16 %v928
  %v1026 = vpack.c.b16 %v981, %v978
  %v1027 = vpack.c.b16 %v982, %v979
  %v1028 = vpack.c.b16 %v983, %v980
  %v1029 = vpack.c.b16 %v987, %v984
  %v1030 = vpack.c.b16 %v988, %v985
  %v1031 = vpack.c.b16 %v989, %v986
  %v1032 = vpack.c.b16 %v993, %v990
  %v1033 = vpack.c.b16 %v994, %v991
  %v1034 = vpack.c.b16 %v995, %v992
  %v1035 = vpack.c.b16 %v999, %v996
  %v1036 = vpack.c.b16 %v1000, %v997
  %v1037 = vpack.c.b16 %v1001, %v998
  %v1038 = vpack.c.b16 %v1005, %v1002
  %v1039 = vpack.c.b16 %v1006, %v1003
  %v1040 = vpack.c.b16 %v1007, %v1004
  %v1041 = vpack.c.b16 %v1011, %v1008
  %v1042 = vpack.c.b16 %v1012, %v1009
  %v1043 = vpack.c.b16 %v1013, %v1010
  %v1044 = vpack.c.b16 %v1017, %v1014
  %v1045 = vpack.c.b16 %v1018, %v1015
  %v1046 = vpack.c.b16 %v1019, %v1016
  %v1047 = vpack.c.b16 %v1023, %v1020
  %v1048 = vpack.c.b16 %v1024, %v1021
  %v1049 = vpack.c.b16 %v1025, %v1022
  %1074 = vmatprep.subr.bf16.mxu0 %v1027
  %1075 = vmatpush1.bf16.msra.mxu0 %v1026
  %1076 = vmatprep.subr.bf16.mxu0 %v1030
  %1077 = vmatpush1.bf16.msra.mxu0 %v1029
  %1078 = vmatprep.subr.bf16.mxu0 %v1033
  %1079 = vmatpush1.bf16.msra.mxu0 %v1032
  %1080 = vmatprep.subr.bf16.mxu0 %v1036
  %1081 = vmatpush1.bf16.msra.mxu0 %v1035
  %1082 = vmatprep.subr.bf16.mxu0 %v1039
  %1083 = vmatpush1.bf16.msra.mxu0 %v1038
  %1084 = vmatprep.subr.bf16.mxu0 %v1042
  %1085 = vmatpush1.bf16.msra.mxu0 %v1041
  %1086 = vmatprep.subr.bf16.mxu0 %v1045
  %1087 = vmatpush1.bf16.msra.mxu0 %v1044
  %1088 = vmatprep.subr.bf16.mxu0 %v1048
  %1089 = vmatpush1.bf16.msra.mxu0 %v1047
  %1090 = vmatprep.subr.bf16.mxu0 0
  %1091 = vmatpush1.bf16.msra.mxu0 0
  %1092 = vmatprep.subr.bf16.mxu0 0
  %1093 = vmatpush1.bf16.msra.mxu0 0
  %1094 = vmatprep.subr.bf16.mxu0 0
  %1095 = vmatpush1.bf16.msra.mxu0 0
  %1096 = vmatprep.subr.bf16.mxu0 0
  %1097 = vmatpush1.bf16.msra.mxu0 0
  %1098 = vmatprep.subr.bf16.mxu0 0
  %1099 = vmatpush1.bf16.msra.mxu0 0
  %1100 = vmatprep.subr.bf16.mxu0 0
  %1101 = vmatpush1.bf16.msra.mxu0 0
  %1102 = vmatprep.subr.bf16.mxu0 0
  %1103 = vmatpush1.bf16.msra.mxu0 0
  %1104 = vmatprep.subr.bf16.mxu0 0
  %1105 = vmatpush1.bf16.msra.mxu0 0
  %1106 = vmatprep.mubr.bf16.mxu0 0
  %1107 = vmatmul.mubr.bf16.gmra.mrb[0].mxu0 %v896
  %v1108 = vpop.f32.mrb[0].mxu0
  %v1109 = vadd.f32 %v934, %v1108
  %v1110 = vpop.f32.mrb[0].mxu0
  %v1111 = vadd.f32 %v938, %v1110
  %v1112 = vpop.f32.mrb[0].mxu0
  %v1113 = vpop.f32.mrb[0].mxu0
  %1114 = vdwg.mxu0
  %1115 = vmatprep.subr.bf16.mxu0 0
  %1116 = vmatpush1.bf16.msra.mxu0 %v1028
  %1117 = vmatprep.subr.bf16.mxu0 0
  %1118 = vmatpush1.bf16.msra.mxu0 %v1031
  %1119 = vmatprep.subr.bf16.mxu0 0
  %1120 = vmatpush1.bf16.msra.mxu0 %v1034
  %1121 = vmatprep.subr.bf16.mxu0 0
  %1122 = vmatpush1.bf16.msra.mxu0 %v1037
  %1123 = vmatprep.subr.bf16.mxu0 0
  %1124 = vmatpush1.bf16.msra.mxu0 %v1040
  %1125 = vmatprep.subr.bf16.mxu0 0
  %1126 = vmatpush1.bf16.msra.mxu0 %v1043
  %1127 = vmatprep.subr.bf16.mxu0 0
  %1128 = vmatpush1.bf16.msra.mxu0 %v1046
  %1129 = vmatprep.subr.bf16.mxu0 0
  %1130 = vmatpush1.bf16.msra.mxu0 %v1049
  %1131 = vmatprep.subr.bf16.mxu0 0
  %1132 = vmatpush1.bf16.msra.mxu0 0
  %1133 = vmatprep.subr.bf16.mxu0 0
  %1134 = vmatpush1.bf16.msra.mxu0 0
  %1135 = vmatprep.subr.bf16.mxu0 0
  %1136 = vmatpush1.bf16.msra.mxu0 0
  %1137 = vmatprep.subr.bf16.mxu0 0
  %1138 = vmatpush1.bf16.msra.mxu0 0
  %1139 = vmatprep.subr.bf16.mxu0 0
  %1140 = vmatpush1.bf16.msra.mxu0 0
  %1141 = vmatprep.subr.bf16.mxu0 0
  %1142 = vmatpush1.bf16.msra.mxu0 0
  %1143 = vmatprep.subr.bf16.mxu0 0
  %1144 = vmatpush1.bf16.msra.mxu0 0
  %1145 = vmatprep.subr.bf16.mxu0 0
  %1146 = vmatpush1.bf16.msra.mxu0 0
  %1147 = vmatprep.mubr.bf16.mxu0 0
  %1148 = vmatmul.mubr.bf16.gmra.mrb[0].mxu0 %v896
  %v1149 = vpop.f32.mrb[0].mxu0
  %v1150 = vadd.f32 %v942, %v1149
  %v1151 = vpop.f32.mrb[0].mxu0
  %v1152 = vpop.f32.mrb[0].mxu0
  %v1153 = vpop.f32.mrb[0].mxu0
  %1154 = vdwg.mxu0
  %v1155 = vunpack.c.l.bf16 %v894
  %v1156 = vadd.f32 %v1109, %v1155
  %v1157 = vxor.u32 %v1156, 2147483648
  %v1158 = vmul.f32 %v1157, 1.442695
  %v1159 = vpow.pop %v1158
  %v1160 = vadd.f32 %v1159, 1.0
  %v1161 = vrcp.pop %v1160
  %v1162 = vmul.f32 1.0, %v1161
  %v1164 = vrot.slane %v894, 4
  %v1166 = vunpack.c.l.bf16 %v1164
  %v1167 = vadd.f32 %v1111, %v1166
  %v1168 = vxor.u32 %v1167, 2147483648
  %v1169 = vmul.f32 %v1168, 1.442695
  %v1170 = vpow.pop %v1169
  %v1171 = vadd.f32 %v1170, 1.0
  %v1172 = vrcp.pop %v1171
  %v1173 = vmul.f32 1.0, %v1172
  %v1174 = vmul.f32 %v1162, %v1150
  %v1175 = vunpack.c.l.bf16 %v895
  %v1176 = vadd.f32 %v1175, %v1174
  %v1177 = vtanh.pop %v1176
  %v1178 = vsub.f32 %v890, %v1177
  %v1179 = vmul.f32 %v1173, %v1178
  %v1180 = vadd.f32 %v1177, %v1179
  %s1181 = scalar_lea.vmem %s4, 24
  %1182 = vst [vmem:[%s1181] sm:$0xff] %v1180
  %s1183 = scalar_lea.vmem %s0, 48
  %v1184 = vld [vmem:[%s1183] sm:$0xff]
  %v1185 = vld [vmem:[%s1183 + $0x8] sm:$0xf]
  %v1186 = vpack.c.bf16 %v1180, %v1180
  %v1187 = vld [vmem:[%s2] sm:$0xff]
  %v1188 = vld [vmem:[%s2 + $0x8] sm:$0xf]
  %v1189 = vld [vmem:[%s2 + $0xc] sm:$0xff]
  %v1190 = vld [vmem:[%s2 + $0x14] sm:$0xf]
  %v1191 = vld [vmem:[%s2 + $0x18] sm:$0xff]
  %v1192 = vld [vmem:[%s2 + $0x20] sm:$0xf]
  %v1193 = vld [vmem:[%s2 + $0x24] sm:$0xff]
  %v1194 = vld [vmem:[%s2 + $0x2c] sm:$0xf]
  %v1195 = vld [vmem:[%s2 + $0x30] sm:$0xff]
  %v1196 = vld [vmem:[%s2 + $0x38] sm:$0xf]
  %v1197 = vld [vmem:[%s2 + $0x3c] sm:$0xff]
  %v1198 = vld [vmem:[%s2 + $0x44] sm:$0xf]
  %v1199 = vld [vmem:[%s2 + $0x48] sm:$0xff]
  %v1200 = vld [vmem:[%s2 + $0x50] sm:$0xf]
  %v1201 = vld [vmem:[%s2 + $0x54] sm:$0xff]
  %v1202 = vld [vmem:[%s2 + $0x5c] sm:$0xf]
  %v1203 = vld [vmem:[%s2 + $0x60] sm:$0xff]
  %v1204 = vld [vmem:[%s2 + $0x68] sm:$0xf]
  %v1205 = vld [vmem:[%s2 + $0x6c] sm:$0xff]
  %v1206 = vld [vmem:[%s2 + $0x74] sm:$0xf]
  %v1207 = vld [vmem:[%s2 + $0x78] sm:$0xff]
  %v1208 = vld [vmem:[%s2 + $0x80] sm:$0xf]
  %v1209 = vld [vmem:[%s2 + $0x84] sm:$0xff]
  %v1210 = vld [vmem:[%s2 + $0x8c] sm:$0xf]
  %v1211 = vld [vmem:[%s2 + $0x90] sm:$0xff]
  %v1212 = vld [vmem:[%s2 + $0x98] sm:$0xf]
  %v1213 = vld [vmem:[%s2 + $0x9c] sm:$0xff]
  %v1214 = vld [vmem:[%s2 + $0xa4] sm:$0xf]
  %v1215 = vld [vmem:[%s2 + $0xa8] sm:$0xff]
  %v1216 = vld [vmem:[%s2 + $0xb0] sm:$0xf]
  %v1217 = vld [vmem:[%s2 + $0xb4] sm:$0xff]
  %v1218 = vld [vmem:[%s2 + $0xbc] sm:$0xf]
  %v1219 = vld [vmem:[%s3] sm:$0x7]
  %v1221 = vlaneseq
  %v1222 = vshrl.u32 %v1221, 7
  %v1223 = vsub.s32 0, %v1222
  %v1224 = vrot.slane %v1219, %v1223
  %v1225 = vlaneseq
  %v1226 = vshrl.u32 %v1225, 7
  %v1227 = vsub.s32 1, %v1226
  %v1228 = vrot.slane %v1219, %v1227
  %v1229 = vlaneseq
  %v1230 = vshrl.u32 %v1229, 7
  %v1231 = vsub.s32 2, %v1230
  %v1232 = vrot.slane %v1219, %v1231
  %v1268 = vunpack.c.l.b16 %v1187
  %v1269 = vunpack.c.h.b16 %v1187
  %v1270 = vunpack.c.l.b16 %v1188
  %v1271 = vunpack.c.l.b16 %v1189
  %v1272 = vunpack.c.h.b16 %v1189
  %v1273 = vunpack.c.l.b16 %v1190
  %v1274 = vunpack.c.l.b16 %v1191
  %v1275 = vunpack.c.h.b16 %v1191
  %v1276 = vunpack.c.l.b16 %v1192
  %v1277 = vunpack.c.l.b16 %v1193
  %v1278 = vunpack.c.h.b16 %v1193
  %v1279 = vunpack.c.l.b16 %v1194
  %v1280 = vunpack.c.l.b16 %v1195
  %v1281 = vunpack.c.h.b16 %v1195
  %v1282 = vunpack.c.l.b16 %v1196
  %v1283 = vunpack.c.l.b16 %v1197
  %v1284 = vunpack.c.h.b16 %v1197
  %v1285 = vunpack.c.l.b16 %v1198
  %v1286 = vunpack.c.l.b16 %v1199
  %v1287 = vunpack.c.h.b16 %v1199
  %v1288 = vunpack.c.l.b16 %v1200
  %v1289 = vunpack.c.l.b16 %v1201
  %v1290 = vunpack.c.h.b16 %v1201
  %v1291 = vunpack.c.l.b16 %v1202
  %v1292 = vunpack.c.l.b16 %v1203
  %v1293 = vunpack.c.h.b16 %v1203
  %v1294 = vunpack.c.l.b16 %v1204
  %v1295 = vunpack.c.l.b16 %v1205
  %v1296 = vunpack.c.h.b16 %v1205
  %v1297 = vunpack.c.l.b16 %v1206
  %v1298 = vunpack.c.l.b16 %v1207
  %v1299 = vunpack.c.h.b16 %v1207
  %v1300 = vunpack.c.l.b16 %v1208
  %v1301 = vunpack.c.l.b16 %v1209
  %v1302 = vunpack.c.h.b16 %v1209
  %v1303 = vunpack.c.l.b16 %v1210
  %v1304 = vunpack.c.l.b16 %v1211
  %v1305 = vunpack.c.h.b16 %v1211
  %v1306 = vunpack.c.l.b16 %v1212
  %v1307 = vunpack.c.l.b16 %v1213
  %v1308 = vunpack.c.h.b16 %v1213
  %v1309 = vunpack.c.l.b16 %v1214
  %v1310 = vunpack.c.l.b16 %v1215
  %v1311 = vunpack.c.h.b16 %v1215
  %v1312 = vunpack.c.l.b16 %v1216
  %v1313 = vunpack.c.l.b16 %v1217
  %v1314 = vunpack.c.h.b16 %v1217
  %v1315 = vunpack.c.l.b16 %v1218
  %v1316 = vpack.c.b16 %v1271, %v1268
  %v1317 = vpack.c.b16 %v1272, %v1269
  %v1318 = vpack.c.b16 %v1273, %v1270
  %v1319 = vpack.c.b16 %v1277, %v1274
  %v1320 = vpack.c.b16 %v1278, %v1275
  %v1321 = vpack.c.b16 %v1279, %v1276
  %v1322 = vpack.c.b16 %v1283, %v1280
  %v1323 = vpack.c.b16 %v1284, %v1281
  %v1324 = vpack.c.b16 %v1285, %v1282
  %v1325 = vpack.c.b16 %v1289, %v1286
  %v1326 = vpack.c.b16 %v1290, %v1287
  %v1327 = vpack.c.b16 %v1291, %v1288
  %v1328 = vpack.c.b16 %v1295, %v1292
  %v1329 = vpack.c.b16 %v1296, %v1293
  %v1330 = vpack.c.b16 %v1297, %v1294
  %v1331 = vpack.c.b16 %v1301, %v1298
  %v1332 = vpack.c.b16 %v1302, %v1299
  %v1333 = vpack.c.b16 %v1303, %v1300
  %v1334 = vpack.c.b16 %v1307, %v1304
  %v1335 = vpack.c.b16 %v1308, %v1305
  %v1336 = vpack.c.b16 %v1309, %v1306
  %v1337 = vpack.c.b16 %v1313, %v1310
  %v1338 = vpack.c.b16 %v1314, %v1311
  %v1339 = vpack.c.b16 %v1315, %v1312
  %1364 = vmatprep.subr.bf16.mxu0 %v1317
  %1365 = vmatpush1.bf16.msra.mxu0 %v1316
  %1366 = vmatprep.subr.bf16.mxu0 %v1320
  %1367 = vmatpush1.bf16.msra.mxu0 %v1319
  %1368 = vmatprep.subr.bf16.mxu0 %v1323
  %1369 = vmatpush1.bf16.msra.mxu0 %v1322
  %1370 = vmatprep.subr.bf16.mxu0 %v1326
  %1371 = vmatpush1.bf16.msra.mxu0 %v1325
  %1372 = vmatprep.subr.bf16.mxu0 %v1329
  %1373 = vmatpush1.bf16.msra.mxu0 %v1328
  %1374 = vmatprep.subr.bf16.mxu0 %v1332
  %1375 = vmatpush1.bf16.msra.mxu0 %v1331
  %1376 = vmatprep.subr.bf16.mxu0 %v1335
  %1377 = vmatpush1.bf16.msra.mxu0 %v1334
  %1378 = vmatprep.subr.bf16.mxu0 %v1338
  %1379 = vmatpush1.bf16.msra.mxu0 %v1337
  %1380 = vmatprep.subr.bf16.mxu0 0
  %1381 = vmatpush1.bf16.msra.mxu0 0
  %1382 = vmatprep.subr.bf16.mxu0 0
  %1383 = vmatpush1.bf16.msra.mxu0 0
  %1384 = vmatprep.subr.bf16.mxu0 0
  %1385 = vmatpush1.bf16.msra.mxu0 0
  %1386 = vmatprep.subr.bf16.mxu0 0
  %1387 = vmatpush1.bf16.msra.mxu0 0
  %1388 = vmatprep.subr.bf16.mxu0 0
  %1389 = vmatpush1.bf16.msra.mxu0 0
  %1390 = vmatprep.subr.bf16.mxu0 0
  %1391 = vmatpush1.bf16.msra.mxu0 0
  %1392 = vmatprep.subr.bf16.mxu0 0
  %1393 = vmatpush1.bf16.msra.mxu0 0
  %1394 = vmatprep.subr.bf16.mxu0 0
  %1395 = vmatpush1.bf16.msra.mxu0 0
  %1396 = vmatprep.mubr.bf16.mxu0 0
  %1397 = vmatmul.mubr.bf16.gmra.mrb[0].mxu0 %v1186
  %v1398 = vpop.f32.mrb[0].mxu0
  %v1399 = vadd.f32 %v1224, %v1398
  %v1400 = vpop.f32.mrb[0].mxu0
  %v1401 = vadd.f32 %v1228, %v1400
  %v1402 = vpop.f32.mrb[0].mxu0
  %v1403 = vpop.f32.mrb[0].mxu0
  %1404 = vdwg.mxu0
  %1405 = vmatprep.subr.bf16.mxu0 0
  %1406 = vmatpush1.bf16.msra.mxu0 %v1318
  %1407 = vmatprep.subr.bf16.mxu0 0
  %1408 = vmatpush1.bf16.msra.mxu0 %v1321
  %1409 = vmatprep.subr.bf16.mxu0 0
  %1410 = vmatpush1.bf16.msra.mxu0 %v1324
  %1411 = vmatprep.subr.bf16.mxu0 0
  %1412 = vmatpush1.bf16.msra.mxu0 %v1327
  %1413 = vmatprep.subr.bf16.mxu0 0
  %1414 = vmatpush1.bf16.msra.mxu0 %v1330
  %1415 = vmatprep.subr.bf16.mxu0 0
  %1416 = vmatpush1.bf16.msra.mxu0 %v1333
  %1417 = vmatprep.subr.bf16.mxu0 0
  %1418 = vmatpush1.bf16.msra.mxu0 %v1336
  %1419 = vmatprep.subr.bf16.mxu0 0
  %1420 = vmatpush1.bf16.msra.mxu0 %v1339
  %1421 = vmatprep.subr.bf16.mxu0 0
  %1422 = vmatpush1.bf16.msra.mxu0 0
  %1423 = vmatprep.subr.bf16.mxu0 0
  %1424 = vmatpush1.bf16.msra.mxu0 0
  %1425 = vmatprep.subr.bf16.mxu0 0
  %1426 = vmatpush1.bf16.msra.mxu0 0
  %1427 = vmatprep.subr.bf16.mxu0 0
  %1428 = vmatpush1.bf16.msra.mxu0 0
  %1429 = vmatprep.subr.bf16.mxu0 0
  %1430 = vmatpush1.bf16.msra.mxu0 0
  %1431 = vmatprep.subr.bf16.mxu0 0
  %1432 = vmatpush1.bf16.msra.mxu0 0
  %1433 = vmatprep.subr.bf16.mxu0 0
  %1434 = vmatpush1.bf16.msra.mxu0 0
  %1435 = vmatprep.subr.bf16.mxu0 0
  %1436 = vmatpush1.bf16.msra.mxu0 0
  %1437 = vmatprep.mubr.bf16.mxu0 0
  %1438 = vmatmul.mubr.bf16.gmra.mrb[0].mxu0 %v1186
  %v1439 = vpop.f32.mrb[0].mxu0
  %v1440 = vadd.f32 %v1232, %v1439
  %v1441 = vpop.f32.mrb[0].mxu0
  %v1442 = vpop.f32.mrb[0].mxu0
  %v1443 = vpop.f32.mrb[0].mxu0
  %1444 = vdwg.mxu0
  %v1445 = vunpack.c.l.bf16 %v1184
  %v1446 = vadd.f32 %v1399, %v1445
  %v1447 = vxor.u32 %v1446, 2147483648
  %v1448 = vmul.f32 %v1447, 1.442695
  %v1449 = vpow.pop %v1448
  %v1450 = vadd.f32 %v1449, 1.0
  %v1451 = vrcp.pop %v1450
  %v1452 = vmul.f32 1.0, %v1451
  %v1454 = vrot.slane %v1184, 4
  %v1456 = vunpack.c.l.bf16 %v1454
  %v1457 = vadd.f32 %v1401, %v1456
  %v1458 = vxor.u32 %v1457, 2147483648
  %v1459 = vmul.f32 %v1458, 1.442695
  %v1460 = vpow.pop %v1459
  %v1461 = vadd.f32 %v1460, 1.0
  %v1462 = vrcp.pop %v1461
  %v1463 = vmul.f32 1.0, %v1462
  %v1464 = vmul.f32 %v1452, %v1440
  %v1465 = vunpack.c.l.bf16 %v1185
  %v1466 = vadd.f32 %v1465, %v1464
  %v1467 = vtanh.pop %v1466
  %v1468 = vsub.f32 %v1180, %v1467
  %v1469 = vmul.f32 %v1463, %v1468
  %v1470 = vadd.f32 %v1467, %v1469
  %s1471 = scalar_lea.vmem %s4, 32
  %1472 = vst [vmem:[%s1471] sm:$0xff] %v1470
  %s1473 = scalar_lea.vmem %s0, 60
  %v1474 = vld [vmem:[%s1473] sm:$0xff]
  %v1475 = vld [vmem:[%s1473 + $0x8] sm:$0xf]
  %v1476 = vpack.c.bf16 %v1470, %v1470
  %v1477 = vld [vmem:[%s2] sm:$0xff]
  %v1478 = vld [vmem:[%s2 + $0x8] sm:$0xf]
  %v1479 = vld [vmem:[%s2 + $0xc] sm:$0xff]
  %v1480 = vld [vmem:[%s2 + $0x14] sm:$0xf]
  %v1481 = vld [vmem:[%s2 + $0x18] sm:$0xff]
  %v1482 = vld [vmem:[%s2 + $0x20] sm:$0xf]
  %v1483 = vld [vmem:[%s2 + $0x24] sm:$0xff]
  %v1484 = vld [vmem:[%s2 + $0x2c] sm:$0xf]
  %v1485 = vld [vmem:[%s2 + $0x30] sm:$0xff]
  %v1486 = vld [vmem:[%s2 + $0x38] sm:$0xf]
  %v1487 = vld [vmem:[%s2 + $0x3c] sm:$0xff]
  %v1488 = vld [vmem:[%s2 + $0x44] sm:$0xf]
  %v1489 = vld [vmem:[%s2 + $0x48] sm:$0xff]
  %v1490 = vld [vmem:[%s2 + $0x50] sm:$0xf]
  %v1491 = vld [vmem:[%s2 + $0x54] sm:$0xff]
  %v1492 = vld [vmem:[%s2 + $0x5c] sm:$0xf]
  %v1493 = vld [vmem:[%s2 + $0x60] sm:$0xff]
  %v1494 = vld [vmem:[%s2 + $0x68] sm:$0xf]
  %v1495 = vld [vmem:[%s2 + $0x6c] sm:$0xff]
  %v1496 = vld [vmem:[%s2 + $0x74] sm:$0xf]
  %v1497 = vld [vmem:[%s2 + $0x78] sm:$0xff]
  %v1498 = vld [vmem:[%s2 + $0x80] sm:$0xf]
  %v1499 = vld [vmem:[%s2 + $0x84] sm:$0xff]
  %v1500 = vld [vmem:[%s2 + $0x8c] sm:$0xf]
  %v1501 = vld [vmem:[%s2 + $0x90] sm:$0xff]
  %v1502 = vld [vmem:[%s2 + $0x98] sm:$0xf]
  %v1503 = vld [vmem:[%s2 + $0x9c] sm:$0xff]
  %v1504 = vld [vmem:[%s2 + $0xa4] sm:$0xf]
  %v1505 = vld [vmem:[%s2 + $0xa8] sm:$0xff]
  %v1506 = vld [vmem:[%s2 + $0xb0] sm:$0xf]
  %v1507 = vld [vmem:[%s2 + $0xb4] sm:$0xff]
  %v1508 = vld [vmem:[%s2 + $0xbc] sm:$0xf]
  %v1509 = vld [vmem:[%s3] sm:$0x7]
  %v1511 = vlaneseq
  %v1512 = vshrl.u32 %v1511, 7
  %v1513 = vsub.s32 0, %v1512
  %v1514 = vrot.slane %v1509, %v1513
  %v1515 = vlaneseq
  %v1516 = vshrl.u32 %v1515, 7
  %v1517 = vsub.s32 1, %v1516
  %v1518 = vrot.slane %v1509, %v1517
  %v1519 = vlaneseq
  %v1520 = vshrl.u32 %v1519, 7
  %v1521 = vsub.s32 2, %v1520
  %v1522 = vrot.slane %v1509, %v1521
  %v1558 = vunpack.c.l.b16 %v1477
  %v1559 = vunpack.c.h.b16 %v1477
  %v1560 = vunpack.c.l.b16 %v1478
  %v1561 = vunpack.c.l.b16 %v1479
  %v1562 = vunpack.c.h.b16 %v1479
  %v1563 = vunpack.c.l.b16 %v1480
  %v1564 = vunpack.c.l.b16 %v1481
  %v1565 = vunpack.c.h.b16 %v1481
  %v1566 = vunpack.c.l.b16 %v1482
  %v1567 = vunpack.c.l.b16 %v1483
  %v1568 = vunpack.c.h.b16 %v1483
  %v1569 = vunpack.c.l.b16 %v1484
  %v1570 = vunpack.c.l.b16 %v1485
  %v1571 = vunpack.c.h.b16 %v1485
  %v1572 = vunpack.c.l.b16 %v1486
  %v1573 = vunpack.c.l.b16 %v1487
  %v1574 = vunpack.c.h.b16 %v1487
  %v1575 = vunpack.c.l.b16 %v1488
  %v1576 = vunpack.c.l.b16 %v1489
  %v1577 = vunpack.c.h.b16 %v1489
  %v1578 = vunpack.c.l.b16 %v1490
  %v1579 = vunpack.c.l.b16 %v1491
  %v1580 = vunpack.c.h.b16 %v1491
  %v1581 = vunpack.c.l.b16 %v1492
  %v1582 = vunpack.c.l.b16 %v1493
  %v1583 = vunpack.c.h.b16 %v1493
  %v1584 = vunpack.c.l.b16 %v1494
  %v1585 = vunpack.c.l.b16 %v1495
  %v1586 = vunpack.c.h.b16 %v1495
  %v1587 = vunpack.c.l.b16 %v1496
  %v1588 = vunpack.c.l.b16 %v1497
  %v1589 = vunpack.c.h.b16 %v1497
  %v1590 = vunpack.c.l.b16 %v1498
  %v1591 = vunpack.c.l.b16 %v1499
  %v1592 = vunpack.c.h.b16 %v1499
  %v1593 = vunpack.c.l.b16 %v1500
  %v1594 = vunpack.c.l.b16 %v1501
  %v1595 = vunpack.c.h.b16 %v1501
  %v1596 = vunpack.c.l.b16 %v1502
  %v1597 = vunpack.c.l.b16 %v1503
  %v1598 = vunpack.c.h.b16 %v1503
  %v1599 = vunpack.c.l.b16 %v1504
  %v1600 = vunpack.c.l.b16 %v1505
  %v1601 = vunpack.c.h.b16 %v1505
  %v1602 = vunpack.c.l.b16 %v1506
  %v1603 = vunpack.c.l.b16 %v1507
  %v1604 = vunpack.c.h.b16 %v1507
  %v1605 = vunpack.c.l.b16 %v1508
  %v1606 = vpack.c.b16 %v1561, %v1558
  %v1607 = vpack.c.b16 %v1562, %v1559
  %v1608 = vpack.c.b16 %v1563, %v1560
  %v1609 = vpack.c.b16 %v1567, %v1564
  %v1610 = vpack.c.b16 %v1568, %v1565
  %v1611 = vpack.c.b16 %v1569, %v1566
  %v1612 = vpack.c.b16 %v1573, %v1570
  %v1613 = vpack.c.b16 %v1574, %v1571
  %v1614 = vpack.c.b16 %v1575, %v1572
  %v1615 = vpack.c.b16 %v1579, %v1576
  %v1616 = vpack.c.b16 %v1580, %v1577
  %v1617 = vpack.c.b16 %v1581, %v1578
  %v1618 = vpack.c.b16 %v1585, %v1582
  %v1619 = vpack.c.b16 %v1586, %v1583
  %v1620 = vpack.c.b16 %v1587, %v1584
  %v1621 = vpack.c.b16 %v1591, %v1588
  %v1622 = vpack.c.b16 %v1592, %v1589
  %v1623 = vpack.c.b16 %v1593, %v1590
  %v1624 = vpack.c.b16 %v1597, %v1594
  %v1625 = vpack.c.b16 %v1598, %v1595
  %v1626 = vpack.c.b16 %v1599, %v1596
  %v1627 = vpack.c.b16 %v1603, %v1600
  %v1628 = vpack.c.b16 %v1604, %v1601
  %v1629 = vpack.c.b16 %v1605, %v1602
  %1654 = vmatprep.subr.bf16.mxu0 %v1607
  %1655 = vmatpush1.bf16.msra.mxu0 %v1606
  %1656 = vmatprep.subr.bf16.mxu0 %v1610
  %1657 = vmatpush1.bf16.msra.mxu0 %v1609
  %1658 = vmatprep.subr.bf16.mxu0 %v1613
  %1659 = vmatpush1.bf16.msra.mxu0 %v1612
  %1660 = vmatprep.subr.bf16.mxu0 %v1616
  %1661 = vmatpush1.bf16.msra.mxu0 %v1615
  %1662 = vmatprep.subr.bf16.mxu0 %v1619
  %1663 = vmatpush1.bf16.msra.mxu0 %v1618
  %1664 = vmatprep.subr.bf16.mxu0 %v1622
  %1665 = vmatpush1.bf16.msra.mxu0 %v1621
  %1666 = vmatprep.subr.bf16.mxu0 %v1625
  %1667 = vmatpush1.bf16.msra.mxu0 %v1624
  %1668 = vmatprep.subr.bf16.mxu0 %v1628
  %1669 = vmatpush1.bf16.msra.mxu0 %v1627
  %1670 = vmatprep.subr.bf16.mxu0 0
  %1671 = vmatpush1.bf16.msra.mxu0 0
  %1672 = vmatprep.subr.bf16.mxu0 0
  %1673 = vmatpush1.bf16.msra.mxu0 0
  %1674 = vmatprep.subr.bf16.mxu0 0
  %1675 = vmatpush1.bf16.msra.mxu0 0
  %1676 = vmatprep.subr.bf16.mxu0 0
  %1677 = vmatpush1.bf16.msra.mxu0 0
  %1678 = vmatprep.subr.bf16.mxu0 0
  %1679 = vmatpush1.bf16.msra.mxu0 0
  %1680 = vmatprep.subr.bf16.mxu0 0
  %1681 = vmatpush1.bf16.msra.mxu0 0
  %1682 = vmatprep.subr.bf16.mxu0 0
  %1683 = vmatpush1.bf16.msra.mxu0 0
  %1684 = vmatprep.subr.bf16.mxu0 0
  %1685 = vmatpush1.bf16.msra.mxu0 0
  %1686 = vmatprep.mubr.bf16.mxu0 0
  %1687 = vmatmul.mubr.bf16.gmra.mrb[0].mxu0 %v1476
  %v1688 = vpop.f32.mrb[0].mxu0
  %v1689 = vadd.f32 %v1514, %v1688
  %v1690 = vpop.f32.mrb[0].mxu0
  %v1691 = vadd.f32 %v1518, %v1690
  %v1692 = vpop.f32.mrb[0].mxu0
  %v1693 = vpop.f32.mrb[0].mxu0
  %1694 = vdwg.mxu0
  %1695 = vmatprep.subr.bf16.mxu0 0
  %1696 = vmatpush1.bf16.msra.mxu0 %v1608
  %1697 = vmatprep.subr.bf16.mxu0 0
  %1698 = vmatpush1.bf16.msra.mxu0 %v1611
  %1699 = vmatprep.subr.bf16.mxu0 0
  %1700 = vmatpush1.bf16.msra.mxu0 %v1614
  %1701 = vmatprep.subr.bf16.mxu0 0
  %1702 = vmatpush1.bf16.msra.mxu0 %v1617
  %1703 = vmatprep.subr.bf16.mxu0 0
  %1704 = vmatpush1.bf16.msra.mxu0 %v1620
  %1705 = vmatprep.subr.bf16.mxu0 0
  %1706 = vmatpush1.bf16.msra.mxu0 %v1623
  %1707 = vmatprep.subr.bf16.mxu0 0
  %1708 = vmatpush1.bf16.msra.mxu0 %v1626
  %1709 = vmatprep.subr.bf16.mxu0 0
  %1710 = vmatpush1.bf16.msra.mxu0 %v1629
  %1711 = vmatprep.subr.bf16.mxu0 0
  %1712 = vmatpush1.bf16.msra.mxu0 0
  %1713 = vmatprep.subr.bf16.mxu0 0
  %1714 = vmatpush1.bf16.msra.mxu0 0
  %1715 = vmatprep.subr.bf16.mxu0 0
  %1716 = vmatpush1.bf16.msra.mxu0 0
  %1717 = vmatprep.subr.bf16.mxu0 0
  %1718 = vmatpush1.bf16.msra.mxu0 0
  %1719 = vmatprep.subr.bf16.mxu0 0
  %1720 = vmatpush1.bf16.msra.mxu0 0
  %1721 = vmatprep.subr.bf16.mxu0 0
  %1722 = vmatpush1.bf16.msra.mxu0 0
  %1723 = vmatprep.subr.bf16.mxu0 0
  %1724 = vmatpush1.bf16.msra.mxu0 0
  %1725 = vmatprep.subr.bf16.mxu0 0
  %1726 = vmatpush1.bf16.msra.mxu0 0
  %1727 = vmatprep.mubr.bf16.mxu0 0
  %1728 = vmatmul.mubr.bf16.gmra.mrb[0].mxu0 %v1476
  %v1729 = vpop.f32.mrb[0].mxu0
  %v1730 = vadd.f32 %v1522, %v1729
  %v1731 = vpop.f32.mrb[0].mxu0
  %v1732 = vpop.f32.mrb[0].mxu0
  %v1733 = vpop.f32.mrb[0].mxu0
  %1734 = vdwg.mxu0
  %v1735 = vunpack.c.l.bf16 %v1474
  %v1736 = vadd.f32 %v1689, %v1735
  %v1737 = vxor.u32 %v1736, 2147483648
  %v1738 = vmul.f32 %v1737, 1.442695
  %v1739 = vpow.pop %v1738
  %v1740 = vadd.f32 %v1739, 1.0
  %v1741 = vrcp.pop %v1740
  %v1742 = vmul.f32 1.0, %v1741
  %v1744 = vrot.slane %v1474, 4
  %v1746 = vunpack.c.l.bf16 %v1744
  %v1747 = vadd.f32 %v1691, %v1746
  %v1748 = vxor.u32 %v1747, 2147483648
  %v1749 = vmul.f32 %v1748, 1.442695
  %v1750 = vpow.pop %v1749
  %v1751 = vadd.f32 %v1750, 1.0
  %v1752 = vrcp.pop %v1751
  %v1753 = vmul.f32 1.0, %v1752
  %v1754 = vmul.f32 %v1742, %v1730
  %v1755 = vunpack.c.l.bf16 %v1475
  %v1756 = vadd.f32 %v1755, %v1754
  %v1757 = vtanh.pop %v1756
  %v1758 = vsub.f32 %v1470, %v1757
  %v1759 = vmul.f32 %v1753, %v1758
  %v1760 = vadd.f32 %v1757, %v1759
  %s1761 = scalar_lea.vmem %s4, 40
  %1762 = vst [vmem:[%s1761] sm:$0xff] %v1760
  %s1763 = scalar_lea.vmem %s0, 72
  %v1764 = vld [vmem:[%s1763] sm:$0xff]
  %v1765 = vld [vmem:[%s1763 + $0x8] sm:$0xf]
  %v1766 = vpack.c.bf16 %v1760, %v1760
  %v1767 = vld [vmem:[%s2] sm:$0xff]
  %v1768 = vld [vmem:[%s2 + $0x8] sm:$0xf]
  %v1769 = vld [vmem:[%s2 + $0xc] sm:$0xff]
  %v1770 = vld [vmem:[%s2 + $0x14] sm:$0xf]
  %v1771 = vld [vmem:[%s2 + $0x18] sm:$0xff]
  %v1772 = vld [vmem:[%s2 + $0x20] sm:$0xf]
  %v1773 = vld [vmem:[%s2 + $0x24] sm:$0xff]
  %v1774 = vld [vmem:[%s2 + $0x2c] sm:$0xf]
  %v1775 = vld [vmem:[%s2 + $0x30] sm:$0xff]
  %v1776 = vld [vmem:[%s2 + $0x38] sm:$0xf]
  %v1777 = vld [vmem:[%s2 + $0x3c] sm:$0xff]
  %v1778 = vld [vmem:[%s2 + $0x44] sm:$0xf]
  %v1779 = vld [vmem:[%s2 + $0x48] sm:$0xff]
  %v1780 = vld [vmem:[%s2 + $0x50] sm:$0xf]
  %v1781 = vld [vmem:[%s2 + $0x54] sm:$0xff]
  %v1782 = vld [vmem:[%s2 + $0x5c] sm:$0xf]
  %v1783 = vld [vmem:[%s2 + $0x60] sm:$0xff]
  %v1784 = vld [vmem:[%s2 + $0x68] sm:$0xf]
  %v1785 = vld [vmem:[%s2 + $0x6c] sm:$0xff]
  %v1786 = vld [vmem:[%s2 + $0x74] sm:$0xf]
  %v1787 = vld [vmem:[%s2 + $0x78] sm:$0xff]
  %v1788 = vld [vmem:[%s2 + $0x80] sm:$0xf]
  %v1789 = vld [vmem:[%s2 + $0x84] sm:$0xff]
  %v1790 = vld [vmem:[%s2 + $0x8c] sm:$0xf]
  %v1791 = vld [vmem:[%s2 + $0x90] sm:$0xff]
  %v1792 = vld [vmem:[%s2 + $0x98] sm:$0xf]
  %v1793 = vld [vmem:[%s2 + $0x9c] sm:$0xff]
  %v1794 = vld [vmem:[%s2 + $0xa4] sm:$0xf]
  %v1795 = vld [vmem:[%s2 + $0xa8] sm:$0xff]
  %v1796 = vld [vmem:[%s2 + $0xb0] sm:$0xf]
  %v1797 = vld [vmem:[%s2 + $0xb4] sm:$0xff]
  %v1798 = vld [vmem:[%s2 + $0xbc] sm:$0xf]
  %v1799 = vld [vmem:[%s3] sm:$0x7]
  %v1801 = vlaneseq
  %v1802 = vshrl.u32 %v1801, 7
  %v1803 = vsub.s32 0, %v1802
  %v1804 = vrot.slane %v1799, %v1803
  %v1805 = vlaneseq
  %v1806 = vshrl.u32 %v1805, 7
  %v1807 = vsub.s32 1, %v1806
  %v1808 = vrot.slane %v1799, %v1807
  %v1809 = vlaneseq
  %v1810 = vshrl.u32 %v1809, 7
  %v1811 = vsub.s32 2, %v1810
  %v1812 = vrot.slane %v1799, %v1811
  %v1848 = vunpack.c.l.b16 %v1767
  %v1849 = vunpack.c.h.b16 %v1767
  %v1850 = vunpack.c.l.b16 %v1768
  %v1851 = vunpack.c.l.b16 %v1769
  %v1852 = vunpack.c.h.b16 %v1769
  %v1853 = vunpack.c.l.b16 %v1770
  %v1854 = vunpack.c.l.b16 %v1771
  %v1855 = vunpack.c.h.b16 %v1771
  %v1856 = vunpack.c.l.b16 %v1772
  %v1857 = vunpack.c.l.b16 %v1773
  %v1858 = vunpack.c.h.b16 %v1773
  %v1859 = vunpack.c.l.b16 %v1774
  %v1860 = vunpack.c.l.b16 %v1775
  %v1861 = vunpack.c.h.b16 %v1775
  %v1862 = vunpack.c.l.b16 %v1776
  %v1863 = vunpack.c.l.b16 %v1777
  %v1864 = vunpack.c.h.b16 %v1777
  %v1865 = vunpack.c.l.b16 %v1778
  %v1866 = vunpack.c.l.b16 %v1779
  %v1867 = vunpack.c.h.b16 %v1779
  %v1868 = vunpack.c.l.b16 %v1780
  %v1869 = vunpack.c.l.b16 %v1781
  %v1870 = vunpack.c.h.b16 %v1781
  %v1871 = vunpack.c.l.b16 %v1782
  %v1872 = vunpack.c.l.b16 %v1783
  %v1873 = vunpack.c.h.b16 %v1783
  %v1874 = vunpack.c.l.b16 %v1784
  %v1875 = vunpack.c.l.b16 %v1785
  %v1876 = vunpack.c.h.b16 %v1785
  %v1877 = vunpack.c.l.b16 %v1786
  %v1878 = vunpack.c.l.b16 %v1787
  %v1879 = vunpack.c.h.b16 %v1787
  %v1880 = vunpack.c.l.b16 %v1788
  %v1881 = vunpack.c.l.b16 %v1789
  %v1882 = vunpack.c.h.b16 %v1789
  %v1883 = vunpack.c.l.b16 %v1790
  %v1884 = vunpack.c.l.b16 %v1791
  %v1885 = vunpack.c.h.b16 %v1791
  %v1886 = vunpack.c.l.b16 %v1792
  %v1887 = vunpack.c.l.b16 %v1793
  %v1888 = vunpack.c.h.b16 %v1793
  %v1889 = vunpack.c.l.b16 %v1794
  %v1890 = vunpack.c.l.b16 %v1795
  %v1891 = vunpack.c.h.b16 %v1795
  %v1892 = vunpack.c.l.b16 %v1796
  %v1893 = vunpack.c.l.b16 %v1797
  %v1894 = vunpack.c.h.b16 %v1797
  %v1895 = vunpack.c.l.b16 %v1798
  %v1896 = vpack.c.b16 %v1851, %v1848
  %v1897 = vpack.c.b16 %v1852, %v1849
  %v1898 = vpack.c.b16 %v1853, %v1850
  %v1899 = vpack.c.b16 %v1857, %v1854
  %v1900 = vpack.c.b16 %v1858, %v1855
  %v1901 = vpack.c.b16 %v1859, %v1856
  %v1902 = vpack.c.b16 %v1863, %v1860
  %v1903 = vpack.c.b16 %v1864, %v1861
  %v1904 = vpack.c.b16 %v1865, %v1862
  %v1905 = vpack.c.b16 %v1869, %v1866
  %v1906 = vpack.c.b16 %v1870, %v1867
  %v1907 = vpack.c.b16 %v1871, %v1868
  %v1908 = vpack.c.b16 %v1875, %v1872
  %v1909 = vpack.c.b16 %v1876, %v1873
  %v1910 = vpack.c.b16 %v1877, %v1874
  %v1911 = vpack.c.b16 %v1881, %v1878
  %v1912 = vpack.c.b16 %v1882, %v1879
  %v1913 = vpack.c.b16 %v1883, %v1880
  %v1914 = vpack.c.b16 %v1887, %v1884
  %v1915 = vpack.c.b16 %v1888, %v1885
  %v1916 = vpack.c.b16 %v1889, %v1886
  %v1917 = vpack.c.b16 %v1893, %v1890
  %v1918 = vpack.c.b16 %v1894, %v1891
  %v1919 = vpack.c.b16 %v1895, %v1892
  %1944 = vmatprep.subr.bf16.mxu0 %v1897
  %1945 = vmatpush1.bf16.msra.mxu0 %v1896
  %1946 = vmatprep.subr.bf16.mxu0 %v1900
  %1947 = vmatpush1.bf16.msra.mxu0 %v1899
  %1948 = vmatprep.subr.bf16.mxu0 %v1903
  %1949 = vmatpush1.bf16.msra.mxu0 %v1902
  %1950 = vmatprep.subr.bf16.mxu0 %v1906
  %1951 = vmatpush1.bf16.msra.mxu0 %v1905
  %1952 = vmatprep.subr.bf16.mxu0 %v1909
  %1953 = vmatpush1.bf16.msra.mxu0 %v1908
  %1954 = vmatprep.subr.bf16.mxu0 %v1912
  %1955 = vmatpush1.bf16.msra.mxu0 %v1911
  %1956 = vmatprep.subr.bf16.mxu0 %v1915
  %1957 = vmatpush1.bf16.msra.mxu0 %v1914
  %1958 = vmatprep.subr.bf16.mxu0 %v1918
  %1959 = vmatpush1.bf16.msra.mxu0 %v1917
  %1960 = vmatprep.subr.bf16.mxu0 0
  %1961 = vmatpush1.bf16.msra.mxu0 0
  %1962 = vmatprep.subr.bf16.mxu0 0
  %1963 = vmatpush1.bf16.msra.mxu0 0
  %1964 = vmatprep.subr.bf16.mxu0 0
  %1965 = vmatpush1.bf16.msra.mxu0 0
  %1966 = vmatprep.subr.bf16.mxu0 0
  %1967 = vmatpush1.bf16.msra.mxu0 0
  %1968 = vmatprep.subr.bf16.mxu0 0
  %1969 = vmatpush1.bf16.msra.mxu0 0
  %1970 = vmatprep.subr.bf16.mxu0 0
  %1971 = vmatpush1.bf16.msra.mxu0 0
  %1972 = vmatprep.subr.bf16.mxu0 0
  %1973 = vmatpush1.bf16.msra.mxu0 0
  %1974 = vmatprep.subr.bf16.mxu0 0
  %1975 = vmatpush1.bf16.msra.mxu0 0
  %1976 = vmatprep.mubr.bf16.mxu0 0
  %1977 = vmatmul.mubr.bf16.gmra.mrb[0].mxu0 %v1766
  %v1978 = vpop.f32.mrb[0].mxu0
  %v1979 = vadd.f32 %v1804, %v1978
  %v1980 = vpop.f32.mrb[0].mxu0
  %v1981 = vadd.f32 %v1808, %v1980
  %v1982 = vpop.f32.mrb[0].mxu0
  %v1983 = vpop.f32.mrb[0].mxu0
  %1984 = vdwg.mxu0
  %1985 = vmatprep.subr.bf16.mxu0 0
  %1986 = vmatpush1.bf16.msra.mxu0 %v1898
  %1987 = vmatprep.subr.bf16.mxu0 0
  %1988 = vmatpush1.bf16.msra.mxu0 %v1901
  %1989 = vmatprep.subr.bf16.mxu0 0
  %1990 = vmatpush1.bf16.msra.mxu0 %v1904
  %1991 = vmatprep.subr.bf16.mxu0 0
  %1992 = vmatpush1.bf16.msra.mxu0 %v1907
  %1993 = vmatprep.subr.bf16.mxu0 0
  %1994 = vmatpush1.bf16.msra.mxu0 %v1910
  %1995 = vmatprep.subr.bf16.mxu0 0
  %1996 = vmatpush1.bf16.msra.mxu0 %v1913
  %1997 = vmatprep.subr.bf16.mxu0 0
  %1998 = vmatpush1.bf16.msra.mxu0 %v1916
  %1999 = vmatprep.subr.bf16.mxu0 0
  %2000 = vmatpush1.bf16.msra.mxu0 %v1919
  %2001 = vmatprep.subr.bf16.mxu0 0
  %2002 = vmatpush1.bf16.msra.mxu0 0
  %2003 = vmatprep.subr.bf16.mxu0 0
  %2004 = vmatpush1.bf16.msra.mxu0 0
  %2005 = vmatprep.subr.bf16.mxu0 0
  %2006 = vmatpush1.bf16.msra.mxu0 0
  %2007 = vmatprep.subr.bf16.mxu0 0
  %2008 = vmatpush1.bf16.msra.mxu0 0
  %2009 = vmatprep.subr.bf16.mxu0 0
  %2010 = vmatpush1.bf16.msra.mxu0 0
  %2011 = vmatprep.subr.bf16.mxu0 0
  %2012 = vmatpush1.bf16.msra.mxu0 0
  %2013 = vmatprep.subr.bf16.mxu0 0
  %2014 = vmatpush1.bf16.msra.mxu0 0
  %2015 = vmatprep.subr.bf16.mxu0 0
  %2016 = vmatpush1.bf16.msra.mxu0 0
  %2017 = vmatprep.mubr.bf16.mxu0 0
  %2018 = vmatmul.mubr.bf16.gmra.mrb[0].mxu0 %v1766
  %v2019 = vpop.f32.mrb[0].mxu0
  %v2020 = vadd.f32 %v1812, %v2019
  %v2021 = vpop.f32.mrb[0].mxu0
  %v2022 = vpop.f32.mrb[0].mxu0
  %v2023 = vpop.f32.mrb[0].mxu0
  %2024 = vdwg.mxu0
  %v2025 = vunpack.c.l.bf16 %v1764
  %v2026 = vadd.f32 %v1979, %v2025
  %v2027 = vxor.u32 %v2026, 2147483648
  %v2028 = vmul.f32 %v2027, 1.442695
  %v2029 = vpow.pop %v2028
  %v2030 = vadd.f32 %v2029, 1.0
  %v2031 = vrcp.pop %v2030
  %v2032 = vmul.f32 1.0, %v2031
  %v2034 = vrot.slane %v1764, 4
  %v2036 = vunpack.c.l.bf16 %v2034
  %v2037 = vadd.f32 %v1981, %v2036
  %v2038 = vxor.u32 %v2037, 2147483648
  %v2039 = vmul.f32 %v2038, 1.442695
  %v2040 = vpow.pop %v2039
  %v2041 = vadd.f32 %v2040, 1.0
  %v2042 = vrcp.pop %v2041
  %v2043 = vmul.f32 1.0, %v2042
  %v2044 = vmul.f32 %v2032, %v2020
  %v2045 = vunpack.c.l.bf16 %v1765
  %v2046 = vadd.f32 %v2045, %v2044
  %v2047 = vtanh.pop %v2046
  %v2048 = vsub.f32 %v1760, %v2047
  %v2049 = vmul.f32 %v2043, %v2048
  %v2050 = vadd.f32 %v2047, %v2049
  %s2051 = scalar_lea.vmem %s4, 48
  %2052 = vst [vmem:[%s2051] sm:$0xff] %v2050
  %s2053 = scalar_lea.vmem %s0, 84
  %v2054 = vld [vmem:[%s2053] sm:$0xff]
  %v2055 = vld [vmem:[%s2053 + $0x8] sm:$0xf]
  %v2056 = vpack.c.bf16 %v2050, %v2050
  %v2057 = vld [vmem:[%s2] sm:$0xff]
  %v2058 = vld [vmem:[%s2 + $0x8] sm:$0xf]
  %v2059 = vld [vmem:[%s2 + $0xc] sm:$0xff]
  %v2060 = vld [vmem:[%s2 + $0x14] sm:$0xf]
  %v2061 = vld [vmem:[%s2 + $0x18] sm:$0xff]
  %v2062 = vld [vmem:[%s2 + $0x20] sm:$0xf]
  %v2063 = vld [vmem:[%s2 + $0x24] sm:$0xff]
  %v2064 = vld [vmem:[%s2 + $0x2c] sm:$0xf]
  %v2065 = vld [vmem:[%s2 + $0x30] sm:$0xff]
  %v2066 = vld [vmem:[%s2 + $0x38] sm:$0xf]
  %v2067 = vld [vmem:[%s2 + $0x3c] sm:$0xff]
  %v2068 = vld [vmem:[%s2 + $0x44] sm:$0xf]
  %v2069 = vld [vmem:[%s2 + $0x48] sm:$0xff]
  %v2070 = vld [vmem:[%s2 + $0x50] sm:$0xf]
  %v2071 = vld [vmem:[%s2 + $0x54] sm:$0xff]
  %v2072 = vld [vmem:[%s2 + $0x5c] sm:$0xf]
  %v2073 = vld [vmem:[%s2 + $0x60] sm:$0xff]
  %v2074 = vld [vmem:[%s2 + $0x68] sm:$0xf]
  %v2075 = vld [vmem:[%s2 + $0x6c] sm:$0xff]
  %v2076 = vld [vmem:[%s2 + $0x74] sm:$0xf]
  %v2077 = vld [vmem:[%s2 + $0x78] sm:$0xff]
  %v2078 = vld [vmem:[%s2 + $0x80] sm:$0xf]
  %v2079 = vld [vmem:[%s2 + $0x84] sm:$0xff]
  %v2080 = vld [vmem:[%s2 + $0x8c] sm:$0xf]
  %v2081 = vld [vmem:[%s2 + $0x90] sm:$0xff]
  %v2082 = vld [vmem:[%s2 + $0x98] sm:$0xf]
  %v2083 = vld [vmem:[%s2 + $0x9c] sm:$0xff]
  %v2084 = vld [vmem:[%s2 + $0xa4] sm:$0xf]
  %v2085 = vld [vmem:[%s2 + $0xa8] sm:$0xff]
  %v2086 = vld [vmem:[%s2 + $0xb0] sm:$0xf]
  %v2087 = vld [vmem:[%s2 + $0xb4] sm:$0xff]
  %v2088 = vld [vmem:[%s2 + $0xbc] sm:$0xf]
  %v2089 = vld [vmem:[%s3] sm:$0x7]
  %v2091 = vlaneseq
  %v2092 = vshrl.u32 %v2091, 7
  %v2093 = vsub.s32 0, %v2092
  %v2094 = vrot.slane %v2089, %v2093
  %v2095 = vlaneseq
  %v2096 = vshrl.u32 %v2095, 7
  %v2097 = vsub.s32 1, %v2096
  %v2098 = vrot.slane %v2089, %v2097
  %v2099 = vlaneseq
  %v2100 = vshrl.u32 %v2099, 7
  %v2101 = vsub.s32 2, %v2100
  %v2102 = vrot.slane %v2089, %v2101
  %v2138 = vunpack.c.l.b16 %v2057
  %v2139 = vunpack.c.h.b16 %v2057
  %v2140 = vunpack.c.l.b16 %v2058
  %v2141 = vunpack.c.l.b16 %v2059
  %v2142 = vunpack.c.h.b16 %v2059
  %v2143 = vunpack.c.l.b16 %v2060
  %v2144 = vunpack.c.l.b16 %v2061
  %v2145 = vunpack.c.h.b16 %v2061
  %v2146 = vunpack.c.l.b16 %v2062
  %v2147 = vunpack.c.l.b16 %v2063
  %v2148 = vunpack.c.h.b16 %v2063
  %v2149 = vunpack.c.l.b16 %v2064
  %v2150 = vunpack.c.l.b16 %v2065
  %v2151 = vunpack.c.h.b16 %v2065
  %v2152 = vunpack.c.l.b16 %v2066
  %v2153 = vunpack.c.l.b16 %v2067
  %v2154 = vunpack.c.h.b16 %v2067
  %v2155 = vunpack.c.l.b16 %v2068
  %v2156 = vunpack.c.l.b16 %v2069
  %v2157 = vunpack.c.h.b16 %v2069
  %v2158 = vunpack.c.l.b16 %v2070
  %v2159 = vunpack.c.l.b16 %v2071
  %v2160 = vunpack.c.h.b16 %v2071
  %v2161 = vunpack.c.l.b16 %v2072
  %v2162 = vunpack.c.l.b16 %v2073
  %v2163 = vunpack.c.h.b16 %v2073
  %v2164 = vunpack.c.l.b16 %v2074
  %v2165 = vunpack.c.l.b16 %v2075
  %v2166 = vunpack.c.h.b16 %v2075
  %v2167 = vunpack.c.l.b16 %v2076
  %v2168 = vunpack.c.l.b16 %v2077
  %v2169 = vunpack.c.h.b16 %v2077
  %v2170 = vunpack.c.l.b16 %v2078
  %v2171 = vunpack.c.l.b16 %v2079
  %v2172 = vunpack.c.h.b16 %v2079
  %v2173 = vunpack.c.l.b16 %v2080
  %v2174 = vunpack.c.l.b16 %v2081
  %v2175 = vunpack.c.h.b16 %v2081
  %v2176 = vunpack.c.l.b16 %v2082
  %v2177 = vunpack.c.l.b16 %v2083
  %v2178 = vunpack.c.h.b16 %v2083
  %v2179 = vunpack.c.l.b16 %v2084
  %v2180 = vunpack.c.l.b16 %v2085
  %v2181 = vunpack.c.h.b16 %v2085
  %v2182 = vunpack.c.l.b16 %v2086
  %v2183 = vunpack.c.l.b16 %v2087
  %v2184 = vunpack.c.h.b16 %v2087
  %v2185 = vunpack.c.l.b16 %v2088
  %v2186 = vpack.c.b16 %v2141, %v2138
  %v2187 = vpack.c.b16 %v2142, %v2139
  %v2188 = vpack.c.b16 %v2143, %v2140
  %v2189 = vpack.c.b16 %v2147, %v2144
  %v2190 = vpack.c.b16 %v2148, %v2145
  %v2191 = vpack.c.b16 %v2149, %v2146
  %v2192 = vpack.c.b16 %v2153, %v2150
  %v2193 = vpack.c.b16 %v2154, %v2151
  %v2194 = vpack.c.b16 %v2155, %v2152
  %v2195 = vpack.c.b16 %v2159, %v2156
  %v2196 = vpack.c.b16 %v2160, %v2157
  %v2197 = vpack.c.b16 %v2161, %v2158
  %v2198 = vpack.c.b16 %v2165, %v2162
  %v2199 = vpack.c.b16 %v2166, %v2163
  %v2200 = vpack.c.b16 %v2167, %v2164
  %v2201 = vpack.c.b16 %v2171, %v2168
  %v2202 = vpack.c.b16 %v2172, %v2169
  %v2203 = vpack.c.b16 %v2173, %v2170
  %v2204 = vpack.c.b16 %v2177, %v2174
  %v2205 = vpack.c.b16 %v2178, %v2175
  %v2206 = vpack.c.b16 %v2179, %v2176
  %v2207 = vpack.c.b16 %v2183, %v2180
  %v2208 = vpack.c.b16 %v2184, %v2181
  %v2209 = vpack.c.b16 %v2185, %v2182
  %2234 = vmatprep.subr.bf16.mxu0 %v2187
  %2235 = vmatpush1.bf16.msra.mxu0 %v2186
  %2236 = vmatprep.subr.bf16.mxu0 %v2190
  %2237 = vmatpush1.bf16.msra.mxu0 %v2189
  %2238 = vmatprep.subr.bf16.mxu0 %v2193
  %2239 = vmatpush1.bf16.msra.mxu0 %v2192
  %2240 = vmatprep.subr.bf16.mxu0 %v2196
  %2241 = vmatpush1.bf16.msra.mxu0 %v2195
  %2242 = vmatprep.subr.bf16.mxu0 %v2199
  %2243 = vmatpush1.bf16.msra.mxu0 %v2198
  %2244 = vmatprep.subr.bf16.mxu0 %v2202
  %2245 = vmatpush1.bf16.msra.mxu0 %v2201
  %2246 = vmatprep.subr.bf16.mxu0 %v2205
  %2247 = vmatpush1.bf16.msra.mxu0 %v2204
  %2248 = vmatprep.subr.bf16.mxu0 %v2208
  %2249 = vmatpush1.bf16.msra.mxu0 %v2207
  %2250 = vmatprep.subr.bf16.mxu0 0
  %2251 = vmatpush1.bf16.msra.mxu0 0
  %2252 = vmatprep.subr.bf16.mxu0 0
  %2253 = vmatpush1.bf16.msra.mxu0 0
  %2254 = vmatprep.subr.bf16.mxu0 0
  %2255 = vmatpush1.bf16.msra.mxu0 0
  %2256 = vmatprep.subr.bf16.mxu0 0
  %2257 = vmatpush1.bf16.msra.mxu0 0
  %2258 = vmatprep.subr.bf16.mxu0 0
  %2259 = vmatpush1.bf16.msra.mxu0 0
  %2260 = vmatprep.subr.bf16.mxu0 0
  %2261 = vmatpush1.bf16.msra.mxu0 0
  %2262 = vmatprep.subr.bf16.mxu0 0
  %2263 = vmatpush1.bf16.msra.mxu0 0
  %2264 = vmatprep.subr.bf16.mxu0 0
  %2265 = vmatpush1.bf16.msra.mxu0 0
  %2266 = vmatprep.mubr.bf16.mxu0 0
  %2267 = vmatmul.mubr.bf16.gmra.mrb[0].mxu0 %v2056
  %v2268 = vpop.f32.mrb[0].mxu0
  %v2269 = vadd.f32 %v2094, %v2268
  %v2270 = vpop.f32.mrb[0].mxu0
  %v2271 = vadd.f32 %v2098, %v2270
  %v2272 = vpop.f32.mrb[0].mxu0
  %v2273 = vpop.f32.mrb[0].mxu0
  %2274 = vdwg.mxu0
  %2275 = vmatprep.subr.bf16.mxu0 0
  %2276 = vmatpush1.bf16.msra.mxu0 %v2188
  %2277 = vmatprep.subr.bf16.mxu0 0
  %2278 = vmatpush1.bf16.msra.mxu0 %v2191
  %2279 = vmatprep.subr.bf16.mxu0 0
  %2280 = vmatpush1.bf16.msra.mxu0 %v2194
  %2281 = vmatprep.subr.bf16.mxu0 0
  %2282 = vmatpush1.bf16.msra.mxu0 %v2197
  %2283 = vmatprep.subr.bf16.mxu0 0
  %2284 = vmatpush1.bf16.msra.mxu0 %v2200
  %2285 = vmatprep.subr.bf16.mxu0 0
  %2286 = vmatpush1.bf16.msra.mxu0 %v2203
  %2287 = vmatprep.subr.bf16.mxu0 0
  %2288 = vmatpush1.bf16.msra.mxu0 %v2206
  %2289 = vmatprep.subr.bf16.mxu0 0
  %2290 = vmatpush1.bf16.msra.mxu0 %v2209
  %2291 = vmatprep.subr.bf16.mxu0 0
  %2292 = vmatpush1.bf16.msra.mxu0 0
  %2293 = vmatprep.subr.bf16.mxu0 0
  %2294 = vmatpush1.bf16.msra.mxu0 0
  %2295 = vmatprep.subr.bf16.mxu0 0
  %2296 = vmatpush1.bf16.msra.mxu0 0
  %2297 = vmatprep.subr.bf16.mxu0 0
  %2298 = vmatpush1.bf16.msra.mxu0 0
  %2299 = vmatprep.subr.bf16.mxu0 0
  %2300 = vmatpush1.bf16.msra.mxu0 0
  %2301 = vmatprep.subr.bf16.mxu0 0
  %2302 = vmatpush1.bf16.msra.mxu0 0
  %2303 = vmatprep.subr.bf16.mxu0 0
  %2304 = vmatpush1.bf16.msra.mxu0 0
  %2305 = vmatprep.subr.bf16.mxu0 0
  %2306 = vmatpush1.bf16.msra.mxu0 0
  %2307 = vmatprep.mubr.bf16.mxu0 0
  %2308 = vmatmul.mubr.bf16.gmra.mrb[0].mxu0 %v2056
  %v2309 = vpop.f32.mrb[0].mxu0
  %v2310 = vadd.f32 %v2102, %v2309
  %v2311 = vpop.f32.mrb[0].mxu0
  %v2312 = vpop.f32.mrb[0].mxu0
  %v2313 = vpop.f32.mrb[0].mxu0
  %2314 = vdwg.mxu0
  %v2315 = vunpack.c.l.bf16 %v2054
  %v2316 = vadd.f32 %v2269, %v2315
  %v2317 = vxor.u32 %v2316, 2147483648
  %v2318 = vmul.f32 %v2317, 1.442695
  %v2319 = vpow.pop %v2318
  %v2320 = vadd.f32 %v2319, 1.0
  %v2321 = vrcp.pop %v2320
  %v2322 = vmul.f32 1.0, %v2321
  %v2324 = vrot.slane %v2054, 4
  %v2326 = vunpack.c.l.bf16 %v2324
  %v2327 = vadd.f32 %v2271, %v2326
  %v2328 = vxor.u32 %v2327, 2147483648
  %v2329 = vmul.f32 %v2328, 1.442695
  %v2330 = vpow.pop %v2329
  %v2331 = vadd.f32 %v2330, 1.0
  %v2332 = vrcp.pop %v2331
  %v2333 = vmul.f32 1.0, %v2332
  %v2334 = vmul.f32 %v2322, %v2310
  %v2335 = vunpack.c.l.bf16 %v2055
  %v2336 = vadd.f32 %v2335, %v2334
  %v2337 = vtanh.pop %v2336
  %v2338 = vsub.f32 %v2050, %v2337
  %v2339 = vmul.f32 %v2333, %v2338
  %v2340 = vadd.f32 %v2337, %v2339
  %s2341 = scalar_lea.vmem %s4, 56
  %2342 = vst [vmem:[%s2341] sm:$0xff] %v2340
  %2343 = vst [vmem:[#allocation2] sm:$0xff] %v2340
  // Predicated region
  $region22: #{_lambda_.4} parent=0 // pred_check
    _
  $region23: #{_lambda_.4} parent=0 // pred_check_branch
    %2345 = sbr.rel (0) target = $region25
  $region24: #{_lambda_.4} parent=0 // pred_region
    _
  $region25: #{_lambda_.4} parent=0 // pred_fallthru
    _
  // Predicated region
  $region26: #{_lambda_.4} parent=0 // pred_check
    _
  $region27: #{_lambda_.4} parent=0 // pred_check_branch
    %2347 = sbr.rel (0) target = $region29
  $region28: #{_lambda_.4} parent=0 // pred_region
    _
  $region29: #{_lambda_.4} parent=0 // pred_fallthru
    _

</llo_original>
